<compile_context>
chip_gen: v7x
topology: tpu7x:2x2x1
jax: 0.10.0
libtpu: 0.0.40
codegen_flags: <defaults>
</compile_context>

<pallas_src>
import functools

import jax
import jax.numpy as jnp
from jax.experimental import pallas as pl
from jax.experimental.pallas import tpu as pltpu

KERNEL_SIZE = 5
CONV_CHANNELS = (16, 32, 64, 128)
FC_OUT = 100
FC_OUT_PAD = 128           # pad the FC output to a full 128-lane store
BN_EPS = 1e-5


def _conv_bn_relu_pool(a_ref, w_ref, s_ref, b_ref, y_ref, dst_ref,
                       *, tb, t_in, cin, cout, dst_halo):
    """One Conv1d(k=5, pad=2) + BN + ReLU + MaxPool(2, 2) stage.

    a_ref  : (tb*(t_in+4), cin) bf16 halo-padded channels-last input; batch b
             occupies rows [b*(t_in+4), (b+1)*(t_in+4)) with 2 zero rows on
             each side of its t_in valid rows.
    y_ref  : (tb*(t_in+4)-4, cout) f32 conv+BN+ReLU output (pre-pool); the
             valid row for (b, t) is b*(t_in+4)+t; rows between batch blocks
             hold junk that the pooling below never reads.
    dst_ref: next stage's halo-padded bf16 input (dst_halo=True) or the
             b-major FC input buffer (dst_halo=False).
    """
    rows = tb * (t_in + 4) - 4
    # Conv as a sum of 5 shifted-window tap matmuls (no im2col materialized).
    acc = None
    for j in range(KERNEL_SIZE):
        tap = a_ref[pl.ds(j, rows), :]                     # (rows, cin) bf16
        w_j = w_ref[j * cin:(j + 1) * cin, :]              # (cin, cout) bf16
        d = jnp.dot(tap, w_j, preferred_element_type=jnp.float32)
        acc = d if acc is None else acc + d
    # Folded eval-mode BatchNorm (+conv bias) and ReLU epilogue, in f32.
    y_ref[...] = jnp.maximum(acc * s_ref[...] + b_ref[...], 0.0)

    # MaxPool1d(kernel=2, stride=2) via even/odd strided row reads per batch;
    # tb <= 8 on the multi-tile path so this static loop stays small.
    t_half = t_in // 2
    blk_out = t_half + 4 if dst_halo else t_half
    off_out = 2 if dst_halo else 0
    for b in range(tb):
        base = b * (t_in + 4)
        even = y_ref[pl.ds(base, t_half, stride=2), :]
        odd = y_ref[pl.ds(base + 1, t_half, stride=2), :]
        pooled = jnp.maximum(even, odd)                    # (t_half, cout)
        dst_ref[pl.ds(b * blk_out + off_out, t_half), :] = pooled.astype(
            dst_ref.dtype)


def _fused_kernel(tb, t0, c0,
                  x_ref,
                  w0_ref, s0_ref, b0_ref,
                  w1_ref, s1_ref, b1_ref,
                  w2_ref, s2_ref, b2_ref,
                  w3_ref, s3_ref, b3_ref,
                  fcw_ref, fcb_ref,
                  o_ref,
                  y0_ref, a1_ref, y1_ref, a2_ref, y2_ref, a3_ref, y3_ref,
                  y4_ref):
    t1, t2, t3, n_t = t0 // 2, t0 // 4, t0 // 8, t0 // 16

    # Zero the halo-padded activation scratches: only the 2+2 halo rows per
    # batch block must stay zero, but these bf16 buffers are small, so one
    # vectorized fill beats many tiny masked row stores (and stays correct for
    # any grid/megacore split).
    a1_ref[...] = jnp.zeros(a1_ref.shape, a1_ref.dtype)
    a2_ref[...] = jnp.zeros(a2_ref.shape, a2_ref.dtype)
    a3_ref[...] = jnp.zeros(a3_ref.shape, a3_ref.dtype)

    _conv_bn_relu_pool(x_ref, w0_ref, s0_ref, b0_ref, y0_ref, a1_ref,
                       tb=tb, t_in=t0, cin=c0, cout=CONV_CHANNELS[0],
                       dst_halo=True)
    _conv_bn_relu_pool(a1_ref, w1_ref, s1_ref, b1_ref, y1_ref, a2_ref,
                       tb=tb, t_in=t1, cin=CONV_CHANNELS[0],
                       cout=CONV_CHANNELS[1], dst_halo=True)
    _conv_bn_relu_pool(a2_ref, w2_ref, s2_ref, b2_ref, y2_ref, a3_ref,
                       tb=tb, t_in=t2, cin=CONV_CHANNELS[1],
                       cout=CONV_CHANNELS[2], dst_halo=True)
    _conv_bn_relu_pool(a3_ref, w3_ref, s3_ref, b3_ref, y3_ref, y4_ref,
                       tb=tb, t_in=t3, cin=CONV_CHANNELS[2],
                       cout=CONV_CHANNELS[3], dst_halo=False)

    # Linear(num_timesteps*8 -> 100, zero-padded to 128 lanes) + ReLU.
    # PyTorch's channel-major x.view(B, -1) flatten of the (B, 128, n_t)
    # tensor is folded into fcw's (n_t, 128, 128) layout by the wrapper; y4
    # rows are b-major so each final timestep is one strided (tb, 128) read.
    acc = jnp.zeros((tb, FC_OUT_PAD), jnp.float32)
    for tt in range(n_t):
        xt = y4_ref[pl.ds(tt, tb, stride=n_t), :].astype(jnp.bfloat16)
        acc = acc + jnp.dot(xt, fcw_ref[tt],
                            preferred_element_type=jnp.float32)
    # TODO(synk): nn.Dropout(p=0.25) is the identity in eval mode; omitted.
    o_ref[...] = jnp.maximum(acc + fcb_ref[...], 0.0)


def fold_bn(conv_bias, gamma, beta, mean, var, eps=BN_EPS):
    # Eval-mode BN:  y = gamma * (conv + b - mean) / sqrt(var + eps) + beta
    scale = gamma / jnp.sqrt(var + eps)
    shift = (conv_bias - mean) * scale + beta
    return scale, shift


def _padded_bytes(shape, dtype):
    """Rough (8, 128)-tile padded VMEM footprint of an array."""
    shape = tuple(int(s) for s in shape)
    lead = 1
    for s in shape[:-2]:
        lead *= s
    rows = shape[-2] if len(shape) >= 2 else 1
    cols = shape[-1]
    rows_p = -(-rows // 8) * 8
    cols_p = -(-cols // 128) * 128
    return lead * rows_p * cols_p * jnp.dtype(dtype).itemsize


def tstr_feature_extractor(x_ncw, params):
    """Fused forward pass.  x_ncw: (B, C, T), same layout PyTorch Conv1d uses."""
    bsz, c0, t0 = x_ncw.shape
    assert t0 % 16 == 0, "time dim must be divisible by 16 (4x MaxPool(2,2))"
    t1, t2, t3, n_t = t0 // 2, t0 // 4, t0 // 8, t0 // 16

    # Batch tile: bounds per-step scratch, lets the input DMA pipeline behind
    # compute, and (with "parallel" semantics) lets v7x split tiles over 2 TCs.
    tb = 8 if (bsz > 8 and bsz % 8 == 0) else bsz
    n_tiles = bsz // tb

    # Channels-last input with a 2-row zero halo per batch on the time axis.
    x = jnp.transpose(x_ncw, (0, 2, 1))                      # (B, T, C)
    xp = jnp.pad(x, ((0, 0), (2, 2), (0, 0)))                # (B, T+4, C)
    xp = xp.reshape(bsz * (t0 + 4), c0).astype(jnp.bfloat16)

    args = [xp]
    in_specs = [pl.BlockSpec((tb * (t0 + 4), c0), lambda i: (i, 0))]
    chans = (c0,) + CONV_CHANNELS
    for i in range(4):
        cin, cout = chans[i], chans[i + 1]
        w = params[f"w{i}"].reshape(KERNEL_SIZE * cin, cout).astype(jnp.bfloat16)
        scale, shift = fold_bn(params[f"b{i}"], params[f"gamma{i}"],
                               params[f"beta{i}"], params[f"mean{i}"],
                               params[f"var{i}"])
        args += [w, scale.reshape(1, cout).astype(jnp.float32),
                 shift.reshape(1, cout).astype(jnp.float32)]
        in_specs += [pl.BlockSpec((KERNEL_SIZE * cin, cout), lambda i: (0, 0)),
                     pl.BlockSpec((1, cout), lambda i: (0, 0)),
                     pl.BlockSpec((1, cout), lambda i: (0, 0))]

    # fc_w rows follow PyTorch's channel-major flatten (row index = c*n_t + t)
    # of the (B, 128, n_t) tensor; regroup time-major so the kernel does one
    # (tb,128)@(128,128) matmul per final timestep.
    fcw = jnp.transpose(params["fc_w"].reshape(CONV_CHANNELS[-1], n_t, FC_OUT),
                        (1, 0, 2))
    fcw = jnp.pad(fcw, ((0, 0), (0, 0), (0, FC_OUT_PAD - FC_OUT)))
    fcw = fcw.astype(jnp.bfloat16)                           # (n_t, 128, 128)
    fcb = jnp.pad(params["fc_b"], (0, FC_OUT_PAD - FC_OUT))
    fcb = fcb.reshape(1, FC_OUT_PAD).astype(jnp.float32)
    args += [fcw, fcb]
    in_specs += [pl.BlockSpec((n_t, CONV_CHANNELS[-1], FC_OUT_PAD),
                              lambda i: (0, 0, 0)),
                 pl.BlockSpec((1, FC_OUT_PAD), lambda i: (0, 0))]

    scratch_defs = [
        ((tb * (t0 + 4) - 4, 16), jnp.float32),    # y0 pre-pool
        ((tb * (t1 + 4), 16), jnp.bfloat16),       # a1 halo-padded conv input
        ((tb * (t1 + 4) - 4, 32), jnp.float32),    # y1
        ((tb * (t2 + 4), 32), jnp.bfloat16),       # a2
        ((tb * (t2 + 4) - 4, 64), jnp.float32),    # y2
        ((tb * (t3 + 4), 64), jnp.bfloat16),       # a3
        ((tb * (t3 + 4) - 4, 128), jnp.float32),   # y3
        ((tb * n_t, 128), jnp.float32),            # y4 (b-major FC input)
    ]
    scratch_shapes = [pltpu.VMEM(s, d) for s, d in scratch_defs]

    # Explicit VMEM budget (v5e default scoped limit is 16 MiB; v7x has only
    # 64 MiB physical), sized from the actual per-tile footprint + headroom.
    est = sum(_padded_bytes(s, d) for s, d in scratch_defs)
    est += 2 * _padded_bytes((tb * (t0 + 4), c0), jnp.bfloat16)   # input block
    est += 2 * _padded_bytes((tb, FC_OUT_PAD), jnp.float32)       # output blk
    est += sum(2 * _padded_bytes(a.shape, a.dtype) for a in args[1:])
    vmem_limit = int(min(max(4 * est, 32 * 2**20), 100 * 2**20))

    kernel = functools.partial(_fused_kernel, tb, t0, c0)
    out = pl.pallas_call(
        kernel,
        grid=(n_tiles,),
        in_specs=in_specs,
        out_specs=pl.BlockSpec((tb, FC_OUT_PAD), lambda i: (i, 0)),
        out_shape=jax.ShapeDtypeStruct((bsz, FC_OUT_PAD), jnp.float32),
        scratch_shapes=scratch_shapes,
        compiler_params=pltpu.CompilerParams(
            dimension_semantics=("parallel",),
            vmem_limit_bytes=vmem_limit),
    )(*args)
    return out[:, :FC_OUT]


def reference_forward(x_ncw, params):
    """Pure-JAX f32 reference mirroring the PyTorch module (eval mode)."""
    x = x_ncw
    for i in range(4):
        w = params[f"w{i}"]                                  # (5, cin, cout)
        xt = jnp.transpose(x, (0, 2, 1))                     # (B, T, cin)
        xp = jnp.pad(xt, ((0, 0), (2, 2), (0, 0)))
        t = xt.shape[1]
        out = sum(jnp.einsum("btc,co->bto", xp[:, k:k + t, :], w[k])
                  for k in range(KERNEL_SIZE))
        out = out + params[f"b{i}"]
        scale = params[f"gamma{i}"] / jnp.sqrt(params[f"var{i}"] + BN_EPS)
        out = (out - params[f"mean{i}"]) * scale + params[f"beta{i}"]
        out = jnp.maximum(out, 0.0)
        out = jnp.maximum(out[:, 0::2, :], out[:, 1::2, :])  # MaxPool(2, 2)
        x = jnp.transpose(out, (0, 2, 1))                    # (B, cout, T/2)
    flat = x.reshape(x.shape[0], -1)                         # channel-major
    return jnp.maximum(flat @ params["fc_w"] + params["fc_b"], 0.0)


def init_params(key, num_channels, num_timesteps):
    channels = [num_channels] + list(CONV_CHANNELS)
    params = {}
    keys = jax.random.split(key, 32)
    ki = 0
    for i in range(4):
        cin, cout = channels[i], channels[i + 1]
        params[f"w{i}"] = 0.1 * jax.random.normal(
            keys[ki], (KERNEL_SIZE, cin, cout), jnp.float32); ki += 1
        params[f"b{i}"] = 0.1 * jax.random.normal(
            keys[ki], (cout,), jnp.float32); ki += 1
        params[f"gamma{i}"] = 1.0 + 0.1 * jax.random.normal(
            keys[ki], (cout,), jnp.float32); ki += 1
        params[f"beta{i}"] = 0.1 * jax.random.normal(
            keys[ki], (cout,), jnp.float32); ki += 1
        params[f"mean{i}"] = 0.1 * jax.random.normal(
            keys[ki], (cout,), jnp.float32); ki += 1
        params[f"var{i}"] = jax.random.uniform(
            keys[ki], (cout,), jnp.float32, 0.5, 1.5); ki += 1
    fc_in = num_timesteps * 8          # 128 channels * (T / 16) timesteps
    params["fc_w"] = 0.05 * jax.random.normal(
        keys[ki], (fc_in, FC_OUT), jnp.float32); ki += 1
    params["fc_b"] = 0.1 * jax.random.normal(keys[ki], (FC_OUT,), jnp.float32)
    return params


if __name__ == "__main__":
    B, C, T = 2, 3, 64                 # small shapes; T divisible by 16
    key = jax.random.PRNGKey(0)
    k_x, k_p = jax.random.split(key)
    x = jax.random.normal(k_x, (B, C, T), jnp.float32)
    params = init_params(k_p, C, T)

    out = tstr_feature_extractor(x, params)
    out = jax.block_until_ready(out)
    assert out.shape == (B, FC_OUT), out.shape
    assert bool(jnp.all(jnp.isfinite(out)))

    ref = reference_forward(x, params)
    err = float(jnp.max(jnp.abs(out - ref))) / (float(jnp.max(jnp.abs(ref))) + 1e-6)
    assert err < 0.1, f"kernel/reference mismatch: rel_max_err={err}"
    print("KERNEL_OK")
</pallas_src>

<mosaic_0001>
module attributes {stable_mosaic.version = 11 : i64} {
  func.func @_fused_kernel(%arg0: i32, %arg1: memref<136x3xbf16, #tpu.memory_space<vmem>>, %arg2: memref<15x16xbf16, #tpu.memory_space<vmem>>, %arg3: memref<1x16xf32, #tpu.memory_space<vmem>>, %arg4: memref<1x16xf32, #tpu.memory_space<vmem>>, %arg5: memref<80x32xbf16, #tpu.memory_space<vmem>>, %arg6: memref<1x32xf32, #tpu.memory_space<vmem>>, %arg7: memref<1x32xf32, #tpu.memory_space<vmem>>, %arg8: memref<160x64xbf16, #tpu.memory_space<vmem>>, %arg9: memref<1x64xf32, #tpu.memory_space<vmem>>, %arg10: memref<1x64xf32, #tpu.memory_space<vmem>>, %arg11: memref<320x128xbf16, #tpu.memory_space<vmem>>, %arg12: memref<1x128xf32, #tpu.memory_space<vmem>>, %arg13: memref<1x128xf32, #tpu.memory_space<vmem>>, %arg14: memref<4x128x128xbf16, #tpu.memory_space<vmem>>, %arg15: memref<1x128xf32, #tpu.memory_space<vmem>>, %arg16: memref<2x128xf32, #tpu.memory_space<vmem>>, %arg17: memref<132x16xf32, #tpu.memory_space<vmem>>, %arg18: memref<72x16xbf16, #tpu.memory_space<vmem>>, %arg19: memref<68x32xf32, #tpu.memory_space<vmem>>, %arg20: memref<40x32xbf16, #tpu.memory_space<vmem>>, %arg21: memref<36x64xf32, #tpu.memory_space<vmem>>, %arg22: memref<24x64xbf16, #tpu.memory_space<vmem>>, %arg23: memref<20x128xf32, #tpu.memory_space<vmem>>, %arg24: memref<8x128xf32, #tpu.memory_space<vmem>>) attributes {dimension_semantics = [#tpu.dimension_semantics<parallel>], iteration_bounds = array<i64: 1>, scalar_prefetch = 0 : i64, scratch_operands = 8 : i64, tpu.core_type = #tpu.core_type<tc>, window_params = [{transform_indices = @transform_0, window_bounds = array<i64: 136, 3>}, {pipeline_mode = #tpu.pipeline_mode<synchronous>, transform_indices = @transform_1, window_bounds = array<i64: 15, 16>}, {pipeline_mode = #tpu.pipeline_mode<synchronous>, transform_indices = @transform_2, window_bounds = array<i64: 1, 16>}, {pipeline_mode = #tpu.pipeline_mode<synchronous>, transform_indices = @transform_3, window_bounds = array<i64: 1, 16>}, {pipeline_mode = #tpu.pipeline_mode<synchronous>, transform_indices = @transform_4, window_bounds = array<i64: 80, 32>}, {pipeline_mode = #tpu.pipeline_mode<synchronous>, transform_indices = @transform_5, window_bounds = array<i64: 1, 32>}, {pipeline_mode = #tpu.pipeline_mode<synchronous>, transform_indices = @transform_6, window_bounds = array<i64: 1, 32>}, {pipeline_mode = #tpu.pipeline_mode<synchronous>, transform_indices = @transform_7, window_bounds = array<i64: 160, 64>}, {pipeline_mode = #tpu.pipeline_mode<synchronous>, transform_indices = @transform_8, window_bounds = array<i64: 1, 64>}, {pipeline_mode = #tpu.pipeline_mode<synchronous>, transform_indices = @transform_9, window_bounds = array<i64: 1, 64>}, {pipeline_mode = #tpu.pipeline_mode<synchronous>, transform_indices = @transform_10, window_bounds = array<i64: 320, 128>}, {pipeline_mode = #tpu.pipeline_mode<synchronous>, transform_indices = @transform_11, window_bounds = array<i64: 1, 128>}, {pipeline_mode = #tpu.pipeline_mode<synchronous>, transform_indices = @transform_12, window_bounds = array<i64: 1, 128>}, {pipeline_mode = #tpu.pipeline_mode<synchronous>, transform_indices = @transform_13, window_bounds = array<i64: 4, 128, 128>}, {pipeline_mode = #tpu.pipeline_mode<synchronous>, transform_indices = @transform_14, window_bounds = array<i64: 1, 128>}, {transform_indices = @transform_15, window_bounds = array<i64: 2, 128>}]} {
    %cst = arith.constant 0.000000e+00 : bf16
    %0 = vector.broadcast %cst : bf16 to vector<72x16xbf16>
    %c0 = arith.constant 0 : index
    %c0_0 = arith.constant 0 : index
    %1 = vector.load %arg18[%c0, %c0_0] : memref<72x16xbf16, #tpu.memory_space<vmem>>, vector<72x16xbf16>
    tpu.vector_store %arg18[%c0, %c0_0], %0 {strides = array<i32>} : memref<72x16xbf16, #tpu.memory_space<vmem>>, vector<72x16xbf16>,
    %cst_1 = arith.constant 0.000000e+00 : bf16
    %2 = vector.broadcast %cst_1 : bf16 to vector<40x32xbf16>
    %c0_2 = arith.constant 0 : index
    %c0_3 = arith.constant 0 : index
    %3 = vector.load %arg20[%c0_2, %c0_3] : memref<40x32xbf16, #tpu.memory_space<vmem>>, vector<40x32xbf16>
    tpu.vector_store %arg20[%c0_2, %c0_3], %2 {strides = array<i32>} : memref<40x32xbf16, #tpu.memory_space<vmem>>, vector<40x32xbf16>,
    %cst_4 = arith.constant 0.000000e+00 : bf16
    %4 = vector.broadcast %cst_4 : bf16 to vector<24x64xbf16>
    %c0_5 = arith.constant 0 : index
    %c0_6 = arith.constant 0 : index
    %5 = vector.load %arg22[%c0_5, %c0_6] : memref<24x64xbf16, #tpu.memory_space<vmem>>, vector<24x64xbf16>
    tpu.vector_store %arg22[%c0_5, %c0_6], %4 {strides = array<i32>} : memref<24x64xbf16, #tpu.memory_space<vmem>>, vector<24x64xbf16>,
    %c0_7 = arith.constant 0 : index
    %c0_8 = arith.constant 0 : index
    %6 = vector.load %arg1[%c0_7, %c0_8] : memref<136x3xbf16, #tpu.memory_space<vmem>>, vector<132x3xbf16>
    %c0_9 = arith.constant 0 : index
    %c0_10 = arith.constant 0 : index
    %7 = vector.load %arg2[%c0_9, %c0_10] : memref<15x16xbf16, #tpu.memory_space<vmem>>, vector<3x16xbf16>
    %cst_11 = arith.constant dense<0.000000e+00> : vector<132x16xf32>
    %8 = tpu.matmul %6, %7, %cst_11 {dimension_numbers = #tpu.dot_dimension_numbers<[1], [0], [0], [1], [0, 0, 1, 1], [], []>} : vector<132x3xbf16>, vector<3x16xbf16>, vector<132x16xf32> -> vector<132x16xf32>
    %c1 = arith.constant 1 : index
    %c0_12 = arith.constant 0 : index
    %9 = vector.load %arg1[%c1, %c0_12] : memref<136x3xbf16, #tpu.memory_space<vmem>>, vector<132x3xbf16>
    %c3 = arith.constant 3 : index
    %c0_13 = arith.constant 0 : index
    %10 = vector.load %arg2[%c3, %c0_13] : memref<15x16xbf16, #tpu.memory_space<vmem>>, vector<3x16xbf16>
    %cst_14 = arith.constant dense<0.000000e+00> : vector<132x16xf32>
    %11 = tpu.matmul %9, %10, %cst_14 {dimension_numbers = #tpu.dot_dimension_numbers<[1], [0], [0], [1], [0, 0, 1, 1], [], []>} : vector<132x3xbf16>, vector<3x16xbf16>, vector<132x16xf32> -> vector<132x16xf32>
    %12 = arith.addf %8, %11 : vector<132x16xf32>
    %c2 = arith.constant 2 : index
    %c0_15 = arith.constant 0 : index
    %13 = vector.load %arg1[%c2, %c0_15] : memref<136x3xbf16, #tpu.memory_space<vmem>>, vector<132x3xbf16>
    %c6 = arith.constant 6 : index
    %c0_16 = arith.constant 0 : index
    %14 = vector.load %arg2[%c6, %c0_16] : memref<15x16xbf16, #tpu.memory_space<vmem>>, vector<3x16xbf16>
    %cst_17 = arith.constant dense<0.000000e+00> : vector<132x16xf32>
    %15 = tpu.matmul %13, %14, %cst_17 {dimension_numbers = #tpu.dot_dimension_numbers<[1], [0], [0], [1], [0, 0, 1, 1], [], []>} : vector<132x3xbf16>, vector<3x16xbf16>, vector<132x16xf32> -> vector<132x16xf32>
    %16 = arith.addf %12, %15 : vector<132x16xf32>
    %c3_18 = arith.constant 3 : index
    %c0_19 = arith.constant 0 : index
    %17 = vector.load %arg1[%c3_18, %c0_19] : memref<136x3xbf16, #tpu.memory_space<vmem>>, vector<132x3xbf16>
    %c9 = arith.constant 9 : index
    %c0_20 = arith.constant 0 : index
    %18 = vector.load %arg2[%c9, %c0_20] : memref<15x16xbf16, #tpu.memory_space<vmem>>, vector<3x16xbf16>
    %cst_21 = arith.constant dense<0.000000e+00> : vector<132x16xf32>
    %19 = tpu.matmul %17, %18, %cst_21 {dimension_numbers = #tpu.dot_dimension_numbers<[1], [0], [0], [1], [0, 0, 1, 1], [], []>} : vector<132x3xbf16>, vector<3x16xbf16>, vector<132x16xf32> -> vector<132x16xf32>
    %20 = arith.addf %16, %19 : vector<132x16xf32>
    %c4 = arith.constant 4 : index
    %c0_22 = arith.constant 0 : index
    %21 = vector.load %arg1[%c4, %c0_22] : memref<136x3xbf16, #tpu.memory_space<vmem>>, vector<132x3xbf16>
    %c12 = arith.constant 12 : index
    %c0_23 = arith.constant 0 : index
    %22 = vector.load %arg2[%c12, %c0_23] : memref<15x16xbf16, #tpu.memory_space<vmem>>, vector<3x16xbf16>
    %cst_24 = arith.constant dense<0.000000e+00> : vector<132x16xf32>
    %23 = tpu.matmul %21, %22, %cst_24 {dimension_numbers = #tpu.dot_dimension_numbers<[1], [0], [0], [1], [0, 0, 1, 1], [], []>} : vector<132x3xbf16>, vector<3x16xbf16>, vector<132x16xf32> -> vector<132x16xf32>
    %24 = arith.addf %20, %23 : vector<132x16xf32>
    %c0_25 = arith.constant 0 : index
    %c0_26 = arith.constant 0 : index
    %25 = vector.load %arg3[%c0_25, %c0_26] : memref<1x16xf32, #tpu.memory_space<vmem>>, vector<1x16xf32>
    %26 = vector.broadcast %25 : vector<1x16xf32> to vector<132x16xf32>
    %27 = arith.mulf %24, %26 : vector<132x16xf32>
    %c0_27 = arith.constant 0 : index
    %c0_28 = arith.constant 0 : index
    %28 = vector.load %arg4[%c0_27, %c0_28] : memref<1x16xf32, #tpu.memory_space<vmem>>, vector<1x16xf32>
    %29 = vector.broadcast %28 : vector<1x16xf32> to vector<132x16xf32>
    %30 = arith.addf %27, %29 : vector<132x16xf32>
    %cst_29 = arith.constant 0.000000e+00 : f32
    %31 = vector.broadcast %cst_29 : f32 to vector<132x16xf32>
    %32 = arith.maximumf %30, %31 : vector<132x16xf32>
    %c0_30 = arith.constant 0 : index
    %c0_31 = arith.constant 0 : index
    %33 = vector.load %arg17[%c0_30, %c0_31] : memref<132x16xf32, #tpu.memory_space<vmem>>, vector<132x16xf32>
    tpu.vector_store %arg17[%c0_30, %c0_31], %32 {strides = array<i32>} : memref<132x16xf32, #tpu.memory_space<vmem>>, vector<132x16xf32>,
    %c0_32 = arith.constant 0 : index
    %c0_33 = arith.constant 0 : index
    %34 = tpu.strided_load %arg17[%c0_32, %c0_33] {strides = array<i32: 2, 1>} : memref<132x16xf32, #tpu.memory_space<vmem>>, vector<32x16xf32>
    %c1_34 = arith.constant 1 : index
    %c0_35 = arith.constant 0 : index
    %35 = tpu.strided_load %arg17[%c1_34, %c0_35] {strides = array<i32: 2, 1>} : memref<132x16xf32, #tpu.memory_space<vmem>>, vector<32x16xf32>
    %36 = arith.maximumf %34, %35 : vector<32x16xf32>
    %37 = arith.truncf %36 : vector<32x16xf32> to vector<32x16xbf16>
    %c2_36 = arith.constant 2 : index
    %c0_37 = arith.constant 0 : index
    %38 = vector.load %arg18[%c2_36, %c0_37] : memref<72x16xbf16, #tpu.memory_space<vmem>>, vector<32x16xbf16>
    tpu.vector_store %arg18[%c2_36, %c0_37], %37 {strides = array<i32>} : memref<72x16xbf16, #tpu.memory_space<vmem>>, vector<32x16xbf16>,
    %c68 = arith.constant 68 : index
    %c0_38 = arith.constant 0 : index
    %39 = tpu.strided_load %arg17[%c68, %c0_38] {strides = array<i32: 2, 1>} : memref<132x16xf32, #tpu.memory_space<vmem>>, vector<32x16xf32>
    %c69 = arith.constant 69 : index
    %c0_39 = arith.constant 0 : index
    %40 = tpu.strided_load %arg17[%c69, %c0_39] {strides = array<i32: 2, 1>} : memref<132x16xf32, #tpu.memory_space<vmem>>, vector<32x16xf32>
    %41 = arith.maximumf %39, %40 : vector<32x16xf32>
    %42 = arith.truncf %41 : vector<32x16xf32> to vector<32x16xbf16>
    %c38 = arith.constant 38 : index
    %c0_40 = arith.constant 0 : index
    %43 = vector.load %arg18[%c38, %c0_40] : memref<72x16xbf16, #tpu.memory_space<vmem>>, vector<32x16xbf16>
    tpu.vector_store %arg18[%c38, %c0_40], %42 {strides = array<i32>} : memref<72x16xbf16, #tpu.memory_space<vmem>>, vector<32x16xbf16>,
    %c0_41 = arith.constant 0 : index
    %c0_42 = arith.constant 0 : index
    %44 = vector.load %arg18[%c0_41, %c0_42] : memref<72x16xbf16, #tpu.memory_space<vmem>>, vector<68x16xbf16>
    %c0_43 = arith.constant 0 : index
    %c0_44 = arith.constant 0 : index
    %45 = vector.load %arg5[%c0_43, %c0_44] : memref<80x32xbf16, #tpu.memory_space<vmem>>, vector<16x32xbf16>
    %cst_45 = arith.constant dense<0.000000e+00> : vector<68x32xf32>
    %46 = tpu.matmul %44, %45, %cst_45 {dimension_numbers = #tpu.dot_dimension_numbers<[1], [0], [0], [1], [0, 0, 1, 1], [], []>} : vector<68x16xbf16>, vector<16x32xbf16>, vector<68x32xf32> -> vector<68x32xf32>
    %c1_46 = arith.constant 1 : index
    %c0_47 = arith.constant 0 : index
    %47 = vector.load %arg18[%c1_46, %c0_47] : memref<72x16xbf16, #tpu.memory_space<vmem>>, vector<68x16xbf16>
    %c16 = arith.constant 16 : index
    %c0_48 = arith.constant 0 : index
    %48 = vector.load %arg5[%c16, %c0_48] : memref<80x32xbf16, #tpu.memory_space<vmem>>, vector<16x32xbf16>
    %cst_49 = arith.constant dense<0.000000e+00> : vector<68x32xf32>
    %49 = tpu.matmul %47, %48, %cst_49 {dimension_numbers = #tpu.dot_dimension_numbers<[1], [0], [0], [1], [0, 0, 1, 1], [], []>} : vector<68x16xbf16>, vector<16x32xbf16>, vector<68x32xf32> -> vector<68x32xf32>
    %50 = arith.addf %46, %49 : vector<68x32xf32>
    %c2_50 = arith.constant 2 : index
    %c0_51 = arith.constant 0 : index
    %51 = vector.load %arg18[%c2_50, %c0_51] : memref<72x16xbf16, #tpu.memory_space<vmem>>, vector<68x16xbf16>
    %c32 = arith.constant 32 : index
    %c0_52 = arith.constant 0 : index
    %52 = vector.load %arg5[%c32, %c0_52] : memref<80x32xbf16, #tpu.memory_space<vmem>>, vector<16x32xbf16>
    %cst_53 = arith.constant dense<0.000000e+00> : vector<68x32xf32>
    %53 = tpu.matmul %51, %52, %cst_53 {dimension_numbers = #tpu.dot_dimension_numbers<[1], [0], [0], [1], [0, 0, 1, 1], [], []>} : vector<68x16xbf16>, vector<16x32xbf16>, vector<68x32xf32> -> vector<68x32xf32>
    %54 = arith.addf %50, %53 : vector<68x32xf32>
    %c3_54 = arith.constant 3 : index
    %c0_55 = arith.constant 0 : index
    %55 = vector.load %arg18[%c3_54, %c0_55] : memref<72x16xbf16, #tpu.memory_space<vmem>>, vector<68x16xbf16>
    %c48 = arith.constant 48 : index
    %c0_56 = arith.constant 0 : index
    %56 = vector.load %arg5[%c48, %c0_56] : memref<80x32xbf16, #tpu.memory_space<vmem>>, vector<16x32xbf16>
    %cst_57 = arith.constant dense<0.000000e+00> : vector<68x32xf32>
    %57 = tpu.matmul %55, %56, %cst_57 {dimension_numbers = #tpu.dot_dimension_numbers<[1], [0], [0], [1], [0, 0, 1, 1], [], []>} : vector<68x16xbf16>, vector<16x32xbf16>, vector<68x32xf32> -> vector<68x32xf32>
    %58 = arith.addf %54, %57 : vector<68x32xf32>
    %c4_58 = arith.constant 4 : index
    %c0_59 = arith.constant 0 : index
    %59 = vector.load %arg18[%c4_58, %c0_59] : memref<72x16xbf16, #tpu.memory_space<vmem>>, vector<68x16xbf16>
    %c64 = arith.constant 64 : index
    %c0_60 = arith.constant 0 : index
    %60 = vector.load %arg5[%c64, %c0_60] : memref<80x32xbf16, #tpu.memory_space<vmem>>, vector<16x32xbf16>
    %cst_61 = arith.constant dense<0.000000e+00> : vector<68x32xf32>
    %61 = tpu.matmul %59, %60, %cst_61 {dimension_numbers = #tpu.dot_dimension_numbers<[1], [0], [0], [1], [0, 0, 1, 1], [], []>} : vector<68x16xbf16>, vector<16x32xbf16>, vector<68x32xf32> -> vector<68x32xf32>
    %62 = arith.addf %58, %61 : vector<68x32xf32>
    %c0_62 = arith.constant 0 : index
    %c0_63 = arith.constant 0 : index
    %63 = vector.load %arg6[%c0_62, %c0_63] : memref<1x32xf32, #tpu.memory_space<vmem>>, vector<1x32xf32>
    %64 = vector.broadcast %63 : vector<1x32xf32> to vector<68x32xf32>
    %65 = arith.mulf %62, %64 : vector<68x32xf32>
    %c0_64 = arith.constant 0 : index
    %c0_65 = arith.constant 0 : index
    %66 = vector.load %arg7[%c0_64, %c0_65] : memref<1x32xf32, #tpu.memory_space<vmem>>, vector<1x32xf32>
    %67 = vector.broadcast %66 : vector<1x32xf32> to vector<68x32xf32>
    %68 = arith.addf %65, %67 : vector<68x32xf32>
    %cst_66 = arith.constant 0.000000e+00 : f32
    %69 = vector.broadcast %cst_66 : f32 to vector<68x32xf32>
    %70 = arith.maximumf %68, %69 : vector<68x32xf32>
    %c0_67 = arith.constant 0 : index
    %c0_68 = arith.constant 0 : index
    %71 = vector.load %arg19[%c0_67, %c0_68] : memref<68x32xf32, #tpu.memory_space<vmem>>, vector<68x32xf32>
    tpu.vector_store %arg19[%c0_67, %c0_68], %70 {strides = array<i32>} : memref<68x32xf32, #tpu.memory_space<vmem>>, vector<68x32xf32>,
    %c0_69 = arith.constant 0 : index
    %c0_70 = arith.constant 0 : index
    %72 = tpu.strided_load %arg19[%c0_69, %c0_70] {strides = array<i32: 2, 1>} : memref<68x32xf32, #tpu.memory_space<vmem>>, vector<16x32xf32>
    %c1_71 = arith.constant 1 : index
    %c0_72 = arith.constant 0 : index
    %73 = tpu.strided_load %arg19[%c1_71, %c0_72] {strides = array<i32: 2, 1>} : memref<68x32xf32, #tpu.memory_space<vmem>>, vector<16x32xf32>
    %74 = arith.maximumf %72, %73 : vector<16x32xf32>
    %75 = arith.truncf %74 : vector<16x32xf32> to vector<16x32xbf16>
    %c2_73 = arith.constant 2 : index
    %c0_74 = arith.constant 0 : index
    %76 = vector.load %arg20[%c2_73, %c0_74] : memref<40x32xbf16, #tpu.memory_space<vmem>>, vector<16x32xbf16>
    tpu.vector_store %arg20[%c2_73, %c0_74], %75 {strides = array<i32>} : memref<40x32xbf16, #tpu.memory_space<vmem>>, vector<16x32xbf16>,
    %c36 = arith.constant 36 : index
    %c0_75 = arith.constant 0 : index
    %77 = tpu.strided_load %arg19[%c36, %c0_75] {strides = array<i32: 2, 1>} : memref<68x32xf32, #tpu.memory_space<vmem>>, vector<16x32xf32>
    %c37 = arith.constant 37 : index
    %c0_76 = arith.constant 0 : index
    %78 = tpu.strided_load %arg19[%c37, %c0_76] {strides = array<i32: 2, 1>} : memref<68x32xf32, #tpu.memory_space<vmem>>, vector<16x32xf32>
    %79 = arith.maximumf %77, %78 : vector<16x32xf32>
    %80 = arith.truncf %79 : vector<16x32xf32> to vector<16x32xbf16>
    %c22 = arith.constant 22 : index
    %c0_77 = arith.constant 0 : index
    %81 = vector.load %arg20[%c22, %c0_77] : memref<40x32xbf16, #tpu.memory_space<vmem>>, vector<16x32xbf16>
    tpu.vector_store %arg20[%c22, %c0_77], %80 {strides = array<i32>} : memref<40x32xbf16, #tpu.memory_space<vmem>>, vector<16x32xbf16>,
    %c0_78 = arith.constant 0 : index
    %c0_79 = arith.constant 0 : index
    %82 = vector.load %arg20[%c0_78, %c0_79] : memref<40x32xbf16, #tpu.memory_space<vmem>>, vector<36x32xbf16>
    %c0_80 = arith.constant 0 : index
    %c0_81 = arith.constant 0 : index
    %83 = vector.load %arg8[%c0_80, %c0_81] : memref<160x64xbf16, #tpu.memory_space<vmem>>, vector<32x64xbf16>
    %cst_82 = arith.constant dense<0.000000e+00> : vector<36x64xf32>
    %84 = tpu.matmul %82, %83, %cst_82 {dimension_numbers = #tpu.dot_dimension_numbers<[1], [0], [0], [1], [0, 0, 1, 1], [], []>} : vector<36x32xbf16>, vector<32x64xbf16>, vector<36x64xf32> -> vector<36x64xf32>
    %c1_83 = arith.constant 1 : index
    %c0_84 = arith.constant 0 : index
    %85 = vector.load %arg20[%c1_83, %c0_84] : memref<40x32xbf16, #tpu.memory_space<vmem>>, vector<36x32xbf16>
    %c32_85 = arith.constant 32 : index
    %c0_86 = arith.constant 0 : index
    %86 = vector.load %arg8[%c32_85, %c0_86] : memref<160x64xbf16, #tpu.memory_space<vmem>>, vector<32x64xbf16>
    %cst_87 = arith.constant dense<0.000000e+00> : vector<36x64xf32>
    %87 = tpu.matmul %85, %86, %cst_87 {dimension_numbers = #tpu.dot_dimension_numbers<[1], [0], [0], [1], [0, 0, 1, 1], [], []>} : vector<36x32xbf16>, vector<32x64xbf16>, vector<36x64xf32> -> vector<36x64xf32>
    %88 = arith.addf %84, %87 : vector<36x64xf32>
    %c2_88 = arith.constant 2 : index
    %c0_89 = arith.constant 0 : index
    %89 = vector.load %arg20[%c2_88, %c0_89] : memref<40x32xbf16, #tpu.memory_space<vmem>>, vector<36x32xbf16>
    %c64_90 = arith.constant 64 : index
    %c0_91 = arith.constant 0 : index
    %90 = vector.load %arg8[%c64_90, %c0_91] : memref<160x64xbf16, #tpu.memory_space<vmem>>, vector<32x64xbf16>
    %cst_92 = arith.constant dense<0.000000e+00> : vector<36x64xf32>
    %91 = tpu.matmul %89, %90, %cst_92 {dimension_numbers = #tpu.dot_dimension_numbers<[1], [0], [0], [1], [0, 0, 1, 1], [], []>} : vector<36x32xbf16>, vector<32x64xbf16>, vector<36x64xf32> -> vector<36x64xf32>
    %92 = arith.addf %88, %91 : vector<36x64xf32>
    %c3_93 = arith.constant 3 : index
    %c0_94 = arith.constant 0 : index
    %93 = vector.load %arg20[%c3_93, %c0_94] : memref<40x32xbf16, #tpu.memory_space<vmem>>, vector<36x32xbf16>
    %c96 = arith.constant 96 : index
    %c0_95 = arith.constant 0 : index
    %94 = vector.load %arg8[%c96, %c0_95] : memref<160x64xbf16, #tpu.memory_space<vmem>>, vector<32x64xbf16>
    %cst_96 = arith.constant dense<0.000000e+00> : vector<36x64xf32>
    %95 = tpu.matmul %93, %94, %cst_96 {dimension_numbers = #tpu.dot_dimension_numbers<[1], [0], [0], [1], [0, 0, 1, 1], [], []>} : vector<36x32xbf16>, vector<32x64xbf16>, vector<36x64xf32> -> vector<36x64xf32>
    %96 = arith.addf %92, %95 : vector<36x64xf32>
    %c4_97 = arith.constant 4 : index
    %c0_98 = arith.constant 0 : index
    %97 = vector.load %arg20[%c4_97, %c0_98] : memref<40x32xbf16, #tpu.memory_space<vmem>>, vector<36x32xbf16>
    %c128 = arith.constant 128 : index
    %c0_99 = arith.constant 0 : index
    %98 = vector.load %arg8[%c128, %c0_99] : memref<160x64xbf16, #tpu.memory_space<vmem>>, vector<32x64xbf16>
    %cst_100 = arith.constant dense<0.000000e+00> : vector<36x64xf32>
    %99 = tpu.matmul %97, %98, %cst_100 {dimension_numbers = #tpu.dot_dimension_numbers<[1], [0], [0], [1], [0, 0, 1, 1], [], []>} : vector<36x32xbf16>, vector<32x64xbf16>, vector<36x64xf32> -> vector<36x64xf32>
    %100 = arith.addf %96, %99 : vector<36x64xf32>
    %c0_101 = arith.constant 0 : index
    %c0_102 = arith.constant 0 : index
    %101 = vector.load %arg9[%c0_101, %c0_102] : memref<1x64xf32, #tpu.memory_space<vmem>>, vector<1x64xf32>
    %102 = vector.broadcast %101 : vector<1x64xf32> to vector<36x64xf32>
    %103 = arith.mulf %100, %102 : vector<36x64xf32>
    %c0_103 = arith.constant 0 : index
    %c0_104 = arith.constant 0 : index
    %104 = vector.load %arg10[%c0_103, %c0_104] : memref<1x64xf32, #tpu.memory_space<vmem>>, vector<1x64xf32>
    %105 = vector.broadcast %104 : vector<1x64xf32> to vector<36x64xf32>
    %106 = arith.addf %103, %105 : vector<36x64xf32>
    %cst_105 = arith.constant 0.000000e+00 : f32
    %107 = vector.broadcast %cst_105 : f32 to vector<36x64xf32>
    %108 = arith.maximumf %106, %107 : vector<36x64xf32>
    %c0_106 = arith.constant 0 : index
    %c0_107 = arith.constant 0 : index
    %109 = vector.load %arg21[%c0_106, %c0_107] : memref<36x64xf32, #tpu.memory_space<vmem>>, vector<36x64xf32>
    tpu.vector_store %arg21[%c0_106, %c0_107], %108 {strides = array<i32>} : memref<36x64xf32, #tpu.memory_space<vmem>>, vector<36x64xf32>,
    %c0_108 = arith.constant 0 : index
    %c0_109 = arith.constant 0 : index
    %110 = tpu.strided_load %arg21[%c0_108, %c0_109] {strides = array<i32: 2, 1>} : memref<36x64xf32, #tpu.memory_space<vmem>>, vector<8x64xf32>
    %c1_110 = arith.constant 1 : index
    %c0_111 = arith.constant 0 : index
    %111 = tpu.strided_load %arg21[%c1_110, %c0_111] {strides = array<i32: 2, 1>} : memref<36x64xf32, #tpu.memory_space<vmem>>, vector<8x64xf32>
    %112 = arith.maximumf %110, %111 : vector<8x64xf32>
    %113 = arith.truncf %112 : vector<8x64xf32> to vector<8x64xbf16>
    %c2_112 = arith.constant 2 : index
    %c0_113 = arith.constant 0 : index
    %114 = vector.load %arg22[%c2_112, %c0_113] : memref<24x64xbf16, #tpu.memory_space<vmem>>, vector<8x64xbf16>
    tpu.vector_store %arg22[%c2_112, %c0_113], %113 {strides = array<i32>} : memref<24x64xbf16, #tpu.memory_space<vmem>>, vector<8x64xbf16>,
    %c20 = arith.constant 20 : index
    %c0_114 = arith.constant 0 : index
    %115 = tpu.strided_load %arg21[%c20, %c0_114] {strides = array<i32: 2, 1>} : memref<36x64xf32, #tpu.memory_space<vmem>>, vector<8x64xf32>
    %c21 = arith.constant 21 : index
    %c0_115 = arith.constant 0 : index
    %116 = tpu.strided_load %arg21[%c21, %c0_115] {strides = array<i32: 2, 1>} : memref<36x64xf32, #tpu.memory_space<vmem>>, vector<8x64xf32>
    %117 = arith.maximumf %115, %116 : vector<8x64xf32>
    %118 = arith.truncf %117 : vector<8x64xf32> to vector<8x64xbf16>
    %c14 = arith.constant 14 : index
    %c0_116 = arith.constant 0 : index
    %119 = vector.load %arg22[%c14, %c0_116] : memref<24x64xbf16, #tpu.memory_space<vmem>>, vector<8x64xbf16>
    tpu.vector_store %arg22[%c14, %c0_116], %118 {strides = array<i32>} : memref<24x64xbf16, #tpu.memory_space<vmem>>, vector<8x64xbf16>,
    %c0_117 = arith.constant 0 : index
    %c0_118 = arith.constant 0 : index
    %120 = vector.load %arg22[%c0_117, %c0_118] : memref<24x64xbf16, #tpu.memory_space<vmem>>, vector<20x64xbf16>
    %c0_119 = arith.constant 0 : index
    %c0_120 = arith.constant 0 : index
    %121 = vector.load %arg11[%c0_119, %c0_120] : memref<320x128xbf16, #tpu.memory_space<vmem>>, vector<64x128xbf16>
    %cst_121 = arith.constant dense<0.000000e+00> : vector<20x128xf32>
    %122 = tpu.matmul %120, %121, %cst_121 {dimension_numbers = #tpu.dot_dimension_numbers<[1], [0], [0], [1], [0, 0, 1, 1], [], []>} : vector<20x64xbf16>, vector<64x128xbf16>, vector<20x128xf32> -> vector<20x128xf32>
    %c1_122 = arith.constant 1 : index
    %c0_123 = arith.constant 0 : index
    %123 = vector.load %arg22[%c1_122, %c0_123] : memref<24x64xbf16, #tpu.memory_space<vmem>>, vector<20x64xbf16>
    %c64_124 = arith.constant 64 : index
    %c0_125 = arith.constant 0 : index
    %124 = vector.load %arg11[%c64_124, %c0_125] : memref<320x128xbf16, #tpu.memory_space<vmem>>, vector<64x128xbf16>
    %cst_126 = arith.constant dense<0.000000e+00> : vector<20x128xf32>
    %125 = tpu.matmul %123, %124, %cst_126 {dimension_numbers = #tpu.dot_dimension_numbers<[1], [0], [0], [1], [0, 0, 1, 1], [], []>} : vector<20x64xbf16>, vector<64x128xbf16>, vector<20x128xf32> -> vector<20x128xf32>
    %126 = arith.addf %122, %125 : vector<20x128xf32>
    %c2_127 = arith.constant 2 : index
    %c0_128 = arith.constant 0 : index
    %127 = vector.load %arg22[%c2_127, %c0_128] : memref<24x64xbf16, #tpu.memory_space<vmem>>, vector<20x64xbf16>
    %c128_129 = arith.constant 128 : index
    %c0_130 = arith.constant 0 : index
    %128 = vector.load %arg11[%c128_129, %c0_130] : memref<320x128xbf16, #tpu.memory_space<vmem>>, vector<64x128xbf16>
    %cst_131 = arith.constant dense<0.000000e+00> : vector<20x128xf32>
    %129 = tpu.matmul %127, %128, %cst_131 {dimension_numbers = #tpu.dot_dimension_numbers<[1], [0], [0], [1], [0, 0, 1, 1], [], []>} : vector<20x64xbf16>, vector<64x128xbf16>, vector<20x128xf32> -> vector<20x128xf32>
    %130 = arith.addf %126, %129 : vector<20x128xf32>
    %c3_132 = arith.constant 3 : index
    %c0_133 = arith.constant 0 : index
    %131 = vector.load %arg22[%c3_132, %c0_133] : memref<24x64xbf16, #tpu.memory_space<vmem>>, vector<20x64xbf16>
    %c192 = arith.constant 192 : index
    %c0_134 = arith.constant 0 : index
    %132 = vector.load %arg11[%c192, %c0_134] : memref<320x128xbf16, #tpu.memory_space<vmem>>, vector<64x128xbf16>
    %cst_135 = arith.constant dense<0.000000e+00> : vector<20x128xf32>
    %133 = tpu.matmul %131, %132, %cst_135 {dimension_numbers = #tpu.dot_dimension_numbers<[1], [0], [0], [1], [0, 0, 1, 1], [], []>} : vector<20x64xbf16>, vector<64x128xbf16>, vector<20x128xf32> -> vector<20x128xf32>
    %134 = arith.addf %130, %133 : vector<20x128xf32>
    %c4_136 = arith.constant 4 : index
    %c0_137 = arith.constant 0 : index
    %135 = vector.load %arg22[%c4_136, %c0_137] : memref<24x64xbf16, #tpu.memory_space<vmem>>, vector<20x64xbf16>
    %c256 = arith.constant 256 : index
    %c0_138 = arith.constant 0 : index
    %136 = vector.load %arg11[%c256, %c0_138] : memref<320x128xbf16, #tpu.memory_space<vmem>>, vector<64x128xbf16>
    %cst_139 = arith.constant dense<0.000000e+00> : vector<20x128xf32>
    %137 = tpu.matmul %135, %136, %cst_139 {dimension_numbers = #tpu.dot_dimension_numbers<[1], [0], [0], [1], [0, 0, 1, 1], [], []>} : vector<20x64xbf16>, vector<64x128xbf16>, vector<20x128xf32> -> vector<20x128xf32>
    %138 = arith.addf %134, %137 : vector<20x128xf32>
    %c0_140 = arith.constant 0 : index
    %c0_141 = arith.constant 0 : index
    %139 = vector.load %arg12[%c0_140, %c0_141] : memref<1x128xf32, #tpu.memory_space<vmem>>, vector<1x128xf32>
    %140 = vector.broadcast %139 : vector<1x128xf32> to vector<20x128xf32>
    %141 = arith.mulf %138, %140 : vector<20x128xf32>
    %c0_142 = arith.constant 0 : index
    %c0_143 = arith.constant 0 : index
    %142 = vector.load %arg13[%c0_142, %c0_143] : memref<1x128xf32, #tpu.memory_space<vmem>>, vector<1x128xf32>
    %143 = vector.broadcast %142 : vector<1x128xf32> to vector<20x128xf32>
    %144 = arith.addf %141, %143 : vector<20x128xf32>
    %cst_144 = arith.constant 0.000000e+00 : f32
    %145 = vector.broadcast %cst_144 : f32 to vector<20x128xf32>
    %146 = arith.maximumf %144, %145 : vector<20x128xf32>
    %c0_145 = arith.constant 0 : index
    %c0_146 = arith.constant 0 : index
    %147 = vector.load %arg23[%c0_145, %c0_146] : memref<20x128xf32, #tpu.memory_space<vmem>>, vector<20x128xf32>
    tpu.vector_store %arg23[%c0_145, %c0_146], %146 {strides = array<i32>} : memref<20x128xf32, #tpu.memory_space<vmem>>, vector<20x128xf32>,
    %c0_147 = arith.constant 0 : index
    %c0_148 = arith.constant 0 : index
    %148 = tpu.strided_load %arg23[%c0_147, %c0_148] {strides = array<i32: 2, 1>} : memref<20x128xf32, #tpu.memory_space<vmem>>, vector<4x128xf32>
    %c1_149 = arith.constant 1 : index
    %c0_150 = arith.constant 0 : index
    %149 = tpu.strided_load %arg23[%c1_149, %c0_150] {strides = array<i32: 2, 1>} : memref<20x128xf32, #tpu.memory_space<vmem>>, vector<4x128xf32>
    %150 = arith.maximumf %148, %149 : vector<4x128xf32>
    %c0_151 = arith.constant 0 : index
    %c0_152 = arith.constant 0 : index
    %151 = vector.load %arg24[%c0_151, %c0_152] : memref<8x128xf32, #tpu.memory_space<vmem>>, vector<4x128xf32>
    tpu.vector_store %arg24[%c0_151, %c0_152], %150 {strides = array<i32>} : memref<8x128xf32, #tpu.memory_space<vmem>>, vector<4x128xf32>,
    %c12_153 = arith.constant 12 : index
    %c0_154 = arith.constant 0 : index
    %152 = tpu.strided_load %arg23[%c12_153, %c0_154] {strides = array<i32: 2, 1>} : memref<20x128xf32, #tpu.memory_space<vmem>>, vector<4x128xf32>
    %c13 = arith.constant 13 : index
    %c0_155 = arith.constant 0 : index
    %153 = tpu.strided_load %arg23[%c13, %c0_155] {strides = array<i32: 2, 1>} : memref<20x128xf32, #tpu.memory_space<vmem>>, vector<4x128xf32>
    %154 = arith.maximumf %152, %153 : vector<4x128xf32>
    %c4_156 = arith.constant 4 : index
    %c0_157 = arith.constant 0 : index
    %155 = vector.load %arg24[%c4_156, %c0_157] : memref<8x128xf32, #tpu.memory_space<vmem>>, vector<4x128xf32>
    tpu.vector_store %arg24[%c4_156, %c0_157], %154 {strides = array<i32>} : memref<8x128xf32, #tpu.memory_space<vmem>>, vector<4x128xf32>,
    %cst_158 = arith.constant 0.000000e+00 : f32
    %156 = vector.broadcast %cst_158 : f32 to vector<2x128xf32>
    %c0_159 = arith.constant 0 : index
    %c0_160 = arith.constant 0 : index
    %157 = tpu.strided_load %arg24[%c0_159, %c0_160] {strides = array<i32: 4, 1>} : memref<8x128xf32, #tpu.memory_space<vmem>>, vector<2x128xf32>
    %158 = arith.truncf %157 : vector<2x128xf32> to vector<2x128xbf16>
    %c0_161 = arith.constant 0 : index
    %c0_162 = arith.constant 0 : index
    %c0_163 = arith.constant 0 : index
    %159 = vector.load %arg14[%c0_161, %c0_162, %c0_163] : memref<4x128x128xbf16, #tpu.memory_space<vmem>>, vector<1x128x128xbf16>
    %160 = vector.shape_cast %159 : vector<1x128x128xbf16> to vector<128x128xbf16>
    %cst_164 = arith.constant dense<0.000000e+00> : vector<2x128xf32>
    %161 = tpu.matmul %158, %160, %cst_164 {dimension_numbers = #tpu.dot_dimension_numbers<[1], [0], [0], [1], [0, 0, 1, 1], [], []>} : vector<2x128xbf16>, vector<128x128xbf16>, vector<2x128xf32> -> vector<2x128xf32>
    %162 = arith.addf %156, %161 : vector<2x128xf32>
    %c1_165 = arith.constant 1 : index
    %c0_166 = arith.constant 0 : index
    %163 = tpu.strided_load %arg24[%c1_165, %c0_166] {strides = array<i32: 4, 1>} : memref<8x128xf32, #tpu.memory_space<vmem>>, vector<2x128xf32>
    %164 = arith.truncf %163 : vector<2x128xf32> to vector<2x128xbf16>
    %c1_167 = arith.constant 1 : index
    %c0_168 = arith.constant 0 : index
    %c0_169 = arith.constant 0 : index
    %165 = vector.load %arg14[%c1_167, %c0_168, %c0_169] : memref<4x128x128xbf16, #tpu.memory_space<vmem>>, vector<1x128x128xbf16>
    %166 = vector.shape_cast %165 : vector<1x128x128xbf16> to vector<128x128xbf16>
    %cst_170 = arith.constant dense<0.000000e+00> : vector<2x128xf32>
    %167 = tpu.matmul %164, %166, %cst_170 {dimension_numbers = #tpu.dot_dimension_numbers<[1], [0], [0], [1], [0, 0, 1, 1], [], []>} : vector<2x128xbf16>, vector<128x128xbf16>, vector<2x128xf32> -> vector<2x128xf32>
    %168 = arith.addf %162, %167 : vector<2x128xf32>
    %c2_171 = arith.constant 2 : index
    %c0_172 = arith.constant 0 : index
    %169 = tpu.strided_load %arg24[%c2_171, %c0_172] {strides = array<i32: 4, 1>} : memref<8x128xf32, #tpu.memory_space<vmem>>, vector<2x128xf32>
    %170 = arith.truncf %169 : vector<2x128xf32> to vector<2x128xbf16>
    %c2_173 = arith.constant 2 : index
    %c0_174 = arith.constant 0 : index
    %c0_175 = arith.constant 0 : index
    %171 = vector.load %arg14[%c2_173, %c0_174, %c0_175] : memref<4x128x128xbf16, #tpu.memory_space<vmem>>, vector<1x128x128xbf16>
    %172 = vector.shape_cast %171 : vector<1x128x128xbf16> to vector<128x128xbf16>
    %cst_176 = arith.constant dense<0.000000e+00> : vector<2x128xf32>
    %173 = tpu.matmul %170, %172, %cst_176 {dimension_numbers = #tpu.dot_dimension_numbers<[1], [0], [0], [1], [0, 0, 1, 1], [], []>} : vector<2x128xbf16>, vector<128x128xbf16>, vector<2x128xf32> -> vector<2x128xf32>
    %174 = arith.addf %168, %173 : vector<2x128xf32>
    %c3_177 = arith.constant 3 : index
    %c0_178 = arith.constant 0 : index
    %175 = tpu.strided_load %arg24[%c3_177, %c0_178] {strides = array<i32: 4, 1>} : memref<8x128xf32, #tpu.memory_space<vmem>>, vector<2x128xf32>
    %176 = arith.truncf %175 : vector<2x128xf32> to vector<2x128xbf16>
    %c3_179 = arith.constant 3 : index
    %c0_180 = arith.constant 0 : index
    %c0_181 = arith.constant 0 : index
    %177 = vector.load %arg14[%c3_179, %c0_180, %c0_181] : memref<4x128x128xbf16, #tpu.memory_space<vmem>>, vector<1x128x128xbf16>
    %178 = vector.shape_cast %177 : vector<1x128x128xbf16> to vector<128x128xbf16>
    %cst_182 = arith.constant dense<0.000000e+00> : vector<2x128xf32>
    %179 = tpu.matmul %176, %178, %cst_182 {dimension_numbers = #tpu.dot_dimension_numbers<[1], [0], [0], [1], [0, 0, 1, 1], [], []>} : vector<2x128xbf16>, vector<128x128xbf16>, vector<2x128xf32> -> vector<2x128xf32>
    %180 = arith.addf %174, %179 : vector<2x128xf32>
    %c0_183 = arith.constant 0 : index
    %c0_184 = arith.constant 0 : index
    %181 = vector.load %arg15[%c0_183, %c0_184] : memref<1x128xf32, #tpu.memory_space<vmem>>, vector<1x128xf32>
    %182 = vector.broadcast %181 : vector<1x128xf32> to vector<2x128xf32>
    %183 = arith.addf %180, %182 : vector<2x128xf32>
    %cst_185 = arith.constant 0.000000e+00 : f32
    %184 = vector.broadcast %cst_185 : f32 to vector<2x128xf32>
    %185 = arith.maximumf %183, %184 : vector<2x128xf32>
    %c0_186 = arith.constant 0 : index
    %c0_187 = arith.constant 0 : index
    %186 = vector.load %arg16[%c0_186, %c0_187] : memref<2x128xf32, #tpu.memory_space<vmem>>, vector<2x128xf32>
    tpu.vector_store %arg16[%c0_186, %c0_187], %185 {strides = array<i32>} : memref<2x128xf32, #tpu.memory_space<vmem>>, vector<2x128xf32>,
    return
  }
  func.func @transform_0(%arg0: i32) -> (i32, i32) {
    %c0_i32 = arith.constant 0 : i32
    %c0_i32_0 = arith.constant 0 : i32
    return %arg0, %c0_i32 : i32, i32
  }
  func.func @transform_1(%arg0: i32) -> (i32, i32) {
    %c0_i32 = arith.constant 0 : i32
    %c0_i32_0 = arith.constant 0 : i32
    %c0_i32_1 = arith.constant 0 : i32
    return %c0_i32, %c0_i32_0 : i32, i32
  }
  func.func @transform_2(%arg0: i32) -> (i32, i32) {
    %c0_i32 = arith.constant 0 : i32
    %c0_i32_0 = arith.constant 0 : i32
    %c0_i32_1 = arith.constant 0 : i32
    return %c0_i32, %c0_i32_0 : i32, i32
  }
  func.func @transform_3(%arg0: i32) -> (i32, i32) {
    %c0_i32 = arith.constant 0 : i32
    %c0_i32_0 = arith.constant 0 : i32
    %c0_i32_1 = arith.constant 0 : i32
    return %c0_i32, %c0_i32_0 : i32, i32
  }
  func.func @transform_4(%arg0: i32) -> (i32, i32) {
    %c0_i32 = arith.constant 0 : i32
    %c0_i32_0 = arith.constant 0 : i32
    %c0_i32_1 = arith.constant 0 : i32
    return %c0_i32, %c0_i32_0 : i32, i32
  }
  func.func @transform_5(%arg0: i32) -> (i32, i32) {
    %c0_i32 = arith.constant 0 : i32
    %c0_i32_0 = arith.constant 0 : i32
    %c0_i32_1 = arith.constant 0 : i32
    return %c0_i32, %c0_i32_0 : i32, i32
  }
  func.func @transform_6(%arg0: i32) -> (i32, i32) {
    %c0_i32 = arith.constant 0 : i32
    %c0_i32_0 = arith.constant 0 : i32
    %c0_i32_1 = arith.constant 0 : i32
    return %c0_i32, %c0_i32_0 : i32, i32
  }
  func.func @transform_7(%arg0: i32) -> (i32, i32) {
    %c0_i32 = arith.constant 0 : i32
    %c0_i32_0 = arith.constant 0 : i32
    %c0_i32_1 = arith.constant 0 : i32
    return %c0_i32, %c0_i32_0 : i32, i32
  }
  func.func @transform_8(%arg0: i32) -> (i32, i32) {
    %c0_i32 = arith.constant 0 : i32
    %c0_i32_0 = arith.constant 0 : i32
    %c0_i32_1 = arith.constant 0 : i32
    return %c0_i32, %c0_i32_0 : i32, i32
  }
  func.func @transform_9(%arg0: i32) -> (i32, i32) {
    %c0_i32 = arith.constant 0 : i32
    %c0_i32_0 = arith.constant 0 : i32
    %c0_i32_1 = arith.constant 0 : i32
    return %c0_i32, %c0_i32_0 : i32, i32
  }
  func.func @transform_10(%arg0: i32) -> (i32, i32) {
    %c0_i32 = arith.constant 0 : i32
    %c0_i32_0 = arith.constant 0 : i32
    %c0_i32_1 = arith.constant 0 : i32
    return %c0_i32, %c0_i32_0 : i32, i32
  }
  func.func @transform_11(%arg0: i32) -> (i32, i32) {
    %c0_i32 = arith.constant 0 : i32
    %c0_i32_0 = arith.constant 0 : i32
    %c0_i32_1 = arith.constant 0 : i32
    return %c0_i32, %c0_i32_0 : i32, i32
  }
  func.func @transform_12(%arg0: i32) -> (i32, i32) {
    %c0_i32 = arith.constant 0 : i32
    %c0_i32_0 = arith.constant 0 : i32
    %c0_i32_1 = arith.constant 0 : i32
    return %c0_i32, %c0_i32_0 : i32, i32
  }
  func.func @transform_13(%arg0: i32) -> (i32, i32, i32) {
    %c0_i32 = arith.constant 0 : i32
    %c0_i32_0 = arith.constant 0 : i32
    %c0_i32_1 = arith.constant 0 : i32
    %c0_i32_2 = arith.constant 0 : i32
    return %c0_i32, %c0_i32_0, %c0_i32_1 : i32, i32, i32
  }
  func.func @transform_14(%arg0: i32) -> (i32, i32) {
    %c0_i32 = arith.constant 0 : i32
    %c0_i32_0 = arith.constant 0 : i32
    %c0_i32_1 = arith.constant 0 : i32
    return %c0_i32, %c0_i32_0 : i32, i32
  }
  func.func @transform_15(%arg0: i32) -> (i32, i32) {
    %c0_i32 = arith.constant 0 : i32
    %c0_i32_0 = arith.constant 0 : i32
    return %arg0, %c0_i32 : i32, i32
  }
}

</mosaic_0001>

<llo_original>
// kernel: tpu_custom_call.1
$region0: #{tpu_custom_call.1}
  #allocation0 [shape = 'u32[]', space=smem, size = 0x4, offset = 0x4, fixed_abs, tag = 'smem constant byte address 0x4 - core index']
  #allocation1 [shape = 'u32[144,128]{1,0:T(1,128)}', space=vmem, size = 0x12000, scoped, tag = 'internal scratch']
  #allocation2 [shape = 'f32[132,16]{1,0:T(8,128)}', space=vmem, size = 0x11000, scoped, tag = 'scratch operand']
  #allocation3 [shape = 'bf16[72,16]{1,0:T(8,128)(2,1)}', space=vmem, size = 0x4800, scoped, tag = 'scratch operand']
  #allocation4 [shape = 'f32[68,32]{1,0:T(8,128)}', space=vmem, size = 0x9000, scoped, tag = 'scratch operand']
  #allocation5 [shape = 'bf16[40,32]{1,0:T(8,128)(2,1)}', space=vmem, size = 0x2800, scoped, tag = 'scratch operand']
  #allocation6 [shape = 'f32[36,64]{1,0:T(8,128)}', space=vmem, size = 0x5000, scoped, tag = 'scratch operand']
  #allocation7 [shape = 'bf16[24,64]{1,0:T(8,128)(2,1)}', space=vmem, size = 0x1800, scoped, tag = 'scratch operand']
  #allocation8 [shape = 'f32[20,128]{1,0:T(8,128)}', space=vmem, size = 0x3000, scoped, tag = 'scratch operand']
  #allocation9 [shape = 'f32[8,128]{1,0:T(8,128)}', space=vmem, size = 0x1000, scoped, tag = 'scratch operand']
  %s0 = inlined_call_operand.vmem [shape: bf16[136,3], index: 0, kind: input, shape index: {}]
  %s1 = inlined_call_operand.vmem [shape: bf16[15,16], index: 1, kind: input, shape index: {}]
  %s2 = inlined_call_operand.vmem [shape: f32[1,16], index: 2, kind: input, shape index: {}]
  %s3 = inlined_call_operand.vmem [shape: f32[1,16], index: 3, kind: input, shape index: {}]
  %s4 = inlined_call_operand.vmem [shape: bf16[80,32], index: 4, kind: input, shape index: {}]
  %s5 = inlined_call_operand.vmem [shape: f32[1,32], index: 5, kind: input, shape index: {}]
  %s6 = inlined_call_operand.vmem [shape: f32[1,32], index: 6, kind: input, shape index: {}]
  %s7 = inlined_call_operand.vmem [shape: bf16[160,64], index: 7, kind: input, shape index: {}]
  %s8 = inlined_call_operand.vmem [shape: f32[1,64], index: 8, kind: input, shape index: {}]
  %s9 = inlined_call_operand.vmem [shape: f32[1,64], index: 9, kind: input, shape index: {}]
  %s10 = inlined_call_operand.hbm [shape: bf16[320,128], index: 10, kind: input, shape index: {}]
  %s11 = inlined_call_operand.vmem [shape: f32[1,128], index: 11, kind: input, shape index: {}]
  %s12 = inlined_call_operand.vmem [shape: f32[1,128], index: 12, kind: input, shape index: {}]
  %s13 = inlined_call_operand.vmem [shape: bf16[4,128,128], index: 13, kind: input, shape index: {}]
  %s14 = inlined_call_operand.vmem [shape: f32[1,128], index: 14, kind: input, shape index: {}]
  %s15 = inlined_call_operand.hbm [shape: f32[2,128], index: 15, kind: output, shape index: {}]
  %s16 = sld [smem:[#allocation0]]
  $region74: #{tpu_custom_call.1} parent=0
    _
  %s18 = ssub.s32 1, %s16
  %s19 = scalar_select 0, %s18, %s16
  $region1: #{tpu_custom_call.1} parent=0
    #allocation10 [shape = 'u8[81920]{0}', space=vmem, size = 0x14000, scoped, tag = 'input window, operand 10, single buffered']
    #allocation11 [shape = 's32[1]{0}', space=sflag, size = 0x4, scoped, tag = 'scoped memory for tpu_custom_call.1']
    #allocation12 [shape = 's32[1]{0}', space=sflag, size = 0x4, scoped, tag = 'scoped memory for tpu_custom_call.1']
    #allocation13 [shape = 'u8[1024]{0}', space=vmem, size = 0x400, scoped, tag = 'output window, operand 0, single buffered']
    %20 = vsyncpa [#allocation11], 0
    %21 = vsyncpa [#allocation12], 0
    // Predicated region
    $region2: #{tpu_custom_call.1} parent=1 // pred_check
      _
    $region3: #{tpu_custom_call.1} parent=1 // pred_check_branch
      %23 = sbr.rel (0) target = $region5
    $region4: #{tpu_custom_call.1} parent=1 // pred_region
      _
    $region5: #{tpu_custom_call.1} parent=1 // pred_fallthru
      _
    // Predicated region
    $region6: #{tpu_custom_call.1} parent=1 // pred_check
      _
    $region7: #{tpu_custom_call.1} parent=1 // pred_check_branch
      %25 = sbr.rel (0) target = $region9
    $region8: #{tpu_custom_call.1} parent=1 // pred_region
      _
    $region9: #{tpu_custom_call.1} parent=1 // pred_fallthru
      _
    // Predicated region
    $region10: #{tpu_custom_call.1} parent=1 // pred_check
      _
    $region11: #{tpu_custom_call.1} parent=1 // pred_check_branch
      %27 = sbr.rel (0) target = $region13
    $region12: #{tpu_custom_call.1} parent=1 // pred_region
      _
    $region13: #{tpu_custom_call.1} parent=1 // pred_fallthru
      _
    // Predicated region
    $region14: #{tpu_custom_call.1} parent=1 // pred_check
      _
    $region15: #{tpu_custom_call.1} parent=1 // pred_check_branch
      %29 = sbr.rel (0) target = $region17
    $region16: #{tpu_custom_call.1} parent=1 // pred_region
      _
    $region17: #{tpu_custom_call.1} parent=1 // pred_fallthru
      _
    // Predicated region
    $region18: #{tpu_custom_call.1} parent=1 // pred_check
      _
    $region19: #{tpu_custom_call.1} parent=1 // pred_check_branch
      %31 = sbr.rel (0) target = $region21
    $region20: #{tpu_custom_call.1} parent=1 // pred_region
      _
    $region21: #{tpu_custom_call.1} parent=1 // pred_fallthru
      _
    // Predicated region
    $region22: #{tpu_custom_call.1} parent=1 // pred_check
      _
    $region23: #{tpu_custom_call.1} parent=1 // pred_check_branch
      %33 = sbr.rel (0) target = $region25
    $region24: #{tpu_custom_call.1} parent=1 // pred_region
      _
    $region25: #{tpu_custom_call.1} parent=1 // pred_fallthru
      _
    // Predicated region
    $region26: #{tpu_custom_call.1} parent=1 // pred_check
      _
    $region27: #{tpu_custom_call.1} parent=1 // pred_check_branch
      %35 = sbr.rel (0) target = $region29
    $region28: #{tpu_custom_call.1} parent=1 // pred_region
      _
    $region29: #{tpu_custom_call.1} parent=1 // pred_fallthru
      _
    // Predicated region
    $region30: #{tpu_custom_call.1} parent=1 // pred_check
      _
    $region31: #{tpu_custom_call.1} parent=1 // pred_check_branch
      %37 = sbr.rel (0) target = $region33
    $region32: #{tpu_custom_call.1} parent=1 // pred_region
      _
    $region33: #{tpu_custom_call.1} parent=1 // pred_fallthru
      _
    // Predicated region
    $region34: #{tpu_custom_call.1} parent=1 // pred_check
      _
    $region35: #{tpu_custom_call.1} parent=1 // pred_check_branch
      %39 = sbr.rel (0) target = $region37
    $region36: #{tpu_custom_call.1} parent=1 // pred_region
      _
    $region37: #{tpu_custom_call.1} parent=1 // pred_fallthru
      _
    // Predicated region
    $region38: #{tpu_custom_call.1} parent=1 // pred_check
      _
    $region39: #{tpu_custom_call.1} parent=1 // pred_check_branch
      %41 = sbr.rel (0) target = $region41
    $region40: #{tpu_custom_call.1} parent=1 // pred_region
      _
    $region41: #{tpu_custom_call.1} parent=1 // pred_fallthru
      _
    // Predicated region
    $region42: #{tpu_custom_call.1} parent=1 // pred_check
      _
    $region43: #{tpu_custom_call.1} parent=1 // pred_check_branch
      %43 = sbr.rel (0) target = $region45
    $region44: #{tpu_custom_call.1} parent=1 // pred_region
      %s45 = ssub.s32 2560, 2560
      %46 = vsyncadd [#allocation11], %s45
      %s47 = sshll.u32 [#allocation10], 4
      %s48 = int_to_ptr.vmem [resolvable:$true] %s47
      %53 = dma.hbm_to_vmem [thread:$0]  %s10, 2560, %s48, [#allocation11], 64, 64, 4
    $region45: #{tpu_custom_call.1} parent=1 // pred_fallthru
      _
    // Predicated region
    $region46: #{tpu_custom_call.1} parent=1 // pred_check
      _
    $region47: #{tpu_custom_call.1} parent=1 // pred_check_branch
      %55 = sbr.rel (0) target = $region49
    $region48: #{tpu_custom_call.1} parent=1 // pred_region
      _
    $region49: #{tpu_custom_call.1} parent=1 // pred_fallthru
      _
    // Predicated region
    $region50: #{tpu_custom_call.1} parent=1 // pred_check
      _
    $region51: #{tpu_custom_call.1} parent=1 // pred_check_branch
      %57 = sbr.rel (0) target = $region53
    $region52: #{tpu_custom_call.1} parent=1 // pred_region
      _
    $region53: #{tpu_custom_call.1} parent=1 // pred_fallthru
      _
    // Predicated region
    $region54: #{tpu_custom_call.1} parent=1 // pred_check
      _
    $region55: #{tpu_custom_call.1} parent=1 // pred_check_branch
      %59 = sbr.rel (0) target = $region57
    $region56: #{tpu_custom_call.1} parent=1 // pred_region
      _
    $region57: #{tpu_custom_call.1} parent=1 // pred_fallthru
      _
    // Predicated region
    $region58: #{tpu_custom_call.1} parent=1 // pred_check
      _
    $region59: #{tpu_custom_call.1} parent=1 // pred_check_branch
      %61 = sbr.rel (0) target = $region61
    $region60: #{tpu_custom_call.1} parent=1 // pred_region
      _
    $region61: #{tpu_custom_call.1} parent=1 // pred_fallthru
      _
    // Predicated region
    $region62: #{tpu_custom_call.1} parent=1 // pred_check
      _
    $region63: #{tpu_custom_call.1} parent=1 // pred_check_branch
      %63 = sbr.rel (0) target = $region65
    $region64: #{tpu_custom_call.1} parent=1 // pred_region
      %64 = dma.done [#allocation11], 2560
    $region65: #{tpu_custom_call.1} parent=1 // pred_fallthru
      _
    %vm66 = vcmask 125952
    %67 = vst.msk [vmem:[#allocation3] sm:$0xf] %vm66, 0
    %68 = vst.msk [vmem:[#allocation3 + $0x4] sm:$0xf] %vm66, 0
    %69 = vst.msk [vmem:[#allocation3 + $0x8] sm:$0xf] %vm66, 0
    %70 = vst.msk [vmem:[#allocation3 + $0xc] sm:$0xf] %vm66, 0
    %71 = vst.msk [vmem:[#allocation3 + $0x10] sm:$0xf] %vm66, 0
    %72 = vst.msk [vmem:[#allocation3 + $0x14] sm:$0xf] %vm66, 0
    %73 = vst.msk [vmem:[#allocation3 + $0x18] sm:$0xf] %vm66, 0
    %74 = vst.msk [vmem:[#allocation3 + $0x1c] sm:$0xf] %vm66, 0
    %75 = vst.msk [vmem:[#allocation3 + $0x20] sm:$0xf] %vm66, 0
    %vm76 = vcmask 257024
    %77 = vst.msk [vmem:[#allocation5] sm:$0xf] %vm76, 0
    %78 = vst.msk [vmem:[#allocation5 + $0x4] sm:$0xf] %vm76, 0
    %79 = vst.msk [vmem:[#allocation5 + $0x8] sm:$0xf] %vm76, 0
    %80 = vst.msk [vmem:[#allocation5 + $0xc] sm:$0xf] %vm76, 0
    %81 = vst.msk [vmem:[#allocation5 + $0x10] sm:$0xf] %vm76, 0
    %vm82 = vcmask 519168
    %83 = vst.msk [vmem:[#allocation7] sm:$0xf] %vm82, 0
    %84 = vst.msk [vmem:[#allocation7 + $0x4] sm:$0xf] %vm82, 0
    %85 = vst.msk [vmem:[#allocation7 + $0x8] sm:$0xf] %vm82, 0
    %v86 = vld [vmem:[%s0] sm:$0xf]
    %v87 = vld [vmem:[%s0 + $0x4] sm:$0xf]
    %v88 = vld [vmem:[%s0 + $0x8] sm:$0xf]
    %v89 = vld [vmem:[%s0 + $0xc] sm:$0xf]
    %v90 = vld [vmem:[%s0 + $0x10] sm:$0xf]
    %v91 = vld [vmem:[%s0 + $0x14] sm:$0xf]
    %v92 = vld [vmem:[%s0 + $0x18] sm:$0xf]
    %v93 = vld [vmem:[%s0 + $0x1c] sm:$0xf]
    %v94 = vld [vmem:[%s0 + $0x20] sm:$0xf]
    %v95 = vld [vmem:[%s0 + $0x24] sm:$0xf]
    %v96 = vld [vmem:[%s0 + $0x28] sm:$0xf]
    %v97 = vld [vmem:[%s0 + $0x2c] sm:$0xf]
    %v98 = vld [vmem:[%s0 + $0x30] sm:$0xf]
    %v99 = vld [vmem:[%s0 + $0x34] sm:$0xf]
    %v100 = vld [vmem:[%s0 + $0x38] sm:$0xf]
    %v101 = vld [vmem:[%s0 + $0x3c] sm:$0xf]
    %v102 = vld [vmem:[%s0 + $0x40] sm:$0x3]
    %v103 = vld [vmem:[%s1] sm:$0x3]
    %v104 = vld [vmem:[%s0 + $0x40] sm:$0x7]
    %v105 = vld [vmem:[%s1] sm:$0x6]
    %v123 = vunpack.c.l.b16 %v86
    %v124 = vunpack.c.l.b16 %v87
    %v125 = vunpack.c.l.b16 %v88
    %v126 = vunpack.c.l.b16 %v89
    %v127 = vunpack.c.l.b16 %v90
    %v128 = vunpack.c.l.b16 %v91
    %v129 = vunpack.c.l.b16 %v92
    %v130 = vunpack.c.l.b16 %v93
    %v131 = vunpack.c.l.b16 %v94
    %v132 = vunpack.c.l.b16 %v95
    %v133 = vunpack.c.l.b16 %v96
    %v134 = vunpack.c.l.b16 %v97
    %v135 = vunpack.c.l.b16 %v98
    %v136 = vunpack.c.l.b16 %v99
    %v137 = vunpack.c.l.b16 %v100
    %v138 = vunpack.c.l.b16 %v101
    %v139 = vunpack.c.l.b16 %v104
    %v140 = vpack.c.b16 %v124, %v123
    %v141 = vpack.c.b16 %v126, %v125
    %v142 = vpack.c.b16 %v128, %v127
    %v143 = vpack.c.b16 %v130, %v129
    %v144 = vpack.c.b16 %v132, %v131
    %v145 = vpack.c.b16 %v134, %v133
    %v146 = vpack.c.b16 %v136, %v135
    %v147 = vpack.c.b16 %v138, %v137
    %v148 = vpack.c.b16 %v139, %v139
    %vm149 = vsmask.f32 7424
    %v151 = vshrl.u32 %v140, 16
    %v153 = vshll.u32 %v140, 16
    %v155 = vrot.slane %v153, 1
    %v156 = vor.u32 %v151, %v155
    %v158 = vshll.u32 %v141, 16
    %v160 = vrot.slane %v158, 1
    %v161 = vsel %vm149, %v156, %v160
    %v162 = vshrl.u32 %v141, 16
    %v164 = vor.u32 %v162, %v160
    %v166 = vshll.u32 %v142, 16
    %v168 = vrot.slane %v166, 1
    %v169 = vsel %vm149, %v164, %v168
    %v170 = vshrl.u32 %v142, 16
    %v172 = vor.u32 %v170, %v168
    %v174 = vshll.u32 %v143, 16
    %v176 = vrot.slane %v174, 1
    %v177 = vsel %vm149, %v172, %v176
    %v178 = vshrl.u32 %v143, 16
    %v180 = vor.u32 %v178, %v176
    %v182 = vshll.u32 %v144, 16
    %v184 = vrot.slane %v182, 1
    %v185 = vsel %vm149, %v180, %v184
    %v186 = vshrl.u32 %v144, 16
    %v188 = vor.u32 %v186, %v184
    %v190 = vshll.u32 %v145, 16
    %v192 = vrot.slane %v190, 1
    %v193 = vsel %vm149, %v188, %v192
    %v194 = vshrl.u32 %v145, 16
    %v196 = vor.u32 %v194, %v192
    %v198 = vshll.u32 %v146, 16
    %v200 = vrot.slane %v198, 1
    %v201 = vsel %vm149, %v196, %v200
    %v202 = vshrl.u32 %v146, 16
    %v204 = vor.u32 %v202, %v200
    %v206 = vshll.u32 %v147, 16
    %v208 = vrot.slane %v206, 1
    %v209 = vsel %vm149, %v204, %v208
    %v210 = vshrl.u32 %v147, 16
    %v212 = vor.u32 %v210, %v208
    %v214 = vshll.u32 %v148, 16
    %v216 = vrot.slane %v214, 1
    %v217 = vsel %vm149, %v212, %v216
    %v218 = vshrl.u32 %v148, 16
    %v220 = vor.u32 %v218, %v216
    %v222 = vunpack.c.l.b16 %v105
    %v223 = vpack.c.b16 %v222, %v222
    %v225 = vshrl.u32 %v223, 16
    %v227 = vrot.slane %v225, 1
    %v228 = vshll.u32 %v223, 16
    %v230 = vrot.slane %v228, 2
    %v231 = vor.u32 %v227, %v230
    %vm232 = vcmask 23552
    %v234 = vsel %vm232, %v161, 0
    %v237 = vsel %vm232, %v169, 0
    %v240 = vsel %vm232, %v177, 0
    %v243 = vsel %vm232, %v185, 0
    %v246 = vsel %vm232, %v193, 0
    %v249 = vsel %vm232, %v201, 0
    %v252 = vsel %vm232, %v209, 0
    %v255 = vsel %vm232, %v217, 0
    %v258 = vsel %vm232, %v220, 0
    %vm260 = vcmask 1040384
    %vm261 = vcmask 1041408
    %v262 = vsel %vm260, 4294967295, 65535
    %v263 = vsel %vm261, %v262, 0
    %v265 = vand.u32 %v231, %v263
    %267 = vmatprep.subr.bf16.mxu0 0
    %268 = vmatpush1.bf16.msra.mxu0 %v265
    %269 = vmatprep.subr.bf16.mxu0 0
    %270 = vmatpush1.bf16.msra.mxu0 0
    %271 = vmatprep.subr.bf16.mxu0 0
    %272 = vmatpush1.bf16.msra.mxu0 0
    %273 = vmatprep.subr.bf16.mxu0 0
    %274 = vmatpush1.bf16.msra.mxu0 0
    %275 = vmatprep.subr.bf16.mxu0 0
    %276 = vmatpush1.bf16.msra.mxu0 0
    %277 = vmatprep.subr.bf16.mxu0 0
    %278 = vmatpush1.bf16.msra.mxu0 0
    %279 = vmatprep.subr.bf16.mxu0 0
    %280 = vmatpush1.bf16.msra.mxu0 0
    %281 = vmatprep.subr.bf16.mxu0 0
    %282 = vmatpush1.bf16.msra.mxu0 0
    %283 = vmatprep.subr.bf16.mxu0 0
    %284 = vmatpush1.bf16.msra.mxu0 0
    %285 = vmatprep.subr.bf16.mxu0 0
    %286 = vmatpush1.bf16.msra.mxu0 0
    %287 = vmatprep.subr.bf16.mxu0 0
    %288 = vmatpush1.bf16.msra.mxu0 0
    %289 = vmatprep.subr.bf16.mxu0 0
    %290 = vmatpush1.bf16.msra.mxu0 0
    %291 = vmatprep.subr.bf16.mxu0 0
    %292 = vmatpush1.bf16.msra.mxu0 0
    %293 = vmatprep.subr.bf16.mxu0 0
    %294 = vmatpush1.bf16.msra.mxu0 0
    %295 = vmatprep.subr.bf16.mxu0 0
    %296 = vmatpush1.bf16.msra.mxu0 0
    %297 = vmatprep.subr.bf16.mxu0 0
    %298 = vmatpush1.bf16.msra.mxu0 0
    %299 = vmatprep.mubr.bf16.mxu0 0
    %300 = vmatmul.mubr.bf16.gmra.mrb[0].mxu0 %v234
    %v301 = vpop.f32.mrb[0].mxu0
    %v302 = vadd.f32 0.0, %v301
    %v303 = vpop.f32.mrb[0].mxu0
    %v304 = vpop.f32.mrb[0].mxu0
    %v305 = vadd.f32 0.0, %v304
    %v306 = vpop.f32.mrb[0].mxu0
    %307 = vmatprep.mubr.bf16.mxu0 0
    %308 = vmatmul.mubr.bf16.gmra.mrb[0].mxu0 %v237
    %v309 = vpop.f32.mrb[0].mxu0
    %v310 = vadd.f32 0.0, %v309
    %v311 = vpop.f32.mrb[0].mxu0
    %v312 = vpop.f32.mrb[0].mxu0
    %v313 = vadd.f32 0.0, %v312
    %v314 = vpop.f32.mrb[0].mxu0
    %315 = vmatprep.mubr.bf16.mxu0 0
    %316 = vmatmul.mubr.bf16.gmra.mrb[0].mxu0 %v240
    %v317 = vpop.f32.mrb[0].mxu0
    %v318 = vadd.f32 0.0, %v317
    %v319 = vpop.f32.mrb[0].mxu0
    %v320 = vpop.f32.mrb[0].mxu0
    %v321 = vadd.f32 0.0, %v320
    %v322 = vpop.f32.mrb[0].mxu0
    %323 = vmatprep.mubr.bf16.mxu0 0
    %324 = vmatmul.mubr.bf16.gmra.mrb[0].mxu0 %v243
    %v325 = vpop.f32.mrb[0].mxu0
    %v326 = vadd.f32 0.0, %v325
    %v327 = vpop.f32.mrb[0].mxu0
    %v328 = vpop.f32.mrb[0].mxu0
    %v329 = vadd.f32 0.0, %v328
    %v330 = vpop.f32.mrb[0].mxu0
    %331 = vmatprep.mubr.bf16.mxu0 0
    %332 = vmatmul.mubr.bf16.gmra.mrb[0].mxu0 %v246
    %v333 = vpop.f32.mrb[0].mxu0
    %v334 = vadd.f32 0.0, %v333
    %v335 = vpop.f32.mrb[0].mxu0
    %v336 = vpop.f32.mrb[0].mxu0
    %v337 = vadd.f32 0.0, %v336
    %v338 = vpop.f32.mrb[0].mxu0
    %339 = vmatprep.mubr.bf16.mxu0 0
    %340 = vmatmul.mubr.bf16.gmra.mrb[0].mxu0 %v249
    %v341 = vpop.f32.mrb[0].mxu0
    %v342 = vadd.f32 0.0, %v341
    %v343 = vpop.f32.mrb[0].mxu0
    %v344 = vpop.f32.mrb[0].mxu0
    %v345 = vadd.f32 0.0, %v344
    %v346 = vpop.f32.mrb[0].mxu0
    %347 = vmatprep.mubr.bf16.mxu0 0
    %348 = vmatmul.mubr.bf16.gmra.mrb[0].mxu0 %v252
    %v349 = vpop.f32.mrb[0].mxu0
    %v350 = vadd.f32 0.0, %v349
    %v351 = vpop.f32.mrb[0].mxu0
    %v352 = vpop.f32.mrb[0].mxu0
    %v353 = vadd.f32 0.0, %v352
    %v354 = vpop.f32.mrb[0].mxu0
    %355 = vmatprep.mubr.bf16.mxu0 0
    %356 = vmatmul.mubr.bf16.gmra.mrb[0].mxu0 %v255
    %v357 = vpop.f32.mrb[0].mxu0
    %v358 = vadd.f32 0.0, %v357
    %v359 = vpop.f32.mrb[0].mxu0
    %v360 = vpop.f32.mrb[0].mxu0
    %v361 = vadd.f32 0.0, %v360
    %v362 = vpop.f32.mrb[0].mxu0
    %363 = vmatprep.mubr.bf16.mxu0 0
    %364 = vmatmul.mubr.bf16.gmra.mrb[0].mxu0 %v258
    %v365 = vpop.f32.mrb[0].mxu0
    %v366 = vadd.f32 0.0, %v365
    %v367 = vpop.f32.mrb[0].mxu0
    %v368 = vpop.f32.mrb[0].mxu0
    %v369 = vpop.f32.mrb[0].mxu0
    %370 = vdwg.mxu0
    %v372 = vunpack.c.l.b16 %v102
    %v373 = vpack.c.b16 %v372, %v372
    %v374 = vsel %vm232, %v140, 0
    %v376 = vsel %vm232, %v141, 0
    %v378 = vsel %vm232, %v142, 0
    %v380 = vsel %vm232, %v143, 0
    %v382 = vsel %vm232, %v144, 0
    %v384 = vsel %vm232, %v145, 0
    %v386 = vsel %vm232, %v146, 0
    %v388 = vsel %vm232, %v147, 0
    %v391 = vsel %vm232, %v373, 0
    %v394 = vand.u32 %v103, %v263
    %396 = vmatprep.subr.bf16.mxu0 0
    %397 = vmatpush1.bf16.msra.mxu0 %v394
    %398 = vmatprep.subr.bf16.mxu0 0
    %399 = vmatpush1.bf16.msra.mxu0 0
    %400 = vmatprep.subr.bf16.mxu0 0
    %401 = vmatpush1.bf16.msra.mxu0 0
    %402 = vmatprep.subr.bf16.mxu0 0
    %403 = vmatpush1.bf16.msra.mxu0 0
    %404 = vmatprep.subr.bf16.mxu0 0
    %405 = vmatpush1.bf16.msra.mxu0 0
    %406 = vmatprep.subr.bf16.mxu0 0
    %407 = vmatpush1.bf16.msra.mxu0 0
    %408 = vmatprep.subr.bf16.mxu0 0
    %409 = vmatpush1.bf16.msra.mxu0 0
    %410 = vmatprep.subr.bf16.mxu0 0
    %411 = vmatpush1.bf16.msra.mxu0 0
    %412 = vmatprep.subr.bf16.mxu0 0
    %413 = vmatpush1.bf16.msra.mxu0 0
    %414 = vmatprep.subr.bf16.mxu0 0
    %415 = vmatpush1.bf16.msra.mxu0 0
    %416 = vmatprep.subr.bf16.mxu0 0
    %417 = vmatpush1.bf16.msra.mxu0 0
    %418 = vmatprep.subr.bf16.mxu0 0
    %419 = vmatpush1.bf16.msra.mxu0 0
    %420 = vmatprep.subr.bf16.mxu0 0
    %421 = vmatpush1.bf16.msra.mxu0 0
    %422 = vmatprep.subr.bf16.mxu0 0
    %423 = vmatpush1.bf16.msra.mxu0 0
    %424 = vmatprep.subr.bf16.mxu0 0
    %425 = vmatpush1.bf16.msra.mxu0 0
    %426 = vmatprep.subr.bf16.mxu0 0
    %427 = vmatpush1.bf16.msra.mxu0 0
    %428 = vmatprep.mubr.bf16.mxu0 0
    %429 = vmatmul.mubr.bf16.gmra.mrb[0].mxu0 %v374
    %v430 = vpop.f32.mrb[0].mxu0
    %v431 = vadd.f32 %v302, %v430
    %v432 = vpop.f32.mrb[0].mxu0
    %v433 = vpop.f32.mrb[0].mxu0
    %v434 = vadd.f32 %v305, %v433
    %v435 = vpop.f32.mrb[0].mxu0
    %436 = vmatprep.mubr.bf16.mxu0 0
    %437 = vmatmul.mubr.bf16.gmra.mrb[0].mxu0 %v376
    %v438 = vpop.f32.mrb[0].mxu0
    %v439 = vadd.f32 %v310, %v438
    %v440 = vpop.f32.mrb[0].mxu0
    %v441 = vpop.f32.mrb[0].mxu0
    %v442 = vadd.f32 %v313, %v441
    %v443 = vpop.f32.mrb[0].mxu0
    %444 = vmatprep.mubr.bf16.mxu0 0
    %445 = vmatmul.mubr.bf16.gmra.mrb[0].mxu0 %v378
    %v446 = vpop.f32.mrb[0].mxu0
    %v447 = vadd.f32 %v318, %v446
    %v448 = vpop.f32.mrb[0].mxu0
    %v449 = vpop.f32.mrb[0].mxu0
    %v450 = vadd.f32 %v321, %v449
    %v451 = vpop.f32.mrb[0].mxu0
    %452 = vmatprep.mubr.bf16.mxu0 0
    %453 = vmatmul.mubr.bf16.gmra.mrb[0].mxu0 %v380
    %v454 = vpop.f32.mrb[0].mxu0
    %v455 = vadd.f32 %v326, %v454
    %v456 = vpop.f32.mrb[0].mxu0
    %v457 = vpop.f32.mrb[0].mxu0
    %v458 = vadd.f32 %v329, %v457
    %v459 = vpop.f32.mrb[0].mxu0
    %460 = vmatprep.mubr.bf16.mxu0 0
    %461 = vmatmul.mubr.bf16.gmra.mrb[0].mxu0 %v382
    %v462 = vpop.f32.mrb[0].mxu0
    %v463 = vadd.f32 %v334, %v462
    %v464 = vpop.f32.mrb[0].mxu0
    %v465 = vpop.f32.mrb[0].mxu0
    %v466 = vadd.f32 %v337, %v465
    %v467 = vpop.f32.mrb[0].mxu0
    %468 = vmatprep.mubr.bf16.mxu0 0
    %469 = vmatmul.mubr.bf16.gmra.mrb[0].mxu0 %v384
    %v470 = vpop.f32.mrb[0].mxu0
    %v471 = vadd.f32 %v342, %v470
    %v472 = vpop.f32.mrb[0].mxu0
    %v473 = vpop.f32.mrb[0].mxu0
    %v474 = vadd.f32 %v345, %v473
    %v475 = vpop.f32.mrb[0].mxu0
    %476 = vmatprep.mubr.bf16.mxu0 0
    %477 = vmatmul.mubr.bf16.gmra.mrb[0].mxu0 %v386
    %v478 = vpop.f32.mrb[0].mxu0
    %v479 = vadd.f32 %v350, %v478
    %v480 = vpop.f32.mrb[0].mxu0
    %v481 = vpop.f32.mrb[0].mxu0
    %v482 = vadd.f32 %v353, %v481
    %v483 = vpop.f32.mrb[0].mxu0
    %484 = vmatprep.mubr.bf16.mxu0 0
    %485 = vmatmul.mubr.bf16.gmra.mrb[0].mxu0 %v388
    %v486 = vpop.f32.mrb[0].mxu0
    %v487 = vadd.f32 %v358, %v486
    %v488 = vpop.f32.mrb[0].mxu0
    %v489 = vpop.f32.mrb[0].mxu0
    %v490 = vadd.f32 %v361, %v489
    %v491 = vpop.f32.mrb[0].mxu0
    %492 = vmatprep.mubr.bf16.mxu0 0
    %493 = vmatmul.mubr.bf16.gmra.mrb[0].mxu0 %v391
    %v494 = vpop.f32.mrb[0].mxu0
    %v495 = vadd.f32 %v366, %v494
    %v496 = vpop.f32.mrb[0].mxu0
    %v497 = vpop.f32.mrb[0].mxu0
    %v498 = vpop.f32.mrb[0].mxu0
    %499 = vdwg.mxu0
    %v500 = vld [vmem:[%s0] sm:$0xe]
    %v501 = vld [vmem:[%s1] sm:$0x8]
    %v502 = vld [vmem:[%s1 + $0x4] sm:$0x1]
    %v504 = vunpack.c.l.b16 %v500
    %v505 = vpack.c.b16 %v124, %v504
    %vm506 = vcmask 1046528
    %v507 = vrot.slane %v505, 1
    %v508 = vrot.slane %v141, 1
    %v509 = vsel %vm506, %v507, %v508
    %v510 = vrot.slane %v142, 1
    %v511 = vsel %vm506, %v508, %v510
    %v512 = vrot.slane %v143, 1
    %v513 = vsel %vm506, %v510, %v512
    %v514 = vrot.slane %v144, 1
    %v515 = vsel %vm506, %v512, %v514
    %v516 = vrot.slane %v145, 1
    %v517 = vsel %vm506, %v514, %v516
    %v518 = vrot.slane %v146, 1
    %v519 = vsel %vm506, %v516, %v518
    %v520 = vrot.slane %v147, 1
    %v521 = vsel %vm506, %v518, %v520
    %v522 = vrot.slane %v148, 1
    %v523 = vsel %vm506, %v520, %v522
    %v526 = vunpack.c.l.b16 %v501
    %v527 = vunpack.c.l.b16 %v502
    %v528 = vpack.c.b16 %v527, %v526
    %v529 = vrot.slane %v528, 3
    %v531 = vsel %vm232, %v509, 0
    %v534 = vsel %vm232, %v511, 0
    %v537 = vsel %vm232, %v513, 0
    %v540 = vsel %vm232, %v515, 0
    %v543 = vsel %vm232, %v517, 0
    %v546 = vsel %vm232, %v519, 0
    %v549 = vsel %vm232, %v521, 0
    %v552 = vsel %vm232, %v523, 0
    %v555 = vsel %vm232, %v522, 0
    %v558 = vand.u32 %v529, %v263
    %560 = vmatprep.subr.bf16.mxu0 0
    %561 = vmatpush1.bf16.msra.mxu0 %v558
    %562 = vmatprep.subr.bf16.mxu0 0
    %563 = vmatpush1.bf16.msra.mxu0 0
    %564 = vmatprep.subr.bf16.mxu0 0
    %565 = vmatpush1.bf16.msra.mxu0 0
    %566 = vmatprep.subr.bf16.mxu0 0
    %567 = vmatpush1.bf16.msra.mxu0 0
    %568 = vmatprep.subr.bf16.mxu0 0
    %569 = vmatpush1.bf16.msra.mxu0 0
    %570 = vmatprep.subr.bf16.mxu0 0
    %571 = vmatpush1.bf16.msra.mxu0 0
    %572 = vmatprep.subr.bf16.mxu0 0
    %573 = vmatpush1.bf16.msra.mxu0 0
    %574 = vmatprep.subr.bf16.mxu0 0
    %575 = vmatpush1.bf16.msra.mxu0 0
    %576 = vmatprep.subr.bf16.mxu0 0
    %577 = vmatpush1.bf16.msra.mxu0 0
    %578 = vmatprep.subr.bf16.mxu0 0
    %579 = vmatpush1.bf16.msra.mxu0 0
    %580 = vmatprep.subr.bf16.mxu0 0
    %581 = vmatpush1.bf16.msra.mxu0 0
    %582 = vmatprep.subr.bf16.mxu0 0
    %583 = vmatpush1.bf16.msra.mxu0 0
    %584 = vmatprep.subr.bf16.mxu0 0
    %585 = vmatpush1.bf16.msra.mxu0 0
    %586 = vmatprep.subr.bf16.mxu0 0
    %587 = vmatpush1.bf16.msra.mxu0 0
    %588 = vmatprep.subr.bf16.mxu0 0
    %589 = vmatpush1.bf16.msra.mxu0 0
    %590 = vmatprep.subr.bf16.mxu0 0
    %591 = vmatpush1.bf16.msra.mxu0 0
    %592 = vmatprep.mubr.bf16.mxu0 0
    %593 = vmatmul.mubr.bf16.gmra.mrb[0].mxu0 %v531
    %v594 = vpop.f32.mrb[0].mxu0
    %v595 = vadd.f32 0.0, %v594
    %v596 = vpop.f32.mrb[0].mxu0
    %v597 = vpop.f32.mrb[0].mxu0
    %v598 = vadd.f32 0.0, %v597
    %v599 = vpop.f32.mrb[0].mxu0
    %600 = vmatprep.mubr.bf16.mxu0 0
    %601 = vmatmul.mubr.bf16.gmra.mrb[0].mxu0 %v534
    %v602 = vpop.f32.mrb[0].mxu0
    %v603 = vadd.f32 0.0, %v602
    %v604 = vpop.f32.mrb[0].mxu0
    %v605 = vpop.f32.mrb[0].mxu0
    %v606 = vadd.f32 0.0, %v605
    %v607 = vpop.f32.mrb[0].mxu0
    %608 = vmatprep.mubr.bf16.mxu0 0
    %609 = vmatmul.mubr.bf16.gmra.mrb[0].mxu0 %v537
    %v610 = vpop.f32.mrb[0].mxu0
    %v611 = vadd.f32 0.0, %v610
    %v612 = vpop.f32.mrb[0].mxu0
    %v613 = vpop.f32.mrb[0].mxu0
    %v614 = vadd.f32 0.0, %v613
    %v615 = vpop.f32.mrb[0].mxu0
    %616 = vmatprep.mubr.bf16.mxu0 0
    %617 = vmatmul.mubr.bf16.gmra.mrb[0].mxu0 %v540
    %v618 = vpop.f32.mrb[0].mxu0
    %v619 = vadd.f32 0.0, %v618
    %v620 = vpop.f32.mrb[0].mxu0
    %v621 = vpop.f32.mrb[0].mxu0
    %v622 = vadd.f32 0.0, %v621
    %v623 = vpop.f32.mrb[0].mxu0
    %624 = vmatprep.mubr.bf16.mxu0 0
    %625 = vmatmul.mubr.bf16.gmra.mrb[0].mxu0 %v543
    %v626 = vpop.f32.mrb[0].mxu0
    %v627 = vadd.f32 0.0, %v626
    %v628 = vpop.f32.mrb[0].mxu0
    %v629 = vpop.f32.mrb[0].mxu0
    %v630 = vadd.f32 0.0, %v629
    %v631 = vpop.f32.mrb[0].mxu0
    %632 = vmatprep.mubr.bf16.mxu0 0
    %633 = vmatmul.mubr.bf16.gmra.mrb[0].mxu0 %v546
    %v634 = vpop.f32.mrb[0].mxu0
    %v635 = vadd.f32 0.0, %v634
    %v636 = vpop.f32.mrb[0].mxu0
    %v637 = vpop.f32.mrb[0].mxu0
    %v638 = vadd.f32 0.0, %v637
    %v639 = vpop.f32.mrb[0].mxu0
    %640 = vmatprep.mubr.bf16.mxu0 0
    %641 = vmatmul.mubr.bf16.gmra.mrb[0].mxu0 %v549
    %v642 = vpop.f32.mrb[0].mxu0
    %v643 = vadd.f32 0.0, %v642
    %v644 = vpop.f32.mrb[0].mxu0
    %v645 = vpop.f32.mrb[0].mxu0
    %v646 = vadd.f32 0.0, %v645
    %v647 = vpop.f32.mrb[0].mxu0
    %648 = vmatprep.mubr.bf16.mxu0 0
    %649 = vmatmul.mubr.bf16.gmra.mrb[0].mxu0 %v552
    %v650 = vpop.f32.mrb[0].mxu0
    %v651 = vadd.f32 0.0, %v650
    %v652 = vpop.f32.mrb[0].mxu0
    %v653 = vpop.f32.mrb[0].mxu0
    %v654 = vadd.f32 0.0, %v653
    %v655 = vpop.f32.mrb[0].mxu0
    %656 = vmatprep.mubr.bf16.mxu0 0
    %657 = vmatmul.mubr.bf16.gmra.mrb[0].mxu0 %v555
    %v658 = vpop.f32.mrb[0].mxu0
    %v659 = vadd.f32 0.0, %v658
    %v660 = vpop.f32.mrb[0].mxu0
    %v661 = vpop.f32.mrb[0].mxu0
    %v662 = vpop.f32.mrb[0].mxu0
    %663 = vdwg.mxu0
    %v664 = vadd.f32 %v431, %v595
    %v665 = vadd.f32 %v434, %v598
    %v666 = vadd.f32 %v439, %v603
    %v667 = vadd.f32 %v442, %v606
    %v668 = vadd.f32 %v447, %v611
    %v669 = vadd.f32 %v450, %v614
    %v670 = vadd.f32 %v455, %v619
    %v671 = vadd.f32 %v458, %v622
    %v672 = vadd.f32 %v463, %v627
    %v673 = vadd.f32 %v466, %v630
    %v674 = vadd.f32 %v471, %v635
    %v675 = vadd.f32 %v474, %v638
    %v676 = vadd.f32 %v479, %v643
    %v677 = vadd.f32 %v482, %v646
    %v678 = vadd.f32 %v487, %v651
    %v679 = vadd.f32 %v490, %v654
    %v680 = vadd.f32 %v495, %v659
    %v681 = vld [vmem:[%s0 + $0x40] sm:$0xf]
    %v682 = vld [vmem:[%s1 + $0x4] sm:$0x3]
    %v684 = vunpack.c.l.b16 %v681
    %v685 = vpack.c.b16 %v684, %v684
    %vm686 = vsmask.f32 6400
    %v688 = vshrl.u32 %v505, 16
    %v690 = vrot.slane %v688, 1
    %v691 = vshll.u32 %v505, 16
    %v693 = vrot.slane %v691, 2
    %v694 = vor.u32 %v690, %v693
    %v695 = vrot.slane %v162, 1
    %v696 = vrot.slane %v158, 2
    %v697 = vor.u32 %v695, %v696
    %v698 = vsel %vm686, %v694, %v697
    %v699 = vrot.slane %v170, 1
    %v700 = vrot.slane %v166, 2
    %v701 = vor.u32 %v699, %v700
    %v702 = vsel %vm686, %v697, %v701
    %v703 = vrot.slane %v178, 1
    %v704 = vrot.slane %v174, 2
    %v705 = vor.u32 %v703, %v704
    %v706 = vsel %vm686, %v701, %v705
    %v707 = vrot.slane %v186, 1
    %v708 = vrot.slane %v182, 2
    %v709 = vor.u32 %v707, %v708
    %v710 = vsel %vm686, %v705, %v709
    %v711 = vrot.slane %v194, 1
    %v712 = vrot.slane %v190, 2
    %v713 = vor.u32 %v711, %v712
    %v714 = vsel %vm686, %v709, %v713
    %v715 = vrot.slane %v202, 1
    %v716 = vrot.slane %v198, 2
    %v717 = vor.u32 %v715, %v716
    %v718 = vsel %vm686, %v713, %v717
    %v719 = vrot.slane %v210, 1
    %v720 = vrot.slane %v206, 2
    %v721 = vor.u32 %v719, %v720
    %v722 = vsel %vm686, %v717, %v721
    %v724 = vshrl.u32 %v685, 16
    %v726 = vrot.slane %v724, 1
    %v727 = vshll.u32 %v685, 16
    %v729 = vrot.slane %v727, 2
    %v730 = vor.u32 %v726, %v729
    %v731 = vsel %vm686, %v721, %v730
    %v733 = vunpack.c.l.b16 %v682
    %v734 = vpack.c.b16 %v733, %v733
    %v736 = vshrl.u32 %v734, 16
    %v738 = vshll.u32 %v734, 16
    %v740 = vrot.slane %v738, 1
    %v741 = vor.u32 %v736, %v740
    %v743 = vsel %vm232, %v698, 0
    %v746 = vsel %vm232, %v702, 0
    %v749 = vsel %vm232, %v706, 0
    %v752 = vsel %vm232, %v710, 0
    %v755 = vsel %vm232, %v714, 0
    %v758 = vsel %vm232, %v718, 0
    %v761 = vsel %vm232, %v722, 0
    %v764 = vsel %vm232, %v731, 0
    %v767 = vsel %vm232, %v730, 0
    %v770 = vand.u32 %v741, %v263
    %772 = vmatprep.subr.bf16.mxu0 0
    %773 = vmatpush1.bf16.msra.mxu0 %v770
    %774 = vmatprep.subr.bf16.mxu0 0
    %775 = vmatpush1.bf16.msra.mxu0 0
    %776 = vmatprep.subr.bf16.mxu0 0
    %777 = vmatpush1.bf16.msra.mxu0 0
    %778 = vmatprep.subr.bf16.mxu0 0
    %779 = vmatpush1.bf16.msra.mxu0 0
    %780 = vmatprep.subr.bf16.mxu0 0
    %781 = vmatpush1.bf16.msra.mxu0 0
    %782 = vmatprep.subr.bf16.mxu0 0
    %783 = vmatpush1.bf16.msra.mxu0 0
    %784 = vmatprep.subr.bf16.mxu0 0
    %785 = vmatpush1.bf16.msra.mxu0 0
    %786 = vmatprep.subr.bf16.mxu0 0
    %787 = vmatpush1.bf16.msra.mxu0 0
    %788 = vmatprep.subr.bf16.mxu0 0
    %789 = vmatpush1.bf16.msra.mxu0 0
    %790 = vmatprep.subr.bf16.mxu0 0
    %791 = vmatpush1.bf16.msra.mxu0 0
    %792 = vmatprep.subr.bf16.mxu0 0
    %793 = vmatpush1.bf16.msra.mxu0 0
    %794 = vmatprep.subr.bf16.mxu0 0
    %795 = vmatpush1.bf16.msra.mxu0 0
    %796 = vmatprep.subr.bf16.mxu0 0
    %797 = vmatpush1.bf16.msra.mxu0 0
    %798 = vmatprep.subr.bf16.mxu0 0
    %799 = vmatpush1.bf16.msra.mxu0 0
    %800 = vmatprep.subr.bf16.mxu0 0
    %801 = vmatpush1.bf16.msra.mxu0 0
    %802 = vmatprep.subr.bf16.mxu0 0
    %803 = vmatpush1.bf16.msra.mxu0 0
    %804 = vmatprep.mubr.bf16.mxu0 0
    %805 = vmatmul.mubr.bf16.gmra.mrb[0].mxu0 %v743
    %v806 = vpop.f32.mrb[0].mxu0
    %v807 = vadd.f32 0.0, %v806
    %v808 = vpop.f32.mrb[0].mxu0
    %v809 = vpop.f32.mrb[0].mxu0
    %v810 = vadd.f32 0.0, %v809
    %v811 = vpop.f32.mrb[0].mxu0
    %812 = vmatprep.mubr.bf16.mxu0 0
    %813 = vmatmul.mubr.bf16.gmra.mrb[0].mxu0 %v746
    %v814 = vpop.f32.mrb[0].mxu0
    %v815 = vadd.f32 0.0, %v814
    %v816 = vpop.f32.mrb[0].mxu0
    %v817 = vpop.f32.mrb[0].mxu0
    %v818 = vadd.f32 0.0, %v817
    %v819 = vpop.f32.mrb[0].mxu0
    %820 = vmatprep.mubr.bf16.mxu0 0
    %821 = vmatmul.mubr.bf16.gmra.mrb[0].mxu0 %v749
    %v822 = vpop.f32.mrb[0].mxu0
    %v823 = vadd.f32 0.0, %v822
    %v824 = vpop.f32.mrb[0].mxu0
    %v825 = vpop.f32.mrb[0].mxu0
    %v826 = vadd.f32 0.0, %v825
    %v827 = vpop.f32.mrb[0].mxu0
    %828 = vmatprep.mubr.bf16.mxu0 0
    %829 = vmatmul.mubr.bf16.gmra.mrb[0].mxu0 %v752
    %v830 = vpop.f32.mrb[0].mxu0
    %v831 = vadd.f32 0.0, %v830
    %v832 = vpop.f32.mrb[0].mxu0
    %v833 = vpop.f32.mrb[0].mxu0
    %v834 = vadd.f32 0.0, %v833
    %v835 = vpop.f32.mrb[0].mxu0
    %836 = vmatprep.mubr.bf16.mxu0 0
    %837 = vmatmul.mubr.bf16.gmra.mrb[0].mxu0 %v755
    %v838 = vpop.f32.mrb[0].mxu0
    %v839 = vadd.f32 0.0, %v838
    %v840 = vpop.f32.mrb[0].mxu0
    %v841 = vpop.f32.mrb[0].mxu0
    %v842 = vadd.f32 0.0, %v841
    %v843 = vpop.f32.mrb[0].mxu0
    %844 = vmatprep.mubr.bf16.mxu0 0
    %845 = vmatmul.mubr.bf16.gmra.mrb[0].mxu0 %v758
    %v846 = vpop.f32.mrb[0].mxu0
    %v847 = vadd.f32 0.0, %v846
    %v848 = vpop.f32.mrb[0].mxu0
    %v849 = vpop.f32.mrb[0].mxu0
    %v850 = vadd.f32 0.0, %v849
    %v851 = vpop.f32.mrb[0].mxu0
    %852 = vmatprep.mubr.bf16.mxu0 0
    %853 = vmatmul.mubr.bf16.gmra.mrb[0].mxu0 %v761
    %v854 = vpop.f32.mrb[0].mxu0
    %v855 = vadd.f32 0.0, %v854
    %v856 = vpop.f32.mrb[0].mxu0
    %v857 = vpop.f32.mrb[0].mxu0
    %v858 = vadd.f32 0.0, %v857
    %v859 = vpop.f32.mrb[0].mxu0
    %860 = vmatprep.mubr.bf16.mxu0 0
    %861 = vmatmul.mubr.bf16.gmra.mrb[0].mxu0 %v764
    %v862 = vpop.f32.mrb[0].mxu0
    %v863 = vadd.f32 0.0, %v862
    %v864 = vpop.f32.mrb[0].mxu0
    %v865 = vpop.f32.mrb[0].mxu0
    %v866 = vadd.f32 0.0, %v865
    %v867 = vpop.f32.mrb[0].mxu0
    %868 = vmatprep.mubr.bf16.mxu0 0
    %869 = vmatmul.mubr.bf16.gmra.mrb[0].mxu0 %v767
    %v870 = vpop.f32.mrb[0].mxu0
    %v871 = vadd.f32 0.0, %v870
    %v872 = vpop.f32.mrb[0].mxu0
    %v873 = vpop.f32.mrb[0].mxu0
    %v874 = vpop.f32.mrb[0].mxu0
    %875 = vdwg.mxu0
    %v876 = vadd.f32 %v664, %v807
    %v877 = vadd.f32 %v665, %v810
    %v878 = vadd.f32 %v666, %v815
    %v879 = vadd.f32 %v667, %v818
    %v880 = vadd.f32 %v668, %v823
    %v881 = vadd.f32 %v669, %v826
    %v882 = vadd.f32 %v670, %v831
    %v883 = vadd.f32 %v671, %v834
    %v884 = vadd.f32 %v672, %v839
    %v885 = vadd.f32 %v673, %v842
    %v886 = vadd.f32 %v674, %v847
    %v887 = vadd.f32 %v675, %v850
    %v888 = vadd.f32 %v676, %v855
    %v889 = vadd.f32 %v677, %v858
    %v890 = vadd.f32 %v678, %v863
    %v891 = vadd.f32 %v679, %v866
    %v892 = vadd.f32 %v680, %v871
    %v893 = vld [vmem:[%s0] sm:$0xc]
    %v894 = vld [vmem:[%s1 + $0x4] sm:$0xc]
    %v896 = vunpack.c.l.b16 %v893
    %v897 = vpack.c.b16 %v124, %v896
    %vm898 = vcmask 1045504
    %v899 = vrot.slane %v897, 2
    %v900 = vrot.slane %v141, 2
    %v901 = vsel %vm898, %v899, %v900
    %v902 = vrot.slane %v142, 2
    %v903 = vsel %vm898, %v900, %v902
    %v904 = vrot.slane %v143, 2
    %v905 = vsel %vm898, %v902, %v904
    %v906 = vrot.slane %v144, 2
    %v907 = vsel %vm898, %v904, %v906
    %v908 = vrot.slane %v145, 2
    %v909 = vsel %vm898, %v906, %v908
    %v910 = vrot.slane %v146, 2
    %v911 = vsel %vm898, %v908, %v910
    %v912 = vrot.slane %v147, 2
    %v913 = vsel %vm898, %v910, %v912
    %v914 = vrot.slane %v685, 2
    %v915 = vsel %vm898, %v912, %v914
    %v917 = vunpack.c.l.b16 %v894
    %v918 = vpack.c.b16 %v917, %v917
    %v919 = vrot.slane %v918, 2
    %v921 = vsel %vm232, %v901, 0
    %v924 = vsel %vm232, %v903, 0
    %v927 = vsel %vm232, %v905, 0
    %v930 = vsel %vm232, %v907, 0
    %v933 = vsel %vm232, %v909, 0
    %v936 = vsel %vm232, %v911, 0
    %v939 = vsel %vm232, %v913, 0
    %v942 = vsel %vm232, %v915, 0
    %v945 = vsel %vm232, %v914, 0
    %v948 = vand.u32 %v919, %v263
    %950 = vmatprep.subr.bf16.mxu0 0
    %951 = vmatpush1.bf16.msra.mxu0 %v948
    %952 = vmatprep.subr.bf16.mxu0 0
    %953 = vmatpush1.bf16.msra.mxu0 0
    %954 = vmatprep.subr.bf16.mxu0 0
    %955 = vmatpush1.bf16.msra.mxu0 0
    %956 = vmatprep.subr.bf16.mxu0 0
    %957 = vmatpush1.bf16.msra.mxu0 0
    %958 = vmatprep.subr.bf16.mxu0 0
    %959 = vmatpush1.bf16.msra.mxu0 0
    %960 = vmatprep.subr.bf16.mxu0 0
    %961 = vmatpush1.bf16.msra.mxu0 0
    %962 = vmatprep.subr.bf16.mxu0 0
    %963 = vmatpush1.bf16.msra.mxu0 0
    %964 = vmatprep.subr.bf16.mxu0 0
    %965 = vmatpush1.bf16.msra.mxu0 0
    %966 = vmatprep.subr.bf16.mxu0 0
    %967 = vmatpush1.bf16.msra.mxu0 0
    %968 = vmatprep.subr.bf16.mxu0 0
    %969 = vmatpush1.bf16.msra.mxu0 0
    %970 = vmatprep.subr.bf16.mxu0 0
    %971 = vmatpush1.bf16.msra.mxu0 0
    %972 = vmatprep.subr.bf16.mxu0 0
    %973 = vmatpush1.bf16.msra.mxu0 0
    %974 = vmatprep.subr.bf16.mxu0 0
    %975 = vmatpush1.bf16.msra.mxu0 0
    %976 = vmatprep.subr.bf16.mxu0 0
    %977 = vmatpush1.bf16.msra.mxu0 0
    %978 = vmatprep.subr.bf16.mxu0 0
    %979 = vmatpush1.bf16.msra.mxu0 0
    %980 = vmatprep.subr.bf16.mxu0 0
    %981 = vmatpush1.bf16.msra.mxu0 0
    %982 = vmatprep.mubr.bf16.mxu0 0
    %983 = vmatmul.mubr.bf16.gmra.mrb[0].mxu0 %v921
    %v984 = vpop.f32.mrb[0].mxu0
    %v985 = vadd.f32 0.0, %v984
    %v986 = vpop.f32.mrb[0].mxu0
    %v987 = vpop.f32.mrb[0].mxu0
    %v988 = vadd.f32 0.0, %v987
    %v989 = vpop.f32.mrb[0].mxu0
    %990 = vmatprep.mubr.bf16.mxu0 0
    %991 = vmatmul.mubr.bf16.gmra.mrb[0].mxu0 %v924
    %v992 = vpop.f32.mrb[0].mxu0
    %v993 = vadd.f32 0.0, %v992
    %v994 = vpop.f32.mrb[0].mxu0
    %v995 = vpop.f32.mrb[0].mxu0
    %v996 = vadd.f32 0.0, %v995
    %v997 = vpop.f32.mrb[0].mxu0
    %998 = vmatprep.mubr.bf16.mxu0 0
    %999 = vmatmul.mubr.bf16.gmra.mrb[0].mxu0 %v927
    %v1000 = vpop.f32.mrb[0].mxu0
    %v1001 = vadd.f32 0.0, %v1000
    %v1002 = vpop.f32.mrb[0].mxu0
    %v1003 = vpop.f32.mrb[0].mxu0
    %v1004 = vadd.f32 0.0, %v1003
    %v1005 = vpop.f32.mrb[0].mxu0
    %1006 = vmatprep.mubr.bf16.mxu0 0
    %1007 = vmatmul.mubr.bf16.gmra.mrb[0].mxu0 %v930
    %v1008 = vpop.f32.mrb[0].mxu0
    %v1009 = vadd.f32 0.0, %v1008
    %v1010 = vpop.f32.mrb[0].mxu0
    %v1011 = vpop.f32.mrb[0].mxu0
    %v1012 = vadd.f32 0.0, %v1011
    %v1013 = vpop.f32.mrb[0].mxu0
    %1014 = vmatprep.mubr.bf16.mxu0 0
    %1015 = vmatmul.mubr.bf16.gmra.mrb[0].mxu0 %v933
    %v1016 = vpop.f32.mrb[0].mxu0
    %v1017 = vadd.f32 0.0, %v1016
    %v1018 = vpop.f32.mrb[0].mxu0
    %v1019 = vpop.f32.mrb[0].mxu0
    %v1020 = vadd.f32 0.0, %v1019
    %v1021 = vpop.f32.mrb[0].mxu0
    %1022 = vmatprep.mubr.bf16.mxu0 0
    %1023 = vmatmul.mubr.bf16.gmra.mrb[0].mxu0 %v936
    %v1024 = vpop.f32.mrb[0].mxu0
    %v1025 = vadd.f32 0.0, %v1024
    %v1026 = vpop.f32.mrb[0].mxu0
    %v1027 = vpop.f32.mrb[0].mxu0
    %v1028 = vadd.f32 0.0, %v1027
    %v1029 = vpop.f32.mrb[0].mxu0
    %1030 = vmatprep.mubr.bf16.mxu0 0
    %1031 = vmatmul.mubr.bf16.gmra.mrb[0].mxu0 %v939
    %v1032 = vpop.f32.mrb[0].mxu0
    %v1033 = vadd.f32 0.0, %v1032
    %v1034 = vpop.f32.mrb[0].mxu0
    %v1035 = vpop.f32.mrb[0].mxu0
    %v1036 = vadd.f32 0.0, %v1035
    %v1037 = vpop.f32.mrb[0].mxu0
    %1038 = vmatprep.mubr.bf16.mxu0 0
    %1039 = vmatmul.mubr.bf16.gmra.mrb[0].mxu0 %v942
    %v1040 = vpop.f32.mrb[0].mxu0
    %v1041 = vadd.f32 0.0, %v1040
    %v1042 = vpop.f32.mrb[0].mxu0
    %v1043 = vpop.f32.mrb[0].mxu0
    %v1044 = vadd.f32 0.0, %v1043
    %v1045 = vpop.f32.mrb[0].mxu0
    %1046 = vmatprep.mubr.bf16.mxu0 0
    %1047 = vmatmul.mubr.bf16.gmra.mrb[0].mxu0 %v945
    %v1048 = vpop.f32.mrb[0].mxu0
    %v1049 = vadd.f32 0.0, %v1048
    %v1050 = vpop.f32.mrb[0].mxu0
    %v1051 = vpop.f32.mrb[0].mxu0
    %v1052 = vpop.f32.mrb[0].mxu0
    %1053 = vdwg.mxu0
    %v1054 = vadd.f32 %v876, %v985
    %v1055 = vadd.f32 %v877, %v988
    %v1056 = vadd.f32 %v878, %v993
    %v1057 = vadd.f32 %v879, %v996
    %v1058 = vadd.f32 %v880, %v1001
    %v1059 = vadd.f32 %v881, %v1004
    %v1060 = vadd.f32 %v882, %v1009
    %v1061 = vadd.f32 %v883, %v1012
    %v1062 = vadd.f32 %v884, %v1017
    %v1063 = vadd.f32 %v885, %v1020
    %v1064 = vadd.f32 %v886, %v1025
    %v1065 = vadd.f32 %v887, %v1028
    %v1066 = vadd.f32 %v888, %v1033
    %v1067 = vadd.f32 %v889, %v1036
    %v1068 = vadd.f32 %v890, %v1041
    %v1069 = vadd.f32 %v891, %v1044
    %v1070 = vadd.f32 %v892, %v1049
    %v1071 = vld [vmem:[%s2] sm:$0x1]
    %v1073 = vlaneseq
    %v1074 = vshrl.u32 %v1073, 7
    %v1075 = vsub.s32 0, %v1074
    %v1076 = vrot.slane %v1071, %v1075
    %v1078 = vmul.f32 %v1054, %v1076
    %v1079 = vmul.f32 %v1055, %v1076
    %v1080 = vmul.f32 %v1056, %v1076
    %v1081 = vmul.f32 %v1057, %v1076
    %v1082 = vmul.f32 %v1058, %v1076
    %v1083 = vmul.f32 %v1059, %v1076
    %v1084 = vmul.f32 %v1060, %v1076
    %v1085 = vmul.f32 %v1061, %v1076
    %v1086 = vmul.f32 %v1062, %v1076
    %v1087 = vmul.f32 %v1063, %v1076
    %v1088 = vmul.f32 %v1064, %v1076
    %v1089 = vmul.f32 %v1065, %v1076
    %v1090 = vmul.f32 %v1066, %v1076
    %v1091 = vmul.f32 %v1067, %v1076
    %v1092 = vmul.f32 %v1068, %v1076
    %v1093 = vmul.f32 %v1069, %v1076
    %v1094 = vmul.f32 %v1070, %v1076
    %v1095 = vld [vmem:[%s3] sm:$0x1]
    %v1097 = vlaneseq
    %v1098 = vshrl.u32 %v1097, 7
    %v1099 = vsub.s32 0, %v1098
    %v1100 = vrot.slane %v1095, %v1099
    %v1102 = vadd.f32 %v1078, %v1100
    %v1103 = vadd.f32 %v1079, %v1100
    %v1104 = vadd.f32 %v1080, %v1100
    %v1105 = vadd.f32 %v1081, %v1100
    %v1106 = vadd.f32 %v1082, %v1100
    %v1107 = vadd.f32 %v1083, %v1100
    %v1108 = vadd.f32 %v1084, %v1100
    %v1109 = vadd.f32 %v1085, %v1100
    %v1110 = vadd.f32 %v1086, %v1100
    %v1111 = vadd.f32 %v1087, %v1100
    %v1112 = vadd.f32 %v1088, %v1100
    %v1113 = vadd.f32 %v1089, %v1100
    %v1114 = vadd.f32 %v1090, %v1100
    %v1115 = vadd.f32 %v1091, %v1100
    %v1116 = vadd.f32 %v1092, %v1100
    %v1117 = vadd.f32 %v1093, %v1100
    %v1118 = vadd.f32 %v1094, %v1100
    %v1119 = vmax.f32 %v1102, 0.0
    %v1120 = vmax.f32 %v1103, 0.0
    %v1121 = vmax.f32 %v1104, 0.0
    %v1122 = vmax.f32 %v1105, 0.0
    %v1123 = vmax.f32 %v1106, 0.0
    %v1124 = vmax.f32 %v1107, 0.0
    %v1125 = vmax.f32 %v1108, 0.0
    %v1126 = vmax.f32 %v1109, 0.0
    %v1127 = vmax.f32 %v1110, 0.0
    %v1128 = vmax.f32 %v1111, 0.0
    %v1129 = vmax.f32 %v1112, 0.0
    %v1130 = vmax.f32 %v1113, 0.0
    %v1131 = vmax.f32 %v1114, 0.0
    %v1132 = vmax.f32 %v1115, 0.0
    %v1133 = vmax.f32 %v1116, 0.0
    %v1134 = vmax.f32 %v1117, 0.0
    %v1135 = vmax.f32 %v1118, 0.0
    %vm1136 = vcmask 130048
    %1137 = vst.msk [vmem:[#allocation2] sm:$0xff] %vm1136, %v1119
    %1138 = vst.msk [vmem:[#allocation2 + $0x8] sm:$0xff] %vm1136, %v1120
    %1139 = vst.msk [vmem:[#allocation2 + $0x10] sm:$0xff] %vm1136, %v1121
    %1140 = vst.msk [vmem:[#allocation2 + $0x18] sm:$0xff] %vm1136, %v1122
    %1141 = vst.msk [vmem:[#allocation2 + $0x20] sm:$0xff] %vm1136, %v1123
    %1142 = vst.msk [vmem:[#allocation2 + $0x28] sm:$0xff] %vm1136, %v1124
    %1143 = vst.msk [vmem:[#allocation2 + $0x30] sm:$0xff] %vm1136, %v1125
    %1144 = vst.msk [vmem:[#allocation2 + $0x38] sm:$0xff] %vm1136, %v1126
    %1145 = vst.msk [vmem:[#allocation2 + $0x40] sm:$0xff] %vm1136, %v1127
    %1146 = vst.msk [vmem:[#allocation2 + $0x48] sm:$0xff] %vm1136, %v1128
    %1147 = vst.msk [vmem:[#allocation2 + $0x50] sm:$0xff] %vm1136, %v1129
    %1148 = vst.msk [vmem:[#allocation2 + $0x58] sm:$0xff] %vm1136, %v1130
    %1149 = vst.msk [vmem:[#allocation2 + $0x60] sm:$0xff] %vm1136, %v1131
    %1150 = vst.msk [vmem:[#allocation2 + $0x68] sm:$0xff] %vm1136, %v1132
    %1151 = vst.msk [vmem:[#allocation2 + $0x70] sm:$0xff] %vm1136, %v1133
    %1152 = vst.msk [vmem:[#allocation2 + $0x78] sm:$0xff] %vm1136, %v1134
    %1153 = vst.msk [vmem:[#allocation2 + $0x80] sm:$0xf] %vm66, %v1135
    %v1154 = vld [vmem:[#allocation2] ss:$2 sm:$0xff]
    %s1155 = scalar_lea.vmem [#allocation2], 16
    %v1156 = vld [vmem:[%s1155] ss:$2 sm:$0xff]
    %s1157 = scalar_lea.vmem [#allocation2], 32
    %v1158 = vld [vmem:[%s1157] ss:$2 sm:$0xff]
    %s1159 = scalar_lea.vmem [#allocation2], 48
    %v1160 = vld [vmem:[%s1159] ss:$2 sm:$0xff]
    %s1161 = scalar_lea.vmem [#allocation2], 1
    %v1162 = vld [vmem:[%s1161] ss:$2 sm:$0xff]
    %s1163 = scalar_lea.vmem [#allocation2], 17
    %v1164 = vld [vmem:[%s1163] ss:$2 sm:$0xff]
    %s1165 = scalar_lea.vmem [#allocation2], 33
    %v1166 = vld [vmem:[%s1165] ss:$2 sm:$0xff]
    %s1167 = scalar_lea.vmem [#allocation2], 49
    %v1168 = vld [vmem:[%s1167] ss:$2 sm:$0xff]
    %v1169 = vmax.f32 %v1154, %v1162
    %v1170 = vmax.f32 %v1156, %v1164
    %v1171 = vmax.f32 %v1158, %v1166
    %v1172 = vmax.f32 %v1160, %v1168
    %v1173 = vpack.c.bf16 %v1170, %v1169
    %v1174 = vpack.c.bf16 %v1172, %v1171
    %v1177 = vunpack.c.l.b16 %v1173
    %v1178 = vunpack.c.h.b16 %v1173
    %v1179 = vunpack.c.l.b16 %v1174
    %v1180 = vunpack.c.h.b16 %v1174
    %v1181 = vpack.c.b16 %v1177, %v1177
    %v1182 = vpack.c.b16 %v1178, %v1178
    %v1183 = vpack.c.b16 %v1179, %v1179
    %v1184 = vpack.c.b16 %v1180, %v1180
    %vm1185 = vcmask 1040384
    %vm1186 = vcmask 1044484
    %vm1187 = vmor %vm1185, %vm1186
    %v1188 = vrot.slane %v1181, 7
    %v1189 = vrot.slane %v1188, 4
    %v1190 = vrot.slane %v1182, 7
    %v1191 = vsel %vm1187, %v1189, %v1190
    %v1192 = vrot.slane %v1190, 4
    %v1193 = vrot.slane %v1183, 7
    %v1194 = vsel %vm1187, %v1192, %v1193
    %v1195 = vrot.slane %v1193, 4
    %v1196 = vrot.slane %v1184, 7
    %v1197 = vsel %vm1187, %v1195, %v1196
    %v1198 = vrot.slane %v1196, 4
    %vm1204 = vcmask 125953
    %1205 = vst.msk [vmem:[#allocation3] sm:$0xe] %vm1204, %v1188
    %1206 = vst.msk [vmem:[#allocation3 + $0x4] sm:$0xf] %vm66, %v1191
    %1207 = vst.msk [vmem:[#allocation3 + $0x8] sm:$0xf] %vm66, %v1194
    %1208 = vst.msk [vmem:[#allocation3 + $0xc] sm:$0xf] %vm66, %v1197
    %vm1209 = vcmask 122880
    %1210 = vst.msk [vmem:[#allocation3 + $0x10] sm:$0x1] %vm1209, %v1198
    %s1211 = scalar_lea.vmem [#allocation2], 68
    %v1212 = vld [vmem:[%s1211] ss:$2 sm:$0xff]
    %s1213 = scalar_lea.vmem [#allocation2], 84
    %v1214 = vld [vmem:[%s1213] ss:$2 sm:$0xff]
    %s1215 = scalar_lea.vmem [#allocation2], 100
    %v1216 = vld [vmem:[%s1215] ss:$2 sm:$0xff]
    %s1217 = scalar_lea.vmem [#allocation2], 116
    %v1218 = vld [vmem:[%s1217] ss:$2 sm:$0xff]
    %s1219 = scalar_lea.vmem [#allocation2], 69
    %v1220 = vld [vmem:[%s1219] ss:$2 sm:$0xff]
    %s1221 = scalar_lea.vmem [#allocation2], 85
    %v1222 = vld [vmem:[%s1221] ss:$2 sm:$0xff]
    %s1223 = scalar_lea.vmem [#allocation2], 101
    %v1224 = vld [vmem:[%s1223] ss:$2 sm:$0xff]
    %s1225 = scalar_lea.vmem [#allocation2], 117
    %v1226 = vld [vmem:[%s1225] ss:$2 sm:$0xff]
    %v1227 = vmax.f32 %v1212, %v1220
    %v1228 = vmax.f32 %v1214, %v1222
    %v1229 = vmax.f32 %v1216, %v1224
    %v1230 = vmax.f32 %v1218, %v1226
    %v1231 = vpack.c.bf16 %v1228, %v1227
    %v1232 = vpack.c.bf16 %v1230, %v1229
    %v1235 = vunpack.c.l.b16 %v1231
    %v1236 = vunpack.c.h.b16 %v1231
    %v1237 = vunpack.c.l.b16 %v1232
    %v1238 = vunpack.c.h.b16 %v1232
    %v1239 = vpack.c.b16 %v1235, %v1235
    %v1240 = vpack.c.b16 %v1236, %v1236
    %v1241 = vpack.c.b16 %v1237, %v1237
    %v1242 = vpack.c.b16 %v1238, %v1238
    %vm1243 = vcmask 1042432
    %vm1244 = vcmask 1046532
    %vm1245 = vmor %vm1243, %vm1244
    %v1246 = vrot.slane %v1239, 5
    %v1247 = vrot.slane %v1246, 4
    %v1248 = vrot.slane %v1240, 5
    %v1249 = vsel %vm1245, %v1247, %v1248
    %v1250 = vrot.slane %v1248, 4
    %v1251 = vrot.slane %v1241, 5
    %v1252 = vsel %vm1245, %v1250, %v1251
    %v1253 = vrot.slane %v1251, 4
    %v1254 = vrot.slane %v1242, 5
    %v1255 = vsel %vm1245, %v1253, %v1254
    %v1256 = vrot.slane %v1254, 4
    %vm1262 = vcmask 125955
    %1263 = vst.msk [vmem:[#allocation3 + $0x10] sm:$0x8] %vm1262, %v1246
    %1264 = vst.msk [vmem:[#allocation3 + $0x14] sm:$0xf] %vm66, %v1249
    %1265 = vst.msk [vmem:[#allocation3 + $0x18] sm:$0xf] %vm66, %v1252
    %1266 = vst.msk [vmem:[#allocation3 + $0x1c] sm:$0xf] %vm66, %v1255
    %vm1267 = vcmask 124928
    %1268 = vst.msk [vmem:[#allocation3 + $0x20] sm:$0x7] %vm1267, %v1256
    %v1269 = vld [vmem:[#allocation3] sm:$0xf]
    %v1270 = vld [vmem:[#allocation3 + $0x4] sm:$0xf]
    %v1271 = vld [vmem:[#allocation3 + $0x8] sm:$0xf]
    %v1272 = vld [vmem:[#allocation3 + $0xc] sm:$0xf]
    %v1273 = vld [vmem:[#allocation3 + $0x10] sm:$0xf]
    %v1274 = vld [vmem:[#allocation3 + $0x14] sm:$0xf]
    %v1275 = vld [vmem:[#allocation3 + $0x18] sm:$0xf]
    %v1276 = vld [vmem:[#allocation3 + $0x1c] sm:$0xf]
    %v1277 = vld [vmem:[#allocation3 + $0x20] sm:$0x3]
    %v1278 = vld [vmem:[%s4] sm:$0xf]
    %v1279 = vld [vmem:[%s4 + $0x4] sm:$0xf]
    %v1280 = vld [vmem:[#allocation3 + $0x20] sm:$0x7]
    %v1281 = vld [vmem:[%s4 + $0x8] sm:$0xf]
    %v1282 = vld [vmem:[%s4 + $0xc] sm:$0xf]
    %v1292 = vunpack.c.l.b16 %v1269
    %v1293 = vunpack.c.l.b16 %v1270
    %v1294 = vunpack.c.l.b16 %v1271
    %v1295 = vunpack.c.l.b16 %v1272
    %v1296 = vunpack.c.l.b16 %v1273
    %v1297 = vunpack.c.l.b16 %v1274
    %v1298 = vunpack.c.l.b16 %v1275
    %v1299 = vunpack.c.l.b16 %v1276
    %v1300 = vunpack.c.l.b16 %v1280
    %v1301 = vpack.c.b16 %v1293, %v1292
    %v1302 = vpack.c.b16 %v1295, %v1294
    %v1303 = vpack.c.b16 %v1297, %v1296
    %v1304 = vpack.c.b16 %v1299, %v1298
    %v1305 = vpack.c.b16 %v1300, %v1300
    %v1307 = vshrl.u32 %v1301, 16
    %v1309 = vshll.u32 %v1301, 16
    %v1311 = vrot.slane %v1309, 1
    %v1312 = vor.u32 %v1307, %v1311
    %v1314 = vshll.u32 %v1302, 16
    %v1316 = vrot.slane %v1314, 1
    %v1317 = vsel %vm149, %v1312, %v1316
    %v1318 = vshrl.u32 %v1302, 16
    %v1320 = vor.u32 %v1318, %v1316
    %v1322 = vshll.u32 %v1303, 16
    %v1324 = vrot.slane %v1322, 1
    %v1325 = vsel %vm149, %v1320, %v1324
    %v1326 = vshrl.u32 %v1303, 16
    %v1328 = vor.u32 %v1326, %v1324
    %v1330 = vshll.u32 %v1304, 16
    %v1332 = vrot.slane %v1330, 1
    %v1333 = vsel %vm149, %v1328, %v1332
    %v1334 = vshrl.u32 %v1304, 16
    %v1336 = vor.u32 %v1334, %v1332
    %v1338 = vshll.u32 %v1305, 16
    %v1340 = vrot.slane %v1338, 1
    %v1341 = vsel %vm149, %v1336, %v1340
    %v1342 = vshrl.u32 %v1305, 16
    %v1344 = vor.u32 %v1342, %v1340
    %v1347 = vunpack.c.l.b16 %v1281
    %v1348 = vunpack.c.l.b16 %v1282
    %v1349 = vpack.c.b16 %v1348, %v1347
    %v1352 = vsel %vm1136, %v1317, 0
    %v1355 = vsel %vm1136, %v1325, 0
    %v1358 = vsel %vm1136, %v1333, 0
    %v1361 = vsel %vm1136, %v1341, 0
    %v1364 = vsel %vm1136, %v1344, 0
    %1366 = vmatprep.subr.bf16.mxu0 0
    %1367 = vmatpush1.bf16.msra.mxu0 %v1349
    %1368 = vmatprep.subr.bf16.mxu0 0
    %1369 = vmatpush1.bf16.msra.mxu0 0
    %1370 = vmatprep.subr.bf16.mxu0 0
    %1371 = vmatpush1.bf16.msra.mxu0 0
    %1372 = vmatprep.subr.bf16.mxu0 0
    %1373 = vmatpush1.bf16.msra.mxu0 0
    %1374 = vmatprep.subr.bf16.mxu0 0
    %1375 = vmatpush1.bf16.msra.mxu0 0
    %1376 = vmatprep.subr.bf16.mxu0 0
    %1377 = vmatpush1.bf16.msra.mxu0 0
    %1378 = vmatprep.subr.bf16.mxu0 0
    %1379 = vmatpush1.bf16.msra.mxu0 0
    %1380 = vmatprep.subr.bf16.mxu0 0
    %1381 = vmatpush1.bf16.msra.mxu0 0
    %1382 = vmatprep.subr.bf16.mxu0 0
    %1383 = vmatpush1.bf16.msra.mxu0 0
    %1384 = vmatprep.subr.bf16.mxu0 0
    %1385 = vmatpush1.bf16.msra.mxu0 0
    %1386 = vmatprep.subr.bf16.mxu0 0
    %1387 = vmatpush1.bf16.msra.mxu0 0
    %1388 = vmatprep.subr.bf16.mxu0 0
    %1389 = vmatpush1.bf16.msra.mxu0 0
    %1390 = vmatprep.subr.bf16.mxu0 0
    %1391 = vmatpush1.bf16.msra.mxu0 0
    %1392 = vmatprep.subr.bf16.mxu0 0
    %1393 = vmatpush1.bf16.msra.mxu0 0
    %1394 = vmatprep.subr.bf16.mxu0 0
    %1395 = vmatpush1.bf16.msra.mxu0 0
    %1396 = vmatprep.subr.bf16.mxu0 0
    %1397 = vmatpush1.bf16.msra.mxu0 0
    %1398 = vmatprep.mubr.bf16.mxu0 0
    %1399 = vmatmul.mubr.bf16.gmra.mrb[0].mxu0 %v1352
    %v1400 = vpop.f32.mrb[0].mxu0
    %v1401 = vadd.f32 0.0, %v1400
    %v1402 = vpop.f32.mrb[0].mxu0
    %v1403 = vpop.f32.mrb[0].mxu0
    %v1404 = vadd.f32 0.0, %v1403
    %v1405 = vpop.f32.mrb[0].mxu0
    %1406 = vmatprep.mubr.bf16.mxu0 0
    %1407 = vmatmul.mubr.bf16.gmra.mrb[0].mxu0 %v1355
    %v1408 = vpop.f32.mrb[0].mxu0
    %v1409 = vadd.f32 0.0, %v1408
    %v1410 = vpop.f32.mrb[0].mxu0
    %v1411 = vpop.f32.mrb[0].mxu0
    %v1412 = vadd.f32 0.0, %v1411
    %v1413 = vpop.f32.mrb[0].mxu0
    %1414 = vmatprep.mubr.bf16.mxu0 0
    %1415 = vmatmul.mubr.bf16.gmra.mrb[0].mxu0 %v1358
    %v1416 = vpop.f32.mrb[0].mxu0
    %v1417 = vadd.f32 0.0, %v1416
    %v1418 = vpop.f32.mrb[0].mxu0
    %v1419 = vpop.f32.mrb[0].mxu0
    %v1420 = vadd.f32 0.0, %v1419
    %v1421 = vpop.f32.mrb[0].mxu0
    %1422 = vmatprep.mubr.bf16.mxu0 0
    %1423 = vmatmul.mubr.bf16.gmra.mrb[0].mxu0 %v1361
    %v1424 = vpop.f32.mrb[0].mxu0
    %v1425 = vadd.f32 0.0, %v1424
    %v1426 = vpop.f32.mrb[0].mxu0
    %v1427 = vpop.f32.mrb[0].mxu0
    %v1428 = vadd.f32 0.0, %v1427
    %v1429 = vpop.f32.mrb[0].mxu0
    %1430 = vmatprep.mubr.bf16.mxu0 0
    %1431 = vmatmul.mubr.bf16.gmra.mrb[0].mxu0 %v1364
    %v1432 = vpop.f32.mrb[0].mxu0
    %v1433 = vadd.f32 0.0, %v1432
    %v1434 = vpop.f32.mrb[0].mxu0
    %v1435 = vpop.f32.mrb[0].mxu0
    %v1436 = vpop.f32.mrb[0].mxu0
    %1437 = vdwg.mxu0
    %v1439 = vunpack.c.l.b16 %v1277
    %v1440 = vpack.c.b16 %v1439, %v1439
    %v1443 = vunpack.c.l.b16 %v1278
    %v1444 = vunpack.c.l.b16 %v1279
    %v1445 = vpack.c.b16 %v1444, %v1443
    %v1447 = vsel %vm1136, %v1301, 0
    %v1449 = vsel %vm1136, %v1302, 0
    %v1451 = vsel %vm1136, %v1303, 0
    %v1453 = vsel %vm1136, %v1304, 0
    %v1456 = vsel %vm1136, %v1440, 0
    %1458 = vmatprep.subr.bf16.mxu0 0
    %1459 = vmatpush1.bf16.msra.mxu0 %v1445
    %1460 = vmatprep.subr.bf16.mxu0 0
    %1461 = vmatpush1.bf16.msra.mxu0 0
    %1462 = vmatprep.subr.bf16.mxu0 0
    %1463 = vmatpush1.bf16.msra.mxu0 0
    %1464 = vmatprep.subr.bf16.mxu0 0
    %1465 = vmatpush1.bf16.msra.mxu0 0
    %1466 = vmatprep.subr.bf16.mxu0 0
    %1467 = vmatpush1.bf16.msra.mxu0 0
    %1468 = vmatprep.subr.bf16.mxu0 0
    %1469 = vmatpush1.bf16.msra.mxu0 0
    %1470 = vmatprep.subr.bf16.mxu0 0
    %1471 = vmatpush1.bf16.msra.mxu0 0
    %1472 = vmatprep.subr.bf16.mxu0 0
    %1473 = vmatpush1.bf16.msra.mxu0 0
    %1474 = vmatprep.subr.bf16.mxu0 0
    %1475 = vmatpush1.bf16.msra.mxu0 0
    %1476 = vmatprep.subr.bf16.mxu0 0
    %1477 = vmatpush1.bf16.msra.mxu0 0
    %1478 = vmatprep.subr.bf16.mxu0 0
    %1479 = vmatpush1.bf16.msra.mxu0 0
    %1480 = vmatprep.subr.bf16.mxu0 0
    %1481 = vmatpush1.bf16.msra.mxu0 0
    %1482 = vmatprep.subr.bf16.mxu0 0
    %1483 = vmatpush1.bf16.msra.mxu0 0
    %1484 = vmatprep.subr.bf16.mxu0 0
    %1485 = vmatpush1.bf16.msra.mxu0 0
    %1486 = vmatprep.subr.bf16.mxu0 0
    %1487 = vmatpush1.bf16.msra.mxu0 0
    %1488 = vmatprep.subr.bf16.mxu0 0
    %1489 = vmatpush1.bf16.msra.mxu0 0
    %1490 = vmatprep.mubr.bf16.mxu0 0
    %1491 = vmatmul.mubr.bf16.gmra.mrb[0].mxu0 %v1447
    %v1492 = vpop.f32.mrb[0].mxu0
    %v1493 = vadd.f32 %v1401, %v1492
    %v1494 = vpop.f32.mrb[0].mxu0
    %v1495 = vpop.f32.mrb[0].mxu0
    %v1496 = vadd.f32 %v1404, %v1495
    %v1497 = vpop.f32.mrb[0].mxu0
    %1498 = vmatprep.mubr.bf16.mxu0 0
    %1499 = vmatmul.mubr.bf16.gmra.mrb[0].mxu0 %v1449
    %v1500 = vpop.f32.mrb[0].mxu0
    %v1501 = vadd.f32 %v1409, %v1500
    %v1502 = vpop.f32.mrb[0].mxu0
    %v1503 = vpop.f32.mrb[0].mxu0
    %v1504 = vadd.f32 %v1412, %v1503
    %v1505 = vpop.f32.mrb[0].mxu0
    %1506 = vmatprep.mubr.bf16.mxu0 0
    %1507 = vmatmul.mubr.bf16.gmra.mrb[0].mxu0 %v1451
    %v1508 = vpop.f32.mrb[0].mxu0
    %v1509 = vadd.f32 %v1417, %v1508
    %v1510 = vpop.f32.mrb[0].mxu0
    %v1511 = vpop.f32.mrb[0].mxu0
    %v1512 = vadd.f32 %v1420, %v1511
    %v1513 = vpop.f32.mrb[0].mxu0
    %1514 = vmatprep.mubr.bf16.mxu0 0
    %1515 = vmatmul.mubr.bf16.gmra.mrb[0].mxu0 %v1453
    %v1516 = vpop.f32.mrb[0].mxu0
    %v1517 = vadd.f32 %v1425, %v1516
    %v1518 = vpop.f32.mrb[0].mxu0
    %v1519 = vpop.f32.mrb[0].mxu0
    %v1520 = vadd.f32 %v1428, %v1519
    %v1521 = vpop.f32.mrb[0].mxu0
    %1522 = vmatprep.mubr.bf16.mxu0 0
    %1523 = vmatmul.mubr.bf16.gmra.mrb[0].mxu0 %v1456
    %v1524 = vpop.f32.mrb[0].mxu0
    %v1525 = vadd.f32 %v1433, %v1524
    %v1526 = vpop.f32.mrb[0].mxu0
    %v1527 = vpop.f32.mrb[0].mxu0
    %v1528 = vpop.f32.mrb[0].mxu0
    %1529 = vdwg.mxu0
    %v1530 = vld [vmem:[#allocation3] sm:$0xe]
    %v1531 = vld [vmem:[%s4 + $0x10] sm:$0xf]
    %v1532 = vld [vmem:[%s4 + $0x14] sm:$0xf]
    %v1534 = vunpack.c.l.b16 %v1530
    %v1535 = vpack.c.b16 %v1293, %v1534
    %v1536 = vrot.slane %v1535, 1
    %v1537 = vrot.slane %v1302, 1
    %v1538 = vsel %vm506, %v1536, %v1537
    %v1539 = vrot.slane %v1303, 1
    %v1540 = vsel %vm506, %v1537, %v1539
    %v1541 = vrot.slane %v1304, 1
    %v1542 = vsel %vm506, %v1539, %v1541
    %v1543 = vrot.slane %v1305, 1
    %v1544 = vsel %vm506, %v1541, %v1543
    %v1547 = vunpack.c.l.b16 %v1531
    %v1548 = vunpack.c.l.b16 %v1532
    %v1549 = vpack.c.b16 %v1548, %v1547
    %v1552 = vsel %vm1136, %v1538, 0
    %v1555 = vsel %vm1136, %v1540, 0
    %v1558 = vsel %vm1136, %v1542, 0
    %v1561 = vsel %vm1136, %v1544, 0
    %v1564 = vsel %vm1136, %v1543, 0
    %1566 = vmatprep.subr.bf16.mxu0 0
    %1567 = vmatpush1.bf16.msra.mxu0 %v1549
    %1568 = vmatprep.subr.bf16.mxu0 0
    %1569 = vmatpush1.bf16.msra.mxu0 0
    %1570 = vmatprep.subr.bf16.mxu0 0
    %1571 = vmatpush1.bf16.msra.mxu0 0
    %1572 = vmatprep.subr.bf16.mxu0 0
    %1573 = vmatpush1.bf16.msra.mxu0 0
    %1574 = vmatprep.subr.bf16.mxu0 0
    %1575 = vmatpush1.bf16.msra.mxu0 0
    %1576 = vmatprep.subr.bf16.mxu0 0
    %1577 = vmatpush1.bf16.msra.mxu0 0
    %1578 = vmatprep.subr.bf16.mxu0 0
    %1579 = vmatpush1.bf16.msra.mxu0 0
    %1580 = vmatprep.subr.bf16.mxu0 0
    %1581 = vmatpush1.bf16.msra.mxu0 0
    %1582 = vmatprep.subr.bf16.mxu0 0
    %1583 = vmatpush1.bf16.msra.mxu0 0
    %1584 = vmatprep.subr.bf16.mxu0 0
    %1585 = vmatpush1.bf16.msra.mxu0 0
    %1586 = vmatprep.subr.bf16.mxu0 0
    %1587 = vmatpush1.bf16.msra.mxu0 0
    %1588 = vmatprep.subr.bf16.mxu0 0
    %1589 = vmatpush1.bf16.msra.mxu0 0
    %1590 = vmatprep.subr.bf16.mxu0 0
    %1591 = vmatpush1.bf16.msra.mxu0 0
    %1592 = vmatprep.subr.bf16.mxu0 0
    %1593 = vmatpush1.bf16.msra.mxu0 0
    %1594 = vmatprep.subr.bf16.mxu0 0
    %1595 = vmatpush1.bf16.msra.mxu0 0
    %1596 = vmatprep.subr.bf16.mxu0 0
    %1597 = vmatpush1.bf16.msra.mxu0 0
    %1598 = vmatprep.mubr.bf16.mxu0 0
    %1599 = vmatmul.mubr.bf16.gmra.mrb[0].mxu0 %v1552
    %v1600 = vpop.f32.mrb[0].mxu0
    %v1601 = vadd.f32 0.0, %v1600
    %v1602 = vpop.f32.mrb[0].mxu0
    %v1603 = vpop.f32.mrb[0].mxu0
    %v1604 = vadd.f32 0.0, %v1603
    %v1605 = vpop.f32.mrb[0].mxu0
    %1606 = vmatprep.mubr.bf16.mxu0 0
    %1607 = vmatmul.mubr.bf16.gmra.mrb[0].mxu0 %v1555
    %v1608 = vpop.f32.mrb[0].mxu0
    %v1609 = vadd.f32 0.0, %v1608
    %v1610 = vpop.f32.mrb[0].mxu0
    %v1611 = vpop.f32.mrb[0].mxu0
    %v1612 = vadd.f32 0.0, %v1611
    %v1613 = vpop.f32.mrb[0].mxu0
    %1614 = vmatprep.mubr.bf16.mxu0 0
    %1615 = vmatmul.mubr.bf16.gmra.mrb[0].mxu0 %v1558
    %v1616 = vpop.f32.mrb[0].mxu0
    %v1617 = vadd.f32 0.0, %v1616
    %v1618 = vpop.f32.mrb[0].mxu0
    %v1619 = vpop.f32.mrb[0].mxu0
    %v1620 = vadd.f32 0.0, %v1619
    %v1621 = vpop.f32.mrb[0].mxu0
    %1622 = vmatprep.mubr.bf16.mxu0 0
    %1623 = vmatmul.mubr.bf16.gmra.mrb[0].mxu0 %v1561
    %v1624 = vpop.f32.mrb[0].mxu0
    %v1625 = vadd.f32 0.0, %v1624
    %v1626 = vpop.f32.mrb[0].mxu0
    %v1627 = vpop.f32.mrb[0].mxu0
    %v1628 = vadd.f32 0.0, %v1627
    %v1629 = vpop.f32.mrb[0].mxu0
    %1630 = vmatprep.mubr.bf16.mxu0 0
    %1631 = vmatmul.mubr.bf16.gmra.mrb[0].mxu0 %v1564
    %v1632 = vpop.f32.mrb[0].mxu0
    %v1633 = vadd.f32 0.0, %v1632
    %v1634 = vpop.f32.mrb[0].mxu0
    %v1635 = vpop.f32.mrb[0].mxu0
    %v1636 = vpop.f32.mrb[0].mxu0
    %1637 = vdwg.mxu0
    %v1638 = vadd.f32 %v1493, %v1601
    %v1639 = vadd.f32 %v1496, %v1604
    %v1640 = vadd.f32 %v1501, %v1609
    %v1641 = vadd.f32 %v1504, %v1612
    %v1642 = vadd.f32 %v1509, %v1617
    %v1643 = vadd.f32 %v1512, %v1620
    %v1644 = vadd.f32 %v1517, %v1625
    %v1645 = vadd.f32 %v1520, %v1628
    %v1646 = vadd.f32 %v1525, %v1633
    %v1647 = vld [vmem:[#allocation3 + $0x20] sm:$0xf]
    %v1648 = vld [vmem:[%s4 + $0x18] sm:$0xf]
    %v1649 = vld [vmem:[%s4 + $0x1c] sm:$0xf]
    %v1651 = vunpack.c.l.b16 %v1647
    %v1652 = vpack.c.b16 %v1651, %v1651
    %v1654 = vshrl.u32 %v1535, 16
    %v1656 = vrot.slane %v1654, 1
    %v1657 = vshll.u32 %v1535, 16
    %v1659 = vrot.slane %v1657, 2
    %v1660 = vor.u32 %v1656, %v1659
    %v1661 = vrot.slane %v1318, 1
    %v1662 = vrot.slane %v1314, 2
    %v1663 = vor.u32 %v1661, %v1662
    %v1664 = vsel %vm686, %v1660, %v1663
    %v1665 = vrot.slane %v1326, 1
    %v1666 = vrot.slane %v1322, 2
    %v1667 = vor.u32 %v1665, %v1666
    %v1668 = vsel %vm686, %v1663, %v1667
    %v1669 = vrot.slane %v1334, 1
    %v1670 = vrot.slane %v1330, 2
    %v1671 = vor.u32 %v1669, %v1670
    %v1672 = vsel %vm686, %v1667, %v1671
    %v1674 = vshrl.u32 %v1652, 16
    %v1676 = vrot.slane %v1674, 1
    %v1677 = vshll.u32 %v1652, 16
    %v1679 = vrot.slane %v1677, 2
    %v1680 = vor.u32 %v1676, %v1679
    %v1681 = vsel %vm686, %v1671, %v1680
    %v1684 = vunpack.c.l.b16 %v1648
    %v1685 = vunpack.c.l.b16 %v1649
    %v1686 = vpack.c.b16 %v1685, %v1684
    %v1689 = vsel %vm1136, %v1664, 0
    %v1692 = vsel %vm1136, %v1668, 0
    %v1695 = vsel %vm1136, %v1672, 0
    %v1698 = vsel %vm1136, %v1681, 0
    %v1701 = vsel %vm1136, %v1680, 0
    %1703 = vmatprep.subr.bf16.mxu0 0
    %1704 = vmatpush1.bf16.msra.mxu0 %v1686
    %1705 = vmatprep.subr.bf16.mxu0 0
    %1706 = vmatpush1.bf16.msra.mxu0 0
    %1707 = vmatprep.subr.bf16.mxu0 0
    %1708 = vmatpush1.bf16.msra.mxu0 0
    %1709 = vmatprep.subr.bf16.mxu0 0
    %1710 = vmatpush1.bf16.msra.mxu0 0
    %1711 = vmatprep.subr.bf16.mxu0 0
    %1712 = vmatpush1.bf16.msra.mxu0 0
    %1713 = vmatprep.subr.bf16.mxu0 0
    %1714 = vmatpush1.bf16.msra.mxu0 0
    %1715 = vmatprep.subr.bf16.mxu0 0
    %1716 = vmatpush1.bf16.msra.mxu0 0
    %1717 = vmatprep.subr.bf16.mxu0 0
    %1718 = vmatpush1.bf16.msra.mxu0 0
    %1719 = vmatprep.subr.bf16.mxu0 0
    %1720 = vmatpush1.bf16.msra.mxu0 0
    %1721 = vmatprep.subr.bf16.mxu0 0
    %1722 = vmatpush1.bf16.msra.mxu0 0
    %1723 = vmatprep.subr.bf16.mxu0 0
    %1724 = vmatpush1.bf16.msra.mxu0 0
    %1725 = vmatprep.subr.bf16.mxu0 0
    %1726 = vmatpush1.bf16.msra.mxu0 0
    %1727 = vmatprep.subr.bf16.mxu0 0
    %1728 = vmatpush1.bf16.msra.mxu0 0
    %1729 = vmatprep.subr.bf16.mxu0 0
    %1730 = vmatpush1.bf16.msra.mxu0 0
    %1731 = vmatprep.subr.bf16.mxu0 0
    %1732 = vmatpush1.bf16.msra.mxu0 0
    %1733 = vmatprep.subr.bf16.mxu0 0
    %1734 = vmatpush1.bf16.msra.mxu0 0
    %1735 = vmatprep.mubr.bf16.mxu0 0
    %1736 = vmatmul.mubr.bf16.gmra.mrb[0].mxu0 %v1689
    %v1737 = vpop.f32.mrb[0].mxu0
    %v1738 = vadd.f32 0.0, %v1737
    %v1739 = vpop.f32.mrb[0].mxu0
    %v1740 = vpop.f32.mrb[0].mxu0
    %v1741 = vadd.f32 0.0, %v1740
    %v1742 = vpop.f32.mrb[0].mxu0
    %1743 = vmatprep.mubr.bf16.mxu0 0
    %1744 = vmatmul.mubr.bf16.gmra.mrb[0].mxu0 %v1692
    %v1745 = vpop.f32.mrb[0].mxu0
    %v1746 = vadd.f32 0.0, %v1745
    %v1747 = vpop.f32.mrb[0].mxu0
    %v1748 = vpop.f32.mrb[0].mxu0
    %v1749 = vadd.f32 0.0, %v1748
    %v1750 = vpop.f32.mrb[0].mxu0
    %1751 = vmatprep.mubr.bf16.mxu0 0
    %1752 = vmatmul.mubr.bf16.gmra.mrb[0].mxu0 %v1695
    %v1753 = vpop.f32.mrb[0].mxu0
    %v1754 = vadd.f32 0.0, %v1753
    %v1755 = vpop.f32.mrb[0].mxu0
    %v1756 = vpop.f32.mrb[0].mxu0
    %v1757 = vadd.f32 0.0, %v1756
    %v1758 = vpop.f32.mrb[0].mxu0
    %1759 = vmatprep.mubr.bf16.mxu0 0
    %1760 = vmatmul.mubr.bf16.gmra.mrb[0].mxu0 %v1698
    %v1761 = vpop.f32.mrb[0].mxu0
    %v1762 = vadd.f32 0.0, %v1761
    %v1763 = vpop.f32.mrb[0].mxu0
    %v1764 = vpop.f32.mrb[0].mxu0
    %v1765 = vadd.f32 0.0, %v1764
    %v1766 = vpop.f32.mrb[0].mxu0
    %1767 = vmatprep.mubr.bf16.mxu0 0
    %1768 = vmatmul.mubr.bf16.gmra.mrb[0].mxu0 %v1701
    %v1769 = vpop.f32.mrb[0].mxu0
    %v1770 = vadd.f32 0.0, %v1769
    %v1771 = vpop.f32.mrb[0].mxu0
    %v1772 = vpop.f32.mrb[0].mxu0
    %v1773 = vpop.f32.mrb[0].mxu0
    %1774 = vdwg.mxu0
    %v1775 = vadd.f32 %v1638, %v1738
    %v1776 = vadd.f32 %v1639, %v1741
    %v1777 = vadd.f32 %v1640, %v1746
    %v1778 = vadd.f32 %v1641, %v1749
    %v1779 = vadd.f32 %v1642, %v1754
    %v1780 = vadd.f32 %v1643, %v1757
    %v1781 = vadd.f32 %v1644, %v1762
    %v1782 = vadd.f32 %v1645, %v1765
    %v1783 = vadd.f32 %v1646, %v1770
    %v1784 = vld [vmem:[#allocation3] sm:$0xc]
    %v1785 = vld [vmem:[%s4 + $0x20] sm:$0xf]
    %v1786 = vld [vmem:[%s4 + $0x24] sm:$0xf]
    %v1788 = vunpack.c.l.b16 %v1784
    %v1789 = vpack.c.b16 %v1293, %v1788
    %v1790 = vrot.slane %v1789, 2
    %v1791 = vrot.slane %v1302, 2
    %v1792 = vsel %vm898, %v1790, %v1791
    %v1793 = vrot.slane %v1303, 2
    %v1794 = vsel %vm898, %v1791, %v1793
    %v1795 = vrot.slane %v1304, 2
    %v1796 = vsel %vm898, %v1793, %v1795
    %v1797 = vrot.slane %v1652, 2
    %v1798 = vsel %vm898, %v1795, %v1797
    %v1801 = vunpack.c.l.b16 %v1785
    %v1802 = vunpack.c.l.b16 %v1786
    %v1803 = vpack.c.b16 %v1802, %v1801
    %v1806 = vsel %vm1136, %v1792, 0
    %v1809 = vsel %vm1136, %v1794, 0
    %v1812 = vsel %vm1136, %v1796, 0
    %v1815 = vsel %vm1136, %v1798, 0
    %v1818 = vsel %vm1136, %v1797, 0
    %1820 = vmatprep.subr.bf16.mxu0 0
    %1821 = vmatpush1.bf16.msra.mxu0 %v1803
    %1822 = vmatprep.subr.bf16.mxu0 0
    %1823 = vmatpush1.bf16.msra.mxu0 0
    %1824 = vmatprep.subr.bf16.mxu0 0
    %1825 = vmatpush1.bf16.msra.mxu0 0
    %1826 = vmatprep.subr.bf16.mxu0 0
    %1827 = vmatpush1.bf16.msra.mxu0 0
    %1828 = vmatprep.subr.bf16.mxu0 0
    %1829 = vmatpush1.bf16.msra.mxu0 0
    %1830 = vmatprep.subr.bf16.mxu0 0
    %1831 = vmatpush1.bf16.msra.mxu0 0
    %1832 = vmatprep.subr.bf16.mxu0 0
    %1833 = vmatpush1.bf16.msra.mxu0 0
    %1834 = vmatprep.subr.bf16.mxu0 0
    %1835 = vmatpush1.bf16.msra.mxu0 0
    %1836 = vmatprep.subr.bf16.mxu0 0
    %1837 = vmatpush1.bf16.msra.mxu0 0
    %1838 = vmatprep.subr.bf16.mxu0 0
    %1839 = vmatpush1.bf16.msra.mxu0 0
    %1840 = vmatprep.subr.bf16.mxu0 0
    %1841 = vmatpush1.bf16.msra.mxu0 0
    %1842 = vmatprep.subr.bf16.mxu0 0
    %1843 = vmatpush1.bf16.msra.mxu0 0
    %1844 = vmatprep.subr.bf16.mxu0 0
    %1845 = vmatpush1.bf16.msra.mxu0 0
    %1846 = vmatprep.subr.bf16.mxu0 0
    %1847 = vmatpush1.bf16.msra.mxu0 0
    %1848 = vmatprep.subr.bf16.mxu0 0
    %1849 = vmatpush1.bf16.msra.mxu0 0
    %1850 = vmatprep.subr.bf16.mxu0 0
    %1851 = vmatpush1.bf16.msra.mxu0 0
    %1852 = vmatprep.mubr.bf16.mxu0 0
    %1853 = vmatmul.mubr.bf16.gmra.mrb[0].mxu0 %v1806
    %v1854 = vpop.f32.mrb[0].mxu0
    %v1855 = vadd.f32 0.0, %v1854
    %v1856 = vpop.f32.mrb[0].mxu0
    %v1857 = vpop.f32.mrb[0].mxu0
    %v1858 = vadd.f32 0.0, %v1857
    %v1859 = vpop.f32.mrb[0].mxu0
    %1860 = vmatprep.mubr.bf16.mxu0 0
    %1861 = vmatmul.mubr.bf16.gmra.mrb[0].mxu0 %v1809
    %v1862 = vpop.f32.mrb[0].mxu0
    %v1863 = vadd.f32 0.0, %v1862
    %v1864 = vpop.f32.mrb[0].mxu0
    %v1865 = vpop.f32.mrb[0].mxu0
    %v1866 = vadd.f32 0.0, %v1865
    %v1867 = vpop.f32.mrb[0].mxu0
    %1868 = vmatprep.mubr.bf16.mxu0 0
    %1869 = vmatmul.mubr.bf16.gmra.mrb[0].mxu0 %v1812
    %v1870 = vpop.f32.mrb[0].mxu0
    %v1871 = vadd.f32 0.0, %v1870
    %v1872 = vpop.f32.mrb[0].mxu0
    %v1873 = vpop.f32.mrb[0].mxu0
    %v1874 = vadd.f32 0.0, %v1873
    %v1875 = vpop.f32.mrb[0].mxu0
    %1876 = vmatprep.mubr.bf16.mxu0 0
    %1877 = vmatmul.mubr.bf16.gmra.mrb[0].mxu0 %v1815
    %v1878 = vpop.f32.mrb[0].mxu0
    %v1879 = vadd.f32 0.0, %v1878
    %v1880 = vpop.f32.mrb[0].mxu0
    %v1881 = vpop.f32.mrb[0].mxu0
    %v1882 = vadd.f32 0.0, %v1881
    %v1883 = vpop.f32.mrb[0].mxu0
    %1884 = vmatprep.mubr.bf16.mxu0 0
    %1885 = vmatmul.mubr.bf16.gmra.mrb[0].mxu0 %v1818
    %v1886 = vpop.f32.mrb[0].mxu0
    %v1887 = vadd.f32 0.0, %v1886
    %v1888 = vpop.f32.mrb[0].mxu0
    %v1889 = vpop.f32.mrb[0].mxu0
    %v1890 = vpop.f32.mrb[0].mxu0
    %1891 = vdwg.mxu0
    %v1892 = vadd.f32 %v1775, %v1855
    %v1893 = vadd.f32 %v1776, %v1858
    %v1894 = vadd.f32 %v1777, %v1863
    %v1895 = vadd.f32 %v1778, %v1866
    %v1896 = vadd.f32 %v1779, %v1871
    %v1897 = vadd.f32 %v1780, %v1874
    %v1898 = vadd.f32 %v1781, %v1879
    %v1899 = vadd.f32 %v1782, %v1882
    %v1900 = vadd.f32 %v1783, %v1887
    %v1901 = vld [vmem:[%s5] sm:$0x1]
    %v1903 = vlaneseq
    %v1904 = vshrl.u32 %v1903, 7
    %v1905 = vsub.s32 0, %v1904
    %v1906 = vrot.slane %v1901, %v1905
    %v1908 = vmul.f32 %v1892, %v1906
    %v1909 = vmul.f32 %v1893, %v1906
    %v1910 = vmul.f32 %v1894, %v1906
    %v1911 = vmul.f32 %v1895, %v1906
    %v1912 = vmul.f32 %v1896, %v1906
    %v1913 = vmul.f32 %v1897, %v1906
    %v1914 = vmul.f32 %v1898, %v1906
    %v1915 = vmul.f32 %v1899, %v1906
    %v1916 = vmul.f32 %v1900, %v1906
    %v1917 = vld [vmem:[%s6] sm:$0x1]
    %v1919 = vlaneseq
    %v1920 = vshrl.u32 %v1919, 7
    %v1921 = vsub.s32 0, %v1920
    %v1922 = vrot.slane %v1917, %v1921
    %v1924 = vadd.f32 %v1908, %v1922
    %v1925 = vadd.f32 %v1909, %v1922
    %v1926 = vadd.f32 %v1910, %v1922
    %v1927 = vadd.f32 %v1911, %v1922
    %v1928 = vadd.f32 %v1912, %v1922
    %v1929 = vadd.f32 %v1913, %v1922
    %v1930 = vadd.f32 %v1914, %v1922
    %v1931 = vadd.f32 %v1915, %v1922
    %v1932 = vadd.f32 %v1916, %v1922
    %v1933 = vmax.f32 %v1924, 0.0
    %v1934 = vmax.f32 %v1925, 0.0
    %v1935 = vmax.f32 %v1926, 0.0
    %v1936 = vmax.f32 %v1927, 0.0
    %v1937 = vmax.f32 %v1928, 0.0
    %v1938 = vmax.f32 %v1929, 0.0
    %v1939 = vmax.f32 %v1930, 0.0
    %v1940 = vmax.f32 %v1931, 0.0
    %v1941 = vmax.f32 %v1932, 0.0
    %vm1942 = vcmask 261120
    %1943 = vst.msk [vmem:[#allocation4] sm:$0xff] %vm1942, %v1933
    %1944 = vst.msk [vmem:[#allocation4 + $0x8] sm:$0xff] %vm1942, %v1934
    %1945 = vst.msk [vmem:[#allocation4 + $0x10] sm:$0xff] %vm1942, %v1935
    %1946 = vst.msk [vmem:[#allocation4 + $0x18] sm:$0xff] %vm1942, %v1936
    %1947 = vst.msk [vmem:[#allocation4 + $0x20] sm:$0xff] %vm1942, %v1937
    %1948 = vst.msk [vmem:[#allocation4 + $0x28] sm:$0xff] %vm1942, %v1938
    %1949 = vst.msk [vmem:[#allocation4 + $0x30] sm:$0xff] %vm1942, %v1939
    %1950 = vst.msk [vmem:[#allocation4 + $0x38] sm:$0xff] %vm1942, %v1940
    %1951 = vst.msk [vmem:[#allocation4 + $0x40] sm:$0xf] %vm76, %v1941
    %v1952 = vld [vmem:[#allocation4] ss:$2 sm:$0xff]
    %s1953 = scalar_lea.vmem [#allocation4], 16
    %v1954 = vld [vmem:[%s1953] ss:$2 sm:$0xff]
    %s1955 = scalar_lea.vmem [#allocation4], 1
    %v1956 = vld [vmem:[%s1955] ss:$2 sm:$0xff]
    %s1957 = scalar_lea.vmem [#allocation4], 17
    %v1958 = vld [vmem:[%s1957] ss:$2 sm:$0xff]
    %v1959 = vmax.f32 %v1952, %v1956
    %v1960 = vmax.f32 %v1954, %v1958
    %v1961 = vpack.c.bf16 %v1960, %v1959
    %v1963 = vunpack.c.l.b16 %v1961
    %v1964 = vunpack.c.h.b16 %v1961
    %v1965 = vpack.c.b16 %v1963, %v1963
    %v1966 = vpack.c.b16 %v1964, %v1964
    %v1967 = vrot.slane %v1965, 7
    %v1968 = vrot.slane %v1967, 4
    %v1969 = vrot.slane %v1966, 7
    %v1970 = vsel %vm1187, %v1968, %v1969
    %v1971 = vrot.slane %v1969, 4
    %vm1975 = vcmask 257025
    %1976 = vst.msk [vmem:[#allocation5] sm:$0xe] %vm1975, %v1967
    %1977 = vst.msk [vmem:[#allocation5 + $0x4] sm:$0xf] %vm76, %v1970
    %vm1978 = vcmask 253952
    %1979 = vst.msk [vmem:[#allocation5 + $0x8] sm:$0x1] %vm1978, %v1971
    %s1980 = scalar_lea.vmem [#allocation4], 36
    %v1981 = vld [vmem:[%s1980] ss:$2 sm:$0xff]
    %s1982 = scalar_lea.vmem [#allocation4], 52
    %v1983 = vld [vmem:[%s1982] ss:$2 sm:$0xff]
    %s1984 = scalar_lea.vmem [#allocation4], 37
    %v1985 = vld [vmem:[%s1984] ss:$2 sm:$0xff]
    %s1986 = scalar_lea.vmem [#allocation4], 53
    %v1987 = vld [vmem:[%s1986] ss:$2 sm:$0xff]
    %v1988 = vmax.f32 %v1981, %v1985
    %v1989 = vmax.f32 %v1983, %v1987
    %v1990 = vpack.c.bf16 %v1989, %v1988
    %v1992 = vunpack.c.l.b16 %v1990
    %v1993 = vunpack.c.h.b16 %v1990
    %v1994 = vpack.c.b16 %v1992, %v1992
    %v1995 = vpack.c.b16 %v1993, %v1993
    %v1996 = vrot.slane %v1994, 5
    %v1997 = vrot.slane %v1996, 4
    %v1998 = vrot.slane %v1995, 5
    %v1999 = vsel %vm1245, %v1997, %v1998
    %v2000 = vrot.slane %v1998, 4
    %vm2004 = vcmask 257027
    %2005 = vst.msk [vmem:[#allocation5 + $0x8] sm:$0x8] %vm2004, %v1996
    %2006 = vst.msk [vmem:[#allocation5 + $0xc] sm:$0xf] %vm76, %v1999
    %vm2007 = vcmask 256000
    %2008 = vst.msk [vmem:[#allocation5 + $0x10] sm:$0x7] %vm2007, %v2000
    %v2009 = vld [vmem:[#allocation5] sm:$0xf]
    %v2010 = vld [vmem:[#allocation5 + $0x4] sm:$0xf]
    %v2011 = vld [vmem:[#allocation5 + $0x8] sm:$0xf]
    %v2012 = vld [vmem:[#allocation5 + $0xc] sm:$0xf]
    %v2013 = vld [vmem:[#allocation5 + $0x10] sm:$0x3]
    %v2014 = vld [vmem:[%s7] sm:$0xf]
    %v2015 = vld [vmem:[%s7 + $0x4] sm:$0xf]
    %v2016 = vld [vmem:[%s7 + $0x8] sm:$0xf]
    %v2017 = vld [vmem:[%s7 + $0xc] sm:$0xf]
    %v2018 = vld [vmem:[#allocation5 + $0x10] sm:$0x7]
    %v2019 = vld [vmem:[%s7 + $0x10] sm:$0xf]
    %v2020 = vld [vmem:[%s7 + $0x14] sm:$0xf]
    %v2021 = vld [vmem:[%s7 + $0x18] sm:$0xf]
    %v2022 = vld [vmem:[%s7 + $0x1c] sm:$0xf]
    %v2028 = vunpack.c.l.b16 %v2009
    %v2029 = vunpack.c.l.b16 %v2010
    %v2030 = vunpack.c.l.b16 %v2011
    %v2031 = vunpack.c.l.b16 %v2012
    %v2032 = vunpack.c.l.b16 %v2018
    %v2033 = vpack.c.b16 %v2029, %v2028
    %v2034 = vpack.c.b16 %v2031, %v2030
    %v2035 = vpack.c.b16 %v2032, %v2032
    %v2037 = vshrl.u32 %v2033, 16
    %v2039 = vshll.u32 %v2033, 16
    %v2041 = vrot.slane %v2039, 1
    %v2042 = vor.u32 %v2037, %v2041
    %v2044 = vshll.u32 %v2034, 16
    %v2046 = vrot.slane %v2044, 1
    %v2047 = vsel %vm149, %v2042, %v2046
    %v2048 = vshrl.u32 %v2034, 16
    %v2050 = vor.u32 %v2048, %v2046
    %v2052 = vshll.u32 %v2035, 16
    %v2054 = vrot.slane %v2052, 1
    %v2055 = vsel %vm149, %v2050, %v2054
    %v2056 = vshrl.u32 %v2035, 16
    %v2058 = vor.u32 %v2056, %v2054
    %v2063 = vunpack.c.l.b16 %v2019
    %v2064 = vunpack.c.l.b16 %v2020
    %v2065 = vunpack.c.l.b16 %v2021
    %v2066 = vunpack.c.l.b16 %v2022
    %v2067 = vpack.c.b16 %v2064, %v2063
    %v2068 = vpack.c.b16 %v2066, %v2065
    %v2072 = vsel %vm1942, %v2047, 0
    %v2075 = vsel %vm1942, %v2055, 0
    %v2078 = vsel %vm1942, %v2058, 0
    %2080 = vmatprep.subr.bf16.mxu0 0
    %2081 = vmatpush1.bf16.msra.mxu0 %v2067
    %2082 = vmatprep.subr.bf16.mxu0 0
    %2083 = vmatpush1.bf16.msra.mxu0 %v2068
    %2084 = vmatprep.subr.bf16.mxu0 0
    %2085 = vmatpush1.bf16.msra.mxu0 0
    %2086 = vmatprep.subr.bf16.mxu0 0
    %2087 = vmatpush1.bf16.msra.mxu0 0
    %2088 = vmatprep.subr.bf16.mxu0 0
    %2089 = vmatpush1.bf16.msra.mxu0 0
    %2090 = vmatprep.subr.bf16.mxu0 0
    %2091 = vmatpush1.bf16.msra.mxu0 0
    %2092 = vmatprep.subr.bf16.mxu0 0
    %2093 = vmatpush1.bf16.msra.mxu0 0
    %2094 = vmatprep.subr.bf16.mxu0 0
    %2095 = vmatpush1.bf16.msra.mxu0 0
    %2096 = vmatprep.subr.bf16.mxu0 0
    %2097 = vmatpush1.bf16.msra.mxu0 0
    %2098 = vmatprep.subr.bf16.mxu0 0
    %2099 = vmatpush1.bf16.msra.mxu0 0
    %2100 = vmatprep.subr.bf16.mxu0 0
    %2101 = vmatpush1.bf16.msra.mxu0 0
    %2102 = vmatprep.subr.bf16.mxu0 0
    %2103 = vmatpush1.bf16.msra.mxu0 0
    %2104 = vmatprep.subr.bf16.mxu0 0
    %2105 = vmatpush1.bf16.msra.mxu0 0
    %2106 = vmatprep.subr.bf16.mxu0 0
    %2107 = vmatpush1.bf16.msra.mxu0 0
    %2108 = vmatprep.subr.bf16.mxu0 0
    %2109 = vmatpush1.bf16.msra.mxu0 0
    %2110 = vmatprep.subr.bf16.mxu0 0
    %2111 = vmatpush1.bf16.msra.mxu0 0
    %2112 = vmatprep.mubr.bf16.mxu0 0
    %2113 = vmatmul.mubr.bf16.gmra.mrb[0].mxu0 %v2072
    %v2114 = vpop.f32.mrb[0].mxu0
    %v2115 = vadd.f32 0.0, %v2114
    %v2116 = vpop.f32.mrb[0].mxu0
    %v2117 = vpop.f32.mrb[0].mxu0
    %v2118 = vadd.f32 0.0, %v2117
    %v2119 = vpop.f32.mrb[0].mxu0
    %2120 = vmatprep.mubr.bf16.mxu0 0
    %2121 = vmatmul.mubr.bf16.gmra.mrb[0].mxu0 %v2075
    %v2122 = vpop.f32.mrb[0].mxu0
    %v2123 = vadd.f32 0.0, %v2122
    %v2124 = vpop.f32.mrb[0].mxu0
    %v2125 = vpop.f32.mrb[0].mxu0
    %v2126 = vadd.f32 0.0, %v2125
    %v2127 = vpop.f32.mrb[0].mxu0
    %2128 = vmatprep.mubr.bf16.mxu0 0
    %2129 = vmatmul.mubr.bf16.gmra.mrb[0].mxu0 %v2078
    %v2130 = vpop.f32.mrb[0].mxu0
    %v2131 = vadd.f32 0.0, %v2130
    %v2132 = vpop.f32.mrb[0].mxu0
    %v2133 = vpop.f32.mrb[0].mxu0
    %v2134 = vpop.f32.mrb[0].mxu0
    %2135 = vdwg.mxu0
    %v2137 = vunpack.c.l.b16 %v2013
    %v2138 = vpack.c.b16 %v2137, %v2137
    %v2143 = vunpack.c.l.b16 %v2014
    %v2144 = vunpack.c.l.b16 %v2015
    %v2145 = vunpack.c.l.b16 %v2016
    %v2146 = vunpack.c.l.b16 %v2017
    %v2147 = vpack.c.b16 %v2144, %v2143
    %v2148 = vpack.c.b16 %v2146, %v2145
    %v2151 = vsel %vm1942, %v2033, 0
    %v2153 = vsel %vm1942, %v2034, 0
    %v2156 = vsel %vm1942, %v2138, 0
    %2158 = vmatprep.subr.bf16.mxu0 0
    %2159 = vmatpush1.bf16.msra.mxu0 %v2147
    %2160 = vmatprep.subr.bf16.mxu0 0
    %2161 = vmatpush1.bf16.msra.mxu0 %v2148
    %2162 = vmatprep.subr.bf16.mxu0 0
    %2163 = vmatpush1.bf16.msra.mxu0 0
    %2164 = vmatprep.subr.bf16.mxu0 0
    %2165 = vmatpush1.bf16.msra.mxu0 0
    %2166 = vmatprep.subr.bf16.mxu0 0
    %2167 = vmatpush1.bf16.msra.mxu0 0
    %2168 = vmatprep.subr.bf16.mxu0 0
    %2169 = vmatpush1.bf16.msra.mxu0 0
    %2170 = vmatprep.subr.bf16.mxu0 0
    %2171 = vmatpush1.bf16.msra.mxu0 0
    %2172 = vmatprep.subr.bf16.mxu0 0
    %2173 = vmatpush1.bf16.msra.mxu0 0
    %2174 = vmatprep.subr.bf16.mxu0 0
    %2175 = vmatpush1.bf16.msra.mxu0 0
    %2176 = vmatprep.subr.bf16.mxu0 0
    %2177 = vmatpush1.bf16.msra.mxu0 0
    %2178 = vmatprep.subr.bf16.mxu0 0
    %2179 = vmatpush1.bf16.msra.mxu0 0
    %2180 = vmatprep.subr.bf16.mxu0 0
    %2181 = vmatpush1.bf16.msra.mxu0 0
    %2182 = vmatprep.subr.bf16.mxu0 0
    %2183 = vmatpush1.bf16.msra.mxu0 0
    %2184 = vmatprep.subr.bf16.mxu0 0
    %2185 = vmatpush1.bf16.msra.mxu0 0
    %2186 = vmatprep.subr.bf16.mxu0 0
    %2187 = vmatpush1.bf16.msra.mxu0 0
    %2188 = vmatprep.subr.bf16.mxu0 0
    %2189 = vmatpush1.bf16.msra.mxu0 0
    %2190 = vmatprep.mubr.bf16.mxu0 0
    %2191 = vmatmul.mubr.bf16.gmra.mrb[0].mxu0 %v2151
    %v2192 = vpop.f32.mrb[0].mxu0
    %v2193 = vadd.f32 %v2115, %v2192
    %v2194 = vpop.f32.mrb[0].mxu0
    %v2195 = vpop.f32.mrb[0].mxu0
    %v2196 = vadd.f32 %v2118, %v2195
    %v2197 = vpop.f32.mrb[0].mxu0
    %2198 = vmatprep.mubr.bf16.mxu0 0
    %2199 = vmatmul.mubr.bf16.gmra.mrb[0].mxu0 %v2153
    %v2200 = vpop.f32.mrb[0].mxu0
    %v2201 = vadd.f32 %v2123, %v2200
    %v2202 = vpop.f32.mrb[0].mxu0
    %v2203 = vpop.f32.mrb[0].mxu0
    %v2204 = vadd.f32 %v2126, %v2203
    %v2205 = vpop.f32.mrb[0].mxu0
    %2206 = vmatprep.mubr.bf16.mxu0 0
    %2207 = vmatmul.mubr.bf16.gmra.mrb[0].mxu0 %v2156
    %v2208 = vpop.f32.mrb[0].mxu0
    %v2209 = vadd.f32 %v2131, %v2208
    %v2210 = vpop.f32.mrb[0].mxu0
    %v2211 = vpop.f32.mrb[0].mxu0
    %v2212 = vpop.f32.mrb[0].mxu0
    %2213 = vdwg.mxu0
    %v2214 = vld [vmem:[#allocation5] sm:$0xe]
    %v2215 = vld [vmem:[%s7 + $0x20] sm:$0xf]
    %v2216 = vld [vmem:[%s7 + $0x24] sm:$0xf]
    %v2217 = vld [vmem:[%s7 + $0x28] sm:$0xf]
    %v2218 = vld [vmem:[%s7 + $0x2c] sm:$0xf]
    %v2220 = vunpack.c.l.b16 %v2214
    %v2221 = vpack.c.b16 %v2029, %v2220
    %v2222 = vrot.slane %v2221, 1
    %v2223 = vrot.slane %v2034, 1
    %v2224 = vsel %vm506, %v2222, %v2223
    %v2225 = vrot.slane %v2035, 1
    %v2226 = vsel %vm506, %v2223, %v2225
    %v2231 = vunpack.c.l.b16 %v2215
    %v2232 = vunpack.c.l.b16 %v2216
    %v2233 = vunpack.c.l.b16 %v2217
    %v2234 = vunpack.c.l.b16 %v2218
    %v2235 = vpack.c.b16 %v2232, %v2231
    %v2236 = vpack.c.b16 %v2234, %v2233
    %v2240 = vsel %vm1942, %v2224, 0
    %v2243 = vsel %vm1942, %v2226, 0
    %v2246 = vsel %vm1942, %v2225, 0
    %2248 = vmatprep.subr.bf16.mxu0 0
    %2249 = vmatpush1.bf16.msra.mxu0 %v2235
    %2250 = vmatprep.subr.bf16.mxu0 0
    %2251 = vmatpush1.bf16.msra.mxu0 %v2236
    %2252 = vmatprep.subr.bf16.mxu0 0
    %2253 = vmatpush1.bf16.msra.mxu0 0
    %2254 = vmatprep.subr.bf16.mxu0 0
    %2255 = vmatpush1.bf16.msra.mxu0 0
    %2256 = vmatprep.subr.bf16.mxu0 0
    %2257 = vmatpush1.bf16.msra.mxu0 0
    %2258 = vmatprep.subr.bf16.mxu0 0
    %2259 = vmatpush1.bf16.msra.mxu0 0
    %2260 = vmatprep.subr.bf16.mxu0 0
    %2261 = vmatpush1.bf16.msra.mxu0 0
    %2262 = vmatprep.subr.bf16.mxu0 0
    %2263 = vmatpush1.bf16.msra.mxu0 0
    %2264 = vmatprep.subr.bf16.mxu0 0
    %2265 = vmatpush1.bf16.msra.mxu0 0
    %2266 = vmatprep.subr.bf16.mxu0 0
    %2267 = vmatpush1.bf16.msra.mxu0 0
    %2268 = vmatprep.subr.bf16.mxu0 0
    %2269 = vmatpush1.bf16.msra.mxu0 0
    %2270 = vmatprep.subr.bf16.mxu0 0
    %2271 = vmatpush1.bf16.msra.mxu0 0
    %2272 = vmatprep.subr.bf16.mxu0 0
    %2273 = vmatpush1.bf16.msra.mxu0 0
    %2274 = vmatprep.subr.bf16.mxu0 0
    %2275 = vmatpush1.bf16.msra.mxu0 0
    %2276 = vmatprep.subr.bf16.mxu0 0
    %2277 = vmatpush1.bf16.msra.mxu0 0
    %2278 = vmatprep.subr.bf16.mxu0 0
    %2279 = vmatpush1.bf16.msra.mxu0 0
    %2280 = vmatprep.mubr.bf16.mxu0 0
    %2281 = vmatmul.mubr.bf16.gmra.mrb[0].mxu0 %v2240
    %v2282 = vpop.f32.mrb[0].mxu0
    %v2283 = vadd.f32 0.0, %v2282
    %v2284 = vpop.f32.mrb[0].mxu0
    %v2285 = vpop.f32.mrb[0].mxu0
    %v2286 = vadd.f32 0.0, %v2285
    %v2287 = vpop.f32.mrb[0].mxu0
    %2288 = vmatprep.mubr.bf16.mxu0 0
    %2289 = vmatmul.mubr.bf16.gmra.mrb[0].mxu0 %v2243
    %v2290 = vpop.f32.mrb[0].mxu0
    %v2291 = vadd.f32 0.0, %v2290
    %v2292 = vpop.f32.mrb[0].mxu0
    %v2293 = vpop.f32.mrb[0].mxu0
    %v2294 = vadd.f32 0.0, %v2293
    %v2295 = vpop.f32.mrb[0].mxu0
    %2296 = vmatprep.mubr.bf16.mxu0 0
    %2297 = vmatmul.mubr.bf16.gmra.mrb[0].mxu0 %v2246
    %v2298 = vpop.f32.mrb[0].mxu0
    %v2299 = vadd.f32 0.0, %v2298
    %v2300 = vpop.f32.mrb[0].mxu0
    %v2301 = vpop.f32.mrb[0].mxu0
    %v2302 = vpop.f32.mrb[0].mxu0
    %2303 = vdwg.mxu0
    %v2304 = vadd.f32 %v2193, %v2283
    %v2305 = vadd.f32 %v2196, %v2286
    %v2306 = vadd.f32 %v2201, %v2291
    %v2307 = vadd.f32 %v2204, %v2294
    %v2308 = vadd.f32 %v2209, %v2299
    %v2309 = vld [vmem:[#allocation5 + $0x10] sm:$0xf]
    %v2310 = vld [vmem:[%s7 + $0x30] sm:$0xf]
    %v2311 = vld [vmem:[%s7 + $0x34] sm:$0xf]
    %v2312 = vld [vmem:[%s7 + $0x38] sm:$0xf]
    %v2313 = vld [vmem:[%s7 + $0x3c] sm:$0xf]
    %v2315 = vunpack.c.l.b16 %v2309
    %v2316 = vpack.c.b16 %v2315, %v2315
    %v2318 = vshrl.u32 %v2221, 16
    %v2320 = vrot.slane %v2318, 1
    %v2321 = vshll.u32 %v2221, 16
    %v2323 = vrot.slane %v2321, 2
    %v2324 = vor.u32 %v2320, %v2323
    %v2325 = vrot.slane %v2048, 1
    %v2326 = vrot.slane %v2044, 2
    %v2327 = vor.u32 %v2325, %v2326
    %v2328 = vsel %vm686, %v2324, %v2327
    %v2330 = vshrl.u32 %v2316, 16
    %v2332 = vrot.slane %v2330, 1
    %v2333 = vshll.u32 %v2316, 16
    %v2335 = vrot.slane %v2333, 2
    %v2336 = vor.u32 %v2332, %v2335
    %v2337 = vsel %vm686, %v2327, %v2336
    %v2342 = vunpack.c.l.b16 %v2310
    %v2343 = vunpack.c.l.b16 %v2311
    %v2344 = vunpack.c.l.b16 %v2312
    %v2345 = vunpack.c.l.b16 %v2313
    %v2346 = vpack.c.b16 %v2343, %v2342
    %v2347 = vpack.c.b16 %v2345, %v2344
    %v2351 = vsel %vm1942, %v2328, 0
    %v2354 = vsel %vm1942, %v2337, 0
    %v2357 = vsel %vm1942, %v2336, 0
    %2359 = vmatprep.subr.bf16.mxu0 0
    %2360 = vmatpush1.bf16.msra.mxu0 %v2346
    %2361 = vmatprep.subr.bf16.mxu0 0
    %2362 = vmatpush1.bf16.msra.mxu0 %v2347
    %2363 = vmatprep.subr.bf16.mxu0 0
    %2364 = vmatpush1.bf16.msra.mxu0 0
    %2365 = vmatprep.subr.bf16.mxu0 0
    %2366 = vmatpush1.bf16.msra.mxu0 0
    %2367 = vmatprep.subr.bf16.mxu0 0
    %2368 = vmatpush1.bf16.msra.mxu0 0
    %2369 = vmatprep.subr.bf16.mxu0 0
    %2370 = vmatpush1.bf16.msra.mxu0 0
    %2371 = vmatprep.subr.bf16.mxu0 0
    %2372 = vmatpush1.bf16.msra.mxu0 0
    %2373 = vmatprep.subr.bf16.mxu0 0
    %2374 = vmatpush1.bf16.msra.mxu0 0
    %2375 = vmatprep.subr.bf16.mxu0 0
    %2376 = vmatpush1.bf16.msra.mxu0 0
    %2377 = vmatprep.subr.bf16.mxu0 0
    %2378 = vmatpush1.bf16.msra.mxu0 0
    %2379 = vmatprep.subr.bf16.mxu0 0
    %2380 = vmatpush1.bf16.msra.mxu0 0
    %2381 = vmatprep.subr.bf16.mxu0 0
    %2382 = vmatpush1.bf16.msra.mxu0 0
    %2383 = vmatprep.subr.bf16.mxu0 0
    %2384 = vmatpush1.bf16.msra.mxu0 0
    %2385 = vmatprep.subr.bf16.mxu0 0
    %2386 = vmatpush1.bf16.msra.mxu0 0
    %2387 = vmatprep.subr.bf16.mxu0 0
    %2388 = vmatpush1.bf16.msra.mxu0 0
    %2389 = vmatprep.subr.bf16.mxu0 0
    %2390 = vmatpush1.bf16.msra.mxu0 0
    %2391 = vmatprep.mubr.bf16.mxu0 0
    %2392 = vmatmul.mubr.bf16.gmra.mrb[0].mxu0 %v2351
    %v2393 = vpop.f32.mrb[0].mxu0
    %v2394 = vadd.f32 0.0, %v2393
    %v2395 = vpop.f32.mrb[0].mxu0
    %v2396 = vpop.f32.mrb[0].mxu0
    %v2397 = vadd.f32 0.0, %v2396
    %v2398 = vpop.f32.mrb[0].mxu0
    %2399 = vmatprep.mubr.bf16.mxu0 0
    %2400 = vmatmul.mubr.bf16.gmra.mrb[0].mxu0 %v2354
    %v2401 = vpop.f32.mrb[0].mxu0
    %v2402 = vadd.f32 0.0, %v2401
    %v2403 = vpop.f32.mrb[0].mxu0
    %v2404 = vpop.f32.mrb[0].mxu0
    %v2405 = vadd.f32 0.0, %v2404
    %v2406 = vpop.f32.mrb[0].mxu0
    %2407 = vmatprep.mubr.bf16.mxu0 0
    %2408 = vmatmul.mubr.bf16.gmra.mrb[0].mxu0 %v2357
    %v2409 = vpop.f32.mrb[0].mxu0
    %v2410 = vadd.f32 0.0, %v2409
    %v2411 = vpop.f32.mrb[0].mxu0
    %v2412 = vpop.f32.mrb[0].mxu0
    %v2413 = vpop.f32.mrb[0].mxu0
    %2414 = vdwg.mxu0
    %v2415 = vadd.f32 %v2304, %v2394
    %v2416 = vadd.f32 %v2305, %v2397
    %v2417 = vadd.f32 %v2306, %v2402
    %v2418 = vadd.f32 %v2307, %v2405
    %v2419 = vadd.f32 %v2308, %v2410
    %v2420 = vld [vmem:[#allocation5] sm:$0xc]
    %v2421 = vld [vmem:[%s7 + $0x40] sm:$0xf]
    %v2422 = vld [vmem:[%s7 + $0x44] sm:$0xf]
    %v2423 = vld [vmem:[%s7 + $0x48] sm:$0xf]
    %v2424 = vld [vmem:[%s7 + $0x4c] sm:$0xf]
    %v2426 = vunpack.c.l.b16 %v2420
    %v2427 = vpack.c.b16 %v2029, %v2426
    %v2428 = vrot.slane %v2427, 2
    %v2429 = vrot.slane %v2034, 2
    %v2430 = vsel %vm898, %v2428, %v2429
    %v2431 = vrot.slane %v2316, 2
    %v2432 = vsel %vm898, %v2429, %v2431
    %v2437 = vunpack.c.l.b16 %v2421
    %v2438 = vunpack.c.l.b16 %v2422
    %v2439 = vunpack.c.l.b16 %v2423
    %v2440 = vunpack.c.l.b16 %v2424
    %v2441 = vpack.c.b16 %v2438, %v2437
    %v2442 = vpack.c.b16 %v2440, %v2439
    %v2446 = vsel %vm1942, %v2430, 0
    %v2449 = vsel %vm1942, %v2432, 0
    %v2452 = vsel %vm1942, %v2431, 0
    %2454 = vmatprep.subr.bf16.mxu0 0
    %2455 = vmatpush1.bf16.msra.mxu0 %v2441
    %2456 = vmatprep.subr.bf16.mxu0 0
    %2457 = vmatpush1.bf16.msra.mxu0 %v2442
    %2458 = vmatprep.subr.bf16.mxu0 0
    %2459 = vmatpush1.bf16.msra.mxu0 0
    %2460 = vmatprep.subr.bf16.mxu0 0
    %2461 = vmatpush1.bf16.msra.mxu0 0
    %2462 = vmatprep.subr.bf16.mxu0 0
    %2463 = vmatpush1.bf16.msra.mxu0 0
    %2464 = vmatprep.subr.bf16.mxu0 0
    %2465 = vmatpush1.bf16.msra.mxu0 0
    %2466 = vmatprep.subr.bf16.mxu0 0
    %2467 = vmatpush1.bf16.msra.mxu0 0
    %2468 = vmatprep.subr.bf16.mxu0 0
    %2469 = vmatpush1.bf16.msra.mxu0 0
    %2470 = vmatprep.subr.bf16.mxu0 0
    %2471 = vmatpush1.bf16.msra.mxu0 0
    %2472 = vmatprep.subr.bf16.mxu0 0
    %2473 = vmatpush1.bf16.msra.mxu0 0
    %2474 = vmatprep.subr.bf16.mxu0 0
    %2475 = vmatpush1.bf16.msra.mxu0 0
    %2476 = vmatprep.subr.bf16.mxu0 0
    %2477 = vmatpush1.bf16.msra.mxu0 0
    %2478 = vmatprep.subr.bf16.mxu0 0
    %2479 = vmatpush1.bf16.msra.mxu0 0
    %2480 = vmatprep.subr.bf16.mxu0 0
    %2481 = vmatpush1.bf16.msra.mxu0 0
    %2482 = vmatprep.subr.bf16.mxu0 0
    %2483 = vmatpush1.bf16.msra.mxu0 0
    %2484 = vmatprep.subr.bf16.mxu0 0
    %2485 = vmatpush1.bf16.msra.mxu0 0
    %2486 = vmatprep.mubr.bf16.mxu0 0
    %2487 = vmatmul.mubr.bf16.gmra.mrb[0].mxu0 %v2446
    %v2488 = vpop.f32.mrb[0].mxu0
    %v2489 = vadd.f32 0.0, %v2488
    %v2490 = vpop.f32.mrb[0].mxu0
    %v2491 = vpop.f32.mrb[0].mxu0
    %v2492 = vadd.f32 0.0, %v2491
    %v2493 = vpop.f32.mrb[0].mxu0
    %2494 = vmatprep.mubr.bf16.mxu0 0
    %2495 = vmatmul.mubr.bf16.gmra.mrb[0].mxu0 %v2449
    %v2496 = vpop.f32.mrb[0].mxu0
    %v2497 = vadd.f32 0.0, %v2496
    %v2498 = vpop.f32.mrb[0].mxu0
    %v2499 = vpop.f32.mrb[0].mxu0
    %v2500 = vadd.f32 0.0, %v2499
    %v2501 = vpop.f32.mrb[0].mxu0
    %2502 = vmatprep.mubr.bf16.mxu0 0
    %2503 = vmatmul.mubr.bf16.gmra.mrb[0].mxu0 %v2452
    %v2504 = vpop.f32.mrb[0].mxu0
    %v2505 = vadd.f32 0.0, %v2504
    %v2506 = vpop.f32.mrb[0].mxu0
    %v2507 = vpop.f32.mrb[0].mxu0
    %v2508 = vpop.f32.mrb[0].mxu0
    %2509 = vdwg.mxu0
    %v2510 = vadd.f32 %v2415, %v2489
    %v2511 = vadd.f32 %v2416, %v2492
    %v2512 = vadd.f32 %v2417, %v2497
    %v2513 = vadd.f32 %v2418, %v2500
    %v2514 = vadd.f32 %v2419, %v2505
    %v2515 = vld [vmem:[%s8] sm:$0x1]
    %v2517 = vlaneseq
    %v2518 = vshrl.u32 %v2517, 7
    %v2519 = vsub.s32 0, %v2518
    %v2520 = vrot.slane %v2515, %v2519
    %v2522 = vmul.f32 %v2510, %v2520
    %v2523 = vmul.f32 %v2511, %v2520
    %v2524 = vmul.f32 %v2512, %v2520
    %v2525 = vmul.f32 %v2513, %v2520
    %v2526 = vmul.f32 %v2514, %v2520
    %v2527 = vld [vmem:[%s9] sm:$0x1]
    %v2529 = vlaneseq
    %v2530 = vshrl.u32 %v2529, 7
    %v2531 = vsub.s32 0, %v2530
    %v2532 = vrot.slane %v2527, %v2531
    %v2534 = vadd.f32 %v2522, %v2532
    %v2535 = vadd.f32 %v2523, %v2532
    %v2536 = vadd.f32 %v2524, %v2532
    %v2537 = vadd.f32 %v2525, %v2532
    %v2538 = vadd.f32 %v2526, %v2532
    %v2539 = vmax.f32 %v2534, 0.0
    %v2540 = vmax.f32 %v2535, 0.0
    %v2541 = vmax.f32 %v2536, 0.0
    %v2542 = vmax.f32 %v2537, 0.0
    %v2543 = vmax.f32 %v2538, 0.0
    %vm2544 = vcmask 523264
    %2545 = vst.msk [vmem:[#allocation6] sm:$0xff] %vm2544, %v2539
    %2546 = vst.msk [vmem:[#allocation6 + $0x8] sm:$0xff] %vm2544, %v2540
    %2547 = vst.msk [vmem:[#allocation6 + $0x10] sm:$0xff] %vm2544, %v2541
    %2548 = vst.msk [vmem:[#allocation6 + $0x18] sm:$0xff] %vm2544, %v2542
    %2549 = vst.msk [vmem:[#allocation6 + $0x20] sm:$0xf] %vm82, %v2543
    %v2550 = vld [vmem:[#allocation6] ss:$2 sm:$0xff]
    %s2551 = scalar_lea.vmem [#allocation6], 1
    %v2552 = vld [vmem:[%s2551] ss:$2 sm:$0xff]
    %v2553 = vmax.f32 %v2550, %v2552
    %v2554 = vpack.c.bf16 %v2553, %v2553
    %v2556 = vunpack.c.l.b16 %v2554
    %v2557 = vpack.c.b16 %v2556, %v2556
    %v2558 = vrot.slane %v2557, 7
    %v2559 = vrot.slane %v2558, 4
    %vm2562 = vcmask 519169
    %2563 = vst.msk [vmem:[#allocation7] sm:$0xe] %vm2562, %v2558
    %vm2564 = vcmask 516096
    %2565 = vst.msk [vmem:[#allocation7 + $0x4] sm:$0x1] %vm2564, %v2559
    %s2566 = scalar_lea.vmem [#allocation6], 20
    %v2567 = vld [vmem:[%s2566] ss:$2 sm:$0xff]
    %s2568 = scalar_lea.vmem [#allocation6], 21
    %v2569 = vld [vmem:[%s2568] ss:$2 sm:$0xff]
    %v2570 = vmax.f32 %v2567, %v2569
    %v2571 = vpack.c.bf16 %v2570, %v2570
    %v2573 = vunpack.c.l.b16 %v2571
    %v2574 = vpack.c.b16 %v2573, %v2573
    %v2575 = vrot.slane %v2574, 5
    %v2576 = vrot.slane %v2575, 4
    %vm2579 = vcmask 519171
    %2580 = vst.msk [vmem:[#allocation7 + $0x4] sm:$0x8] %vm2579, %v2575
    %vm2581 = vcmask 518144
    %2582 = vst.msk [vmem:[#allocation7 + $0x8] sm:$0x7] %vm2581, %v2576
    %v2583 = vld [vmem:[#allocation7] sm:$0xf]
    %v2584 = vld [vmem:[#allocation7 + $0x4] sm:$0xf]
    %v2585 = vld [vmem:[#allocation7 + $0x8] sm:$0x3]
    %v2586 = vld [vmem:[#allocation10] sm:$0xf]
    %v2587 = vld [vmem:[#allocation10 + $0x4] sm:$0xf]
    %v2588 = vld [vmem:[#allocation10 + $0x8] sm:$0xf]
    %v2589 = vld [vmem:[#allocation10 + $0xc] sm:$0xf]
    %v2590 = vld [vmem:[#allocation10 + $0x10] sm:$0xf]
    %v2591 = vld [vmem:[#allocation10 + $0x14] sm:$0xf]
    %v2592 = vld [vmem:[#allocation10 + $0x18] sm:$0xf]
    %v2593 = vld [vmem:[#allocation10 + $0x1c] sm:$0xf]
    %v2594 = vld [vmem:[#allocation7 + $0x8] sm:$0x7]
    %v2595 = vld [vmem:[#allocation10 + $0x20] sm:$0xf]
    %v2596 = vld [vmem:[#allocation10 + $0x24] sm:$0xf]
    %v2597 = vld [vmem:[#allocation10 + $0x28] sm:$0xf]
    %v2598 = vld [vmem:[#allocation10 + $0x2c] sm:$0xf]
    %v2599 = vld [vmem:[#allocation10 + $0x30] sm:$0xf]
    %v2600 = vld [vmem:[#allocation10 + $0x34] sm:$0xf]
    %v2601 = vld [vmem:[#allocation10 + $0x38] sm:$0xf]
    %v2602 = vld [vmem:[#allocation10 + $0x3c] sm:$0xf]
    %v2606 = vunpack.c.l.b16 %v2583
    %v2607 = vunpack.c.l.b16 %v2584
    %v2608 = vunpack.c.l.b16 %v2594
    %v2609 = vpack.c.b16 %v2607, %v2606
    %v2610 = vpack.c.b16 %v2608, %v2608
    %v2612 = vshrl.u32 %v2609, 16
    %v2614 = vshll.u32 %v2609, 16
    %v2616 = vrot.slane %v2614, 1
    %v2617 = vor.u32 %v2612, %v2616
    %v2619 = vshll.u32 %v2610, 16
    %v2621 = vrot.slane %v2619, 1
    %v2622 = vsel %vm149, %v2617, %v2621
    %v2623 = vshrl.u32 %v2610, 16
    %v2625 = vor.u32 %v2623, %v2621
    %v2634 = vunpack.c.l.b16 %v2595
    %v2635 = vunpack.c.l.b16 %v2596
    %v2636 = vunpack.c.l.b16 %v2597
    %v2637 = vunpack.c.l.b16 %v2598
    %v2638 = vunpack.c.l.b16 %v2599
    %v2639 = vunpack.c.l.b16 %v2600
    %v2640 = vunpack.c.l.b16 %v2601
    %v2641 = vunpack.c.l.b16 %v2602
    %v2642 = vpack.c.b16 %v2635, %v2634
    %v2643 = vpack.c.b16 %v2637, %v2636
    %v2644 = vpack.c.b16 %v2639, %v2638
    %v2645 = vpack.c.b16 %v2641, %v2640
    %v2651 = vsel %vm2544, %v2622, 0
    %v2654 = vsel %vm2544, %v2625, 0
    %2656 = vmatprep.subr.bf16.mxu0 0
    %2657 = vmatpush1.bf16.msra.mxu0 %v2642
    %2658 = vmatprep.subr.bf16.mxu0 0
    %2659 = vmatpush1.bf16.msra.mxu0 %v2643
    %2660 = vmatprep.subr.bf16.mxu0 0
    %2661 = vmatpush1.bf16.msra.mxu0 %v2644
    %2662 = vmatprep.subr.bf16.mxu0 0
    %2663 = vmatpush1.bf16.msra.mxu0 %v2645
    %2664 = vmatprep.subr.bf16.mxu0 0
    %2665 = vmatpush1.bf16.msra.mxu0 0
    %2666 = vmatprep.subr.bf16.mxu0 0
    %2667 = vmatpush1.bf16.msra.mxu0 0
    %2668 = vmatprep.subr.bf16.mxu0 0
    %2669 = vmatpush1.bf16.msra.mxu0 0
    %2670 = vmatprep.subr.bf16.mxu0 0
    %2671 = vmatpush1.bf16.msra.mxu0 0
    %2672 = vmatprep.subr.bf16.mxu0 0
    %2673 = vmatpush1.bf16.msra.mxu0 0
    %2674 = vmatprep.subr.bf16.mxu0 0
    %2675 = vmatpush1.bf16.msra.mxu0 0
    %2676 = vmatprep.subr.bf16.mxu0 0
    %2677 = vmatpush1.bf16.msra.mxu0 0
    %2678 = vmatprep.subr.bf16.mxu0 0
    %2679 = vmatpush1.bf16.msra.mxu0 0
    %2680 = vmatprep.subr.bf16.mxu0 0
    %2681 = vmatpush1.bf16.msra.mxu0 0
    %2682 = vmatprep.subr.bf16.mxu0 0
    %2683 = vmatpush1.bf16.msra.mxu0 0
    %2684 = vmatprep.subr.bf16.mxu0 0
    %2685 = vmatpush1.bf16.msra.mxu0 0
    %2686 = vmatprep.subr.bf16.mxu0 0
    %2687 = vmatpush1.bf16.msra.mxu0 0
    %2688 = vmatprep.mubr.bf16.mxu0 0
    %2689 = vmatmul.mubr.bf16.gmra.mrb[0].mxu0 %v2651
    %v2690 = vpop.f32.mrb[0].mxu0
    %v2691 = vadd.f32 0.0, %v2690
    %v2692 = vpop.f32.mrb[0].mxu0
    %v2693 = vpop.f32.mrb[0].mxu0
    %v2694 = vadd.f32 0.0, %v2693
    %v2695 = vpop.f32.mrb[0].mxu0
    %2696 = vmatprep.mubr.bf16.mxu0 0
    %2697 = vmatmul.mubr.bf16.gmra.mrb[0].mxu0 %v2654
    %v2698 = vpop.f32.mrb[0].mxu0
    %v2699 = vadd.f32 0.0, %v2698
    %v2700 = vpop.f32.mrb[0].mxu0
    %v2701 = vpop.f32.mrb[0].mxu0
    %v2702 = vpop.f32.mrb[0].mxu0
    %2703 = vdwg.mxu0
    %v2705 = vunpack.c.l.b16 %v2585
    %v2706 = vpack.c.b16 %v2705, %v2705
    %v2715 = vunpack.c.l.b16 %v2586
    %v2716 = vunpack.c.l.b16 %v2587
    %v2717 = vunpack.c.l.b16 %v2588
    %v2718 = vunpack.c.l.b16 %v2589
    %v2719 = vunpack.c.l.b16 %v2590
    %v2720 = vunpack.c.l.b16 %v2591
    %v2721 = vunpack.c.l.b16 %v2592
    %v2722 = vunpack.c.l.b16 %v2593
    %v2723 = vpack.c.b16 %v2716, %v2715
    %v2724 = vpack.c.b16 %v2718, %v2717
    %v2725 = vpack.c.b16 %v2720, %v2719
    %v2726 = vpack.c.b16 %v2722, %v2721
    %v2731 = vsel %vm2544, %v2609, 0
    %v2734 = vsel %vm2544, %v2706, 0
    %2736 = vmatprep.subr.bf16.mxu0 0
    %2737 = vmatpush1.bf16.msra.mxu0 %v2723
    %2738 = vmatprep.subr.bf16.mxu0 0
    %2739 = vmatpush1.bf16.msra.mxu0 %v2724
    %2740 = vmatprep.subr.bf16.mxu0 0
    %2741 = vmatpush1.bf16.msra.mxu0 %v2725
    %2742 = vmatprep.subr.bf16.mxu0 0
    %2743 = vmatpush1.bf16.msra.mxu0 %v2726
    %2744 = vmatprep.subr.bf16.mxu0 0
    %2745 = vmatpush1.bf16.msra.mxu0 0
    %2746 = vmatprep.subr.bf16.mxu0 0
    %2747 = vmatpush1.bf16.msra.mxu0 0
    %2748 = vmatprep.subr.bf16.mxu0 0
    %2749 = vmatpush1.bf16.msra.mxu0 0
    %2750 = vmatprep.subr.bf16.mxu0 0
    %2751 = vmatpush1.bf16.msra.mxu0 0
    %2752 = vmatprep.subr.bf16.mxu0 0
    %2753 = vmatpush1.bf16.msra.mxu0 0
    %2754 = vmatprep.subr.bf16.mxu0 0
    %2755 = vmatpush1.bf16.msra.mxu0 0
    %2756 = vmatprep.subr.bf16.mxu0 0
    %2757 = vmatpush1.bf16.msra.mxu0 0
    %2758 = vmatprep.subr.bf16.mxu0 0
    %2759 = vmatpush1.bf16.msra.mxu0 0
    %2760 = vmatprep.subr.bf16.mxu0 0
    %2761 = vmatpush1.bf16.msra.mxu0 0
    %2762 = vmatprep.subr.bf16.mxu0 0
    %2763 = vmatpush1.bf16.msra.mxu0 0
    %2764 = vmatprep.subr.bf16.mxu0 0
    %2765 = vmatpush1.bf16.msra.mxu0 0
    %2766 = vmatprep.subr.bf16.mxu0 0
    %2767 = vmatpush1.bf16.msra.mxu0 0
    %2768 = vmatprep.mubr.bf16.mxu0 0
    %2769 = vmatmul.mubr.bf16.gmra.mrb[0].mxu0 %v2731
    %v2770 = vpop.f32.mrb[0].mxu0
    %v2771 = vadd.f32 %v2691, %v2770
    %v2772 = vpop.f32.mrb[0].mxu0
    %v2773 = vpop.f32.mrb[0].mxu0
    %v2774 = vadd.f32 %v2694, %v2773
    %v2775 = vpop.f32.mrb[0].mxu0
    %2776 = vmatprep.mubr.bf16.mxu0 0
    %2777 = vmatmul.mubr.bf16.gmra.mrb[0].mxu0 %v2734
    %v2778 = vpop.f32.mrb[0].mxu0
    %v2779 = vadd.f32 %v2699, %v2778
    %v2780 = vpop.f32.mrb[0].mxu0
    %v2781 = vpop.f32.mrb[0].mxu0
    %v2782 = vpop.f32.mrb[0].mxu0
    %2783 = vdwg.mxu0
    %v2784 = vld [vmem:[#allocation7] sm:$0xe]
    %v2785 = vld [vmem:[#allocation10 + $0x40] sm:$0xf]
    %v2786 = vld [vmem:[#allocation10 + $0x44] sm:$0xf]
    %v2787 = vld [vmem:[#allocation10 + $0x48] sm:$0xf]
    %v2788 = vld [vmem:[#allocation10 + $0x4c] sm:$0xf]
    %v2789 = vld [vmem:[#allocation10 + $0x50] sm:$0xf]
    %v2790 = vld [vmem:[#allocation10 + $0x54] sm:$0xf]
    %v2791 = vld [vmem:[#allocation10 + $0x58] sm:$0xf]
    %v2792 = vld [vmem:[#allocation10 + $0x5c] sm:$0xf]
    %v2794 = vunpack.c.l.b16 %v2784
    %v2795 = vpack.c.b16 %v2607, %v2794
    %v2796 = vrot.slane %v2795, 1
    %v2797 = vrot.slane %v2610, 1
    %v2798 = vsel %vm506, %v2796, %v2797
    %v2807 = vunpack.c.l.b16 %v2785
    %v2808 = vunpack.c.l.b16 %v2786
    %v2809 = vunpack.c.l.b16 %v2787
    %v2810 = vunpack.c.l.b16 %v2788
    %v2811 = vunpack.c.l.b16 %v2789
    %v2812 = vunpack.c.l.b16 %v2790
    %v2813 = vunpack.c.l.b16 %v2791
    %v2814 = vunpack.c.l.b16 %v2792
    %v2815 = vpack.c.b16 %v2808, %v2807
    %v2816 = vpack.c.b16 %v2810, %v2809
    %v2817 = vpack.c.b16 %v2812, %v2811
    %v2818 = vpack.c.b16 %v2814, %v2813
    %v2824 = vsel %vm2544, %v2798, 0
    %v2827 = vsel %vm2544, %v2797, 0
    %2829 = vmatprep.subr.bf16.mxu0 0
    %2830 = vmatpush1.bf16.msra.mxu0 %v2815
    %2831 = vmatprep.subr.bf16.mxu0 0
    %2832 = vmatpush1.bf16.msra.mxu0 %v2816
    %2833 = vmatprep.subr.bf16.mxu0 0
    %2834 = vmatpush1.bf16.msra.mxu0 %v2817
    %2835 = vmatprep.subr.bf16.mxu0 0
    %2836 = vmatpush1.bf16.msra.mxu0 %v2818
    %2837 = vmatprep.subr.bf16.mxu0 0
    %2838 = vmatpush1.bf16.msra.mxu0 0
    %2839 = vmatprep.subr.bf16.mxu0 0
    %2840 = vmatpush1.bf16.msra.mxu0 0
    %2841 = vmatprep.subr.bf16.mxu0 0
    %2842 = vmatpush1.bf16.msra.mxu0 0
    %2843 = vmatprep.subr.bf16.mxu0 0
    %2844 = vmatpush1.bf16.msra.mxu0 0
    %2845 = vmatprep.subr.bf16.mxu0 0
    %2846 = vmatpush1.bf16.msra.mxu0 0
    %2847 = vmatprep.subr.bf16.mxu0 0
    %2848 = vmatpush1.bf16.msra.mxu0 0
    %2849 = vmatprep.subr.bf16.mxu0 0
    %2850 = vmatpush1.bf16.msra.mxu0 0
    %2851 = vmatprep.subr.bf16.mxu0 0
    %2852 = vmatpush1.bf16.msra.mxu0 0
    %2853 = vmatprep.subr.bf16.mxu0 0
    %2854 = vmatpush1.bf16.msra.mxu0 0
    %2855 = vmatprep.subr.bf16.mxu0 0
    %2856 = vmatpush1.bf16.msra.mxu0 0
    %2857 = vmatprep.subr.bf16.mxu0 0
    %2858 = vmatpush1.bf16.msra.mxu0 0
    %2859 = vmatprep.subr.bf16.mxu0 0
    %2860 = vmatpush1.bf16.msra.mxu0 0
    %2861 = vmatprep.mubr.bf16.mxu0 0
    %2862 = vmatmul.mubr.bf16.gmra.mrb[0].mxu0 %v2824
    %v2863 = vpop.f32.mrb[0].mxu0
    %v2864 = vadd.f32 0.0, %v2863
    %v2865 = vpop.f32.mrb[0].mxu0
    %v2866 = vpop.f32.mrb[0].mxu0
    %v2867 = vadd.f32 0.0, %v2866
    %v2868 = vpop.f32.mrb[0].mxu0
    %2869 = vmatprep.mubr.bf16.mxu0 0
    %2870 = vmatmul.mubr.bf16.gmra.mrb[0].mxu0 %v2827
    %v2871 = vpop.f32.mrb[0].mxu0
    %v2872 = vadd.f32 0.0, %v2871
    %v2873 = vpop.f32.mrb[0].mxu0
    %v2874 = vpop.f32.mrb[0].mxu0
    %v2875 = vpop.f32.mrb[0].mxu0
    %2876 = vdwg.mxu0
    %v2877 = vadd.f32 %v2771, %v2864
    %v2878 = vadd.f32 %v2774, %v2867
    %v2879 = vadd.f32 %v2779, %v2872
    %v2880 = vld [vmem:[#allocation7 + $0x8] sm:$0xf]
    %v2881 = vld [vmem:[#allocation10 + $0x60] sm:$0xf]
    %v2882 = vld [vmem:[#allocation10 + $0x64] sm:$0xf]
    %v2883 = vld [vmem:[#allocation10 + $0x68] sm:$0xf]
    %v2884 = vld [vmem:[#allocation10 + $0x6c] sm:$0xf]
    %v2885 = vld [vmem:[#allocation10 + $0x70] sm:$0xf]
    %v2886 = vld [vmem:[#allocation10 + $0x74] sm:$0xf]
    %v2887 = vld [vmem:[#allocation10 + $0x78] sm:$0xf]
    %v2888 = vld [vmem:[#allocation10 + $0x7c] sm:$0xf]
    %v2890 = vunpack.c.l.b16 %v2880
    %v2891 = vpack.c.b16 %v2890, %v2890
    %v2893 = vshrl.u32 %v2795, 16
    %v2895 = vrot.slane %v2893, 1
    %v2896 = vshll.u32 %v2795, 16
    %v2898 = vrot.slane %v2896, 2
    %v2899 = vor.u32 %v2895, %v2898
    %v2901 = vshrl.u32 %v2891, 16
    %v2903 = vrot.slane %v2901, 1
    %v2904 = vshll.u32 %v2891, 16
    %v2906 = vrot.slane %v2904, 2
    %v2907 = vor.u32 %v2903, %v2906
    %v2908 = vsel %vm686, %v2899, %v2907
    %v2917 = vunpack.c.l.b16 %v2881
    %v2918 = vunpack.c.l.b16 %v2882
    %v2919 = vunpack.c.l.b16 %v2883
    %v2920 = vunpack.c.l.b16 %v2884
    %v2921 = vunpack.c.l.b16 %v2885
    %v2922 = vunpack.c.l.b16 %v2886
    %v2923 = vunpack.c.l.b16 %v2887
    %v2924 = vunpack.c.l.b16 %v2888
    %v2925 = vpack.c.b16 %v2918, %v2917
    %v2926 = vpack.c.b16 %v2920, %v2919
    %v2927 = vpack.c.b16 %v2922, %v2921
    %v2928 = vpack.c.b16 %v2924, %v2923
    %v2934 = vsel %vm2544, %v2908, 0
    %v2937 = vsel %vm2544, %v2907, 0
    %2939 = vmatprep.subr.bf16.mxu0 0
    %2940 = vmatpush1.bf16.msra.mxu0 %v2925
    %2941 = vmatprep.subr.bf16.mxu0 0
    %2942 = vmatpush1.bf16.msra.mxu0 %v2926
    %2943 = vmatprep.subr.bf16.mxu0 0
    %2944 = vmatpush1.bf16.msra.mxu0 %v2927
    %2945 = vmatprep.subr.bf16.mxu0 0
    %2946 = vmatpush1.bf16.msra.mxu0 %v2928
    %2947 = vmatprep.subr.bf16.mxu0 0
    %2948 = vmatpush1.bf16.msra.mxu0 0
    %2949 = vmatprep.subr.bf16.mxu0 0
    %2950 = vmatpush1.bf16.msra.mxu0 0
    %2951 = vmatprep.subr.bf16.mxu0 0
    %2952 = vmatpush1.bf16.msra.mxu0 0
    %2953 = vmatprep.subr.bf16.mxu0 0
    %2954 = vmatpush1.bf16.msra.mxu0 0
    %2955 = vmatprep.subr.bf16.mxu0 0
    %2956 = vmatpush1.bf16.msra.mxu0 0
    %2957 = vmatprep.subr.bf16.mxu0 0
    %2958 = vmatpush1.bf16.msra.mxu0 0
    %2959 = vmatprep.subr.bf16.mxu0 0
    %2960 = vmatpush1.bf16.msra.mxu0 0
    %2961 = vmatprep.subr.bf16.mxu0 0
    %2962 = vmatpush1.bf16.msra.mxu0 0
    %2963 = vmatprep.subr.bf16.mxu0 0
    %2964 = vmatpush1.bf16.msra.mxu0 0
    %2965 = vmatprep.subr.bf16.mxu0 0
    %2966 = vmatpush1.bf16.msra.mxu0 0
    %2967 = vmatprep.subr.bf16.mxu0 0
    %2968 = vmatpush1.bf16.msra.mxu0 0
    %2969 = vmatprep.subr.bf16.mxu0 0
    %2970 = vmatpush1.bf16.msra.mxu0 0
    %2971 = vmatprep.mubr.bf16.mxu0 0
    %2972 = vmatmul.mubr.bf16.gmra.mrb[0].mxu0 %v2934
    %v2973 = vpop.f32.mrb[0].mxu0
    %v2974 = vadd.f32 0.0, %v2973
    %v2975 = vpop.f32.mrb[0].mxu0
    %v2976 = vpop.f32.mrb[0].mxu0
    %v2977 = vadd.f32 0.0, %v2976
    %v2978 = vpop.f32.mrb[0].mxu0
    %2979 = vmatprep.mubr.bf16.mxu0 0
    %2980 = vmatmul.mubr.bf16.gmra.mrb[0].mxu0 %v2937
    %v2981 = vpop.f32.mrb[0].mxu0
    %v2982 = vadd.f32 0.0, %v2981
    %v2983 = vpop.f32.mrb[0].mxu0
    %v2984 = vpop.f32.mrb[0].mxu0
    %v2985 = vpop.f32.mrb[0].mxu0
    %2986 = vdwg.mxu0
    %v2987 = vadd.f32 %v2877, %v2974
    %v2988 = vadd.f32 %v2878, %v2977
    %v2989 = vadd.f32 %v2879, %v2982
    %v2990 = vld [vmem:[#allocation7] sm:$0xc]
    %v2991 = vld [vmem:[#allocation10 + $0x80] sm:$0xf]
    %v2992 = vld [vmem:[#allocation10 + $0x84] sm:$0xf]
    %v2993 = vld [vmem:[#allocation10 + $0x88] sm:$0xf]
    %v2994 = vld [vmem:[#allocation10 + $0x8c] sm:$0xf]
    %v2995 = vld [vmem:[#allocation10 + $0x90] sm:$0xf]
    %v2996 = vld [vmem:[#allocation10 + $0x94] sm:$0xf]
    %v2997 = vld [vmem:[#allocation10 + $0x98] sm:$0xf]
    %v2998 = vld [vmem:[#allocation10 + $0x9c] sm:$0xf]
    %v3000 = vunpack.c.l.b16 %v2990
    %v3001 = vpack.c.b16 %v2607, %v3000
    %v3002 = vrot.slane %v3001, 2
    %v3003 = vrot.slane %v2891, 2
    %v3004 = vsel %vm898, %v3002, %v3003
    %v3013 = vunpack.c.l.b16 %v2991
    %v3014 = vunpack.c.l.b16 %v2992
    %v3015 = vunpack.c.l.b16 %v2993
    %v3016 = vunpack.c.l.b16 %v2994
    %v3017 = vunpack.c.l.b16 %v2995
    %v3018 = vunpack.c.l.b16 %v2996
    %v3019 = vunpack.c.l.b16 %v2997
    %v3020 = vunpack.c.l.b16 %v2998
    %v3021 = vpack.c.b16 %v3014, %v3013
    %v3022 = vpack.c.b16 %v3016, %v3015
    %v3023 = vpack.c.b16 %v3018, %v3017
    %v3024 = vpack.c.b16 %v3020, %v3019
    %v3030 = vsel %vm2544, %v3004, 0
    %v3033 = vsel %vm2544, %v3003, 0
    %3035 = vmatprep.subr.bf16.mxu0 0
    %3036 = vmatpush1.bf16.msra.mxu0 %v3021
    %3037 = vmatprep.subr.bf16.mxu0 0
    %3038 = vmatpush1.bf16.msra.mxu0 %v3022
    %3039 = vmatprep.subr.bf16.mxu0 0
    %3040 = vmatpush1.bf16.msra.mxu0 %v3023
    %3041 = vmatprep.subr.bf16.mxu0 0
    %3042 = vmatpush1.bf16.msra.mxu0 %v3024
    %3043 = vmatprep.subr.bf16.mxu0 0
    %3044 = vmatpush1.bf16.msra.mxu0 0
    %3045 = vmatprep.subr.bf16.mxu0 0
    %3046 = vmatpush1.bf16.msra.mxu0 0
    %3047 = vmatprep.subr.bf16.mxu0 0
    %3048 = vmatpush1.bf16.msra.mxu0 0
    %3049 = vmatprep.subr.bf16.mxu0 0
    %3050 = vmatpush1.bf16.msra.mxu0 0
    %3051 = vmatprep.subr.bf16.mxu0 0
    %3052 = vmatpush1.bf16.msra.mxu0 0
    %3053 = vmatprep.subr.bf16.mxu0 0
    %3054 = vmatpush1.bf16.msra.mxu0 0
    %3055 = vmatprep.subr.bf16.mxu0 0
    %3056 = vmatpush1.bf16.msra.mxu0 0
    %3057 = vmatprep.subr.bf16.mxu0 0
    %3058 = vmatpush1.bf16.msra.mxu0 0
    %3059 = vmatprep.subr.bf16.mxu0 0
    %3060 = vmatpush1.bf16.msra.mxu0 0
    %3061 = vmatprep.subr.bf16.mxu0 0
    %3062 = vmatpush1.bf16.msra.mxu0 0
    %3063 = vmatprep.subr.bf16.mxu0 0
    %3064 = vmatpush1.bf16.msra.mxu0 0
    %3065 = vmatprep.subr.bf16.mxu0 0
    %3066 = vmatpush1.bf16.msra.mxu0 0
    %3067 = vmatprep.mubr.bf16.mxu0 0
    %3068 = vmatmul.mubr.bf16.gmra.mrb[0].mxu0 %v3030
    %v3069 = vpop.f32.mrb[0].mxu0
    %v3070 = vadd.f32 0.0, %v3069
    %v3071 = vpop.f32.mrb[0].mxu0
    %v3072 = vpop.f32.mrb[0].mxu0
    %v3073 = vadd.f32 0.0, %v3072
    %v3074 = vpop.f32.mrb[0].mxu0
    %3075 = vmatprep.mubr.bf16.mxu0 0
    %3076 = vmatmul.mubr.bf16.gmra.mrb[0].mxu0 %v3033
    %v3077 = vpop.f32.mrb[0].mxu0
    %v3078 = vadd.f32 0.0, %v3077
    %v3079 = vpop.f32.mrb[0].mxu0
    %v3080 = vpop.f32.mrb[0].mxu0
    %v3081 = vpop.f32.mrb[0].mxu0
    %3082 = vdwg.mxu0
    %v3083 = vadd.f32 %v2987, %v3070
    %v3084 = vadd.f32 %v2988, %v3073
    %v3085 = vadd.f32 %v2989, %v3078
    %v3086 = vld [vmem:[%s11] sm:$0x1]
    %v3088 = vlaneseq
    %v3089 = vshrl.u32 %v3088, 7
    %v3090 = vsub.s32 0, %v3089
    %v3091 = vrot.slane %v3086, %v3090
    %v3093 = vmul.f32 %v3083, %v3091
    %v3094 = vmul.f32 %v3084, %v3091
    %v3095 = vmul.f32 %v3085, %v3091
    %v3096 = vld [vmem:[%s12] sm:$0x1]
    %v3098 = vlaneseq
    %v3099 = vshrl.u32 %v3098, 7
    %v3100 = vsub.s32 0, %v3099
    %v3101 = vrot.slane %v3096, %v3100
    %v3103 = vadd.f32 %v3093, %v3101
    %v3104 = vadd.f32 %v3094, %v3101
    %v3105 = vadd.f32 %v3095, %v3101
    %v3106 = vmax.f32 %v3103, 0.0
    %v3107 = vmax.f32 %v3104, 0.0
    %v3108 = vmax.f32 %v3105, 0.0
    %3109 = vst [vmem:[#allocation8] sm:$0xff] %v3106
    %3110 = vst [vmem:[#allocation8 + $0x8] sm:$0xff] %v3107
    %3111 = vst [vmem:[#allocation8 + $0x10] sm:$0xf] %v3108
    %v3112 = vld [vmem:[#allocation8] ss:$2 sm:$0xf]
    %s3113 = scalar_lea.vmem [#allocation8], 1
    %v3114 = vld [vmem:[%s3113] ss:$2 sm:$0xf]
    %v3115 = vmax.f32 %v3112, %v3114
    %3116 = vst [vmem:[#allocation9] sm:$0xf] %v3115
    %s3117 = scalar_lea.vmem [#allocation8], 12
    %v3118 = vld [vmem:[%s3117] ss:$2 sm:$0xf]
    %s3119 = scalar_lea.vmem [#allocation8], 13
    %v3120 = vld [vmem:[%s3119] ss:$2 sm:$0xf]
    %v3121 = vmax.f32 %v3118, %v3120
    %3122 = vst [vmem:[#allocation9 + $0x4] sm:$0xf] %v3121
    %v3123 = vld [vmem:[#allocation9] ss:$4 sm:$0x3]
    %v3124 = vpack.c.bf16 %v3123, %v3123
    %v3125 = vld [vmem:[%s13] sm:$0xf]
    %v3126 = vld [vmem:[%s13 + $0x4] sm:$0xf]
    %v3127 = vld [vmem:[%s13 + $0x8] sm:$0xf]
    %v3128 = vld [vmem:[%s13 + $0xc] sm:$0xf]
    %v3129 = vld [vmem:[%s13 + $0x10] sm:$0xf]
    %v3130 = vld [vmem:[%s13 + $0x14] sm:$0xf]
    %v3131 = vld [vmem:[%s13 + $0x18] sm:$0xf]
    %v3132 = vld [vmem:[%s13 + $0x1c] sm:$0xf]
    %v3133 = vld [vmem:[%s13 + $0x20] sm:$0xf]
    %v3134 = vld [vmem:[%s13 + $0x24] sm:$0xf]
    %v3135 = vld [vmem:[%s13 + $0x28] sm:$0xf]
    %v3136 = vld [vmem:[%s13 + $0x2c] sm:$0xf]
    %v3137 = vld [vmem:[%s13 + $0x30] sm:$0xf]
    %v3138 = vld [vmem:[%s13 + $0x34] sm:$0xf]
    %v3139 = vld [vmem:[%s13 + $0x38] sm:$0xf]
    %v3140 = vld [vmem:[%s13 + $0x3c] sm:$0xf]
    %s3141 = scalar_lea.vmem [#allocation9], 1
    %v3142 = vld [vmem:[%s3141] ss:$4 sm:$0x3]
    %v3143 = vpack.c.bf16 %v3142, %v3142
    %s3144 = scalar_lea.vmem %s13, 64
    %v3145 = vld [vmem:[%s3144] sm:$0xf]
    %v3146 = vld [vmem:[%s3144 + $0x4] sm:$0xf]
    %v3147 = vld [vmem:[%s3144 + $0x8] sm:$0xf]
    %v3148 = vld [vmem:[%s3144 + $0xc] sm:$0xf]
    %v3149 = vld [vmem:[%s3144 + $0x10] sm:$0xf]
    %v3150 = vld [vmem:[%s3144 + $0x14] sm:$0xf]
    %v3151 = vld [vmem:[%s3144 + $0x18] sm:$0xf]
    %v3152 = vld [vmem:[%s3144 + $0x1c] sm:$0xf]
    %v3153 = vld [vmem:[%s3144 + $0x20] sm:$0xf]
    %v3154 = vld [vmem:[%s3144 + $0x24] sm:$0xf]
    %v3155 = vld [vmem:[%s3144 + $0x28] sm:$0xf]
    %v3156 = vld [vmem:[%s3144 + $0x2c] sm:$0xf]
    %v3157 = vld [vmem:[%s3144 + $0x30] sm:$0xf]
    %v3158 = vld [vmem:[%s3144 + $0x34] sm:$0xf]
    %v3159 = vld [vmem:[%s3144 + $0x38] sm:$0xf]
    %v3160 = vld [vmem:[%s3144 + $0x3c] sm:$0xf]
    %v3177 = vunpack.c.l.b16 %v3145
    %v3178 = vunpack.c.l.b16 %v3146
    %v3179 = vunpack.c.l.b16 %v3147
    %v3180 = vunpack.c.l.b16 %v3148
    %v3181 = vunpack.c.l.b16 %v3149
    %v3182 = vunpack.c.l.b16 %v3150
    %v3183 = vunpack.c.l.b16 %v3151
    %v3184 = vunpack.c.l.b16 %v3152
    %v3185 = vunpack.c.l.b16 %v3153
    %v3186 = vunpack.c.l.b16 %v3154
    %v3187 = vunpack.c.l.b16 %v3155
    %v3188 = vunpack.c.l.b16 %v3156
    %v3189 = vunpack.c.l.b16 %v3157
    %v3190 = vunpack.c.l.b16 %v3158
    %v3191 = vunpack.c.l.b16 %v3159
    %v3192 = vunpack.c.l.b16 %v3160
    %v3193 = vpack.c.b16 %v3178, %v3177
    %v3194 = vpack.c.b16 %v3180, %v3179
    %v3195 = vpack.c.b16 %v3182, %v3181
    %v3196 = vpack.c.b16 %v3184, %v3183
    %v3197 = vpack.c.b16 %v3186, %v3185
    %v3198 = vpack.c.b16 %v3188, %v3187
    %v3199 = vpack.c.b16 %v3190, %v3189
    %v3200 = vpack.c.b16 %v3192, %v3191
    %3209 = vmatprep.subr.bf16.mxu0 0
    %3210 = vmatpush1.bf16.msra.mxu0 %v3193
    %3211 = vmatprep.subr.bf16.mxu0 0
    %3212 = vmatpush1.bf16.msra.mxu0 %v3194
    %3213 = vmatprep.subr.bf16.mxu0 0
    %3214 = vmatpush1.bf16.msra.mxu0 %v3195
    %3215 = vmatprep.subr.bf16.mxu0 0
    %3216 = vmatpush1.bf16.msra.mxu0 %v3196
    %3217 = vmatprep.subr.bf16.mxu0 0
    %3218 = vmatpush1.bf16.msra.mxu0 %v3197
    %3219 = vmatprep.subr.bf16.mxu0 0
    %3220 = vmatpush1.bf16.msra.mxu0 %v3198
    %3221 = vmatprep.subr.bf16.mxu0 0
    %3222 = vmatpush1.bf16.msra.mxu0 %v3199
    %3223 = vmatprep.subr.bf16.mxu0 0
    %3224 = vmatpush1.bf16.msra.mxu0 %v3200
    %3225 = vmatprep.subr.bf16.mxu0 0
    %3226 = vmatpush1.bf16.msra.mxu0 0
    %3227 = vmatprep.subr.bf16.mxu0 0
    %3228 = vmatpush1.bf16.msra.mxu0 0
    %3229 = vmatprep.subr.bf16.mxu0 0
    %3230 = vmatpush1.bf16.msra.mxu0 0
    %3231 = vmatprep.subr.bf16.mxu0 0
    %3232 = vmatpush1.bf16.msra.mxu0 0
    %3233 = vmatprep.subr.bf16.mxu0 0
    %3234 = vmatpush1.bf16.msra.mxu0 0
    %3235 = vmatprep.subr.bf16.mxu0 0
    %3236 = vmatpush1.bf16.msra.mxu0 0
    %3237 = vmatprep.subr.bf16.mxu0 0
    %3238 = vmatpush1.bf16.msra.mxu0 0
    %3239 = vmatprep.subr.bf16.mxu0 0
    %3240 = vmatpush1.bf16.msra.mxu0 0
    %3241 = vmatprep.mubr.bf16.mxu0 0
    %3242 = vmatmul.mubr.bf16.gmra.mrb[0].mxu0 %v3143
    %v3243 = vpop.f32.mrb[0].mxu0
    %v3244 = vadd.f32 0.0, %v3243
    %v3245 = vpop.f32.mrb[0].mxu0
    %v3246 = vpop.f32.mrb[0].mxu0
    %v3247 = vpop.f32.mrb[0].mxu0
    %3248 = vdwg.mxu0
    %v3265 = vunpack.c.l.b16 %v3125
    %v3266 = vunpack.c.l.b16 %v3126
    %v3267 = vunpack.c.l.b16 %v3127
    %v3268 = vunpack.c.l.b16 %v3128
    %v3269 = vunpack.c.l.b16 %v3129
    %v3270 = vunpack.c.l.b16 %v3130
    %v3271 = vunpack.c.l.b16 %v3131
    %v3272 = vunpack.c.l.b16 %v3132
    %v3273 = vunpack.c.l.b16 %v3133
    %v3274 = vunpack.c.l.b16 %v3134
    %v3275 = vunpack.c.l.b16 %v3135
    %v3276 = vunpack.c.l.b16 %v3136
    %v3277 = vunpack.c.l.b16 %v3137
    %v3278 = vunpack.c.l.b16 %v3138
    %v3279 = vunpack.c.l.b16 %v3139
    %v3280 = vunpack.c.l.b16 %v3140
    %v3281 = vpack.c.b16 %v3266, %v3265
    %v3282 = vpack.c.b16 %v3268, %v3267
    %v3283 = vpack.c.b16 %v3270, %v3269
    %v3284 = vpack.c.b16 %v3272, %v3271
    %v3285 = vpack.c.b16 %v3274, %v3273
    %v3286 = vpack.c.b16 %v3276, %v3275
    %v3287 = vpack.c.b16 %v3278, %v3277
    %v3288 = vpack.c.b16 %v3280, %v3279
    %3297 = vmatprep.subr.bf16.mxu0 0
    %3298 = vmatpush1.bf16.msra.mxu0 %v3281
    %3299 = vmatprep.subr.bf16.mxu0 0
    %3300 = vmatpush1.bf16.msra.mxu0 %v3282
    %3301 = vmatprep.subr.bf16.mxu0 0
    %3302 = vmatpush1.bf16.msra.mxu0 %v3283
    %3303 = vmatprep.subr.bf16.mxu0 0
    %3304 = vmatpush1.bf16.msra.mxu0 %v3284
    %3305 = vmatprep.subr.bf16.mxu0 0
    %3306 = vmatpush1.bf16.msra.mxu0 %v3285
    %3307 = vmatprep.subr.bf16.mxu0 0
    %3308 = vmatpush1.bf16.msra.mxu0 %v3286
    %3309 = vmatprep.subr.bf16.mxu0 0
    %3310 = vmatpush1.bf16.msra.mxu0 %v3287
    %3311 = vmatprep.subr.bf16.mxu0 0
    %3312 = vmatpush1.bf16.msra.mxu0 %v3288
    %3313 = vmatprep.subr.bf16.mxu0 0
    %3314 = vmatpush1.bf16.msra.mxu0 0
    %3315 = vmatprep.subr.bf16.mxu0 0
    %3316 = vmatpush1.bf16.msra.mxu0 0
    %3317 = vmatprep.subr.bf16.mxu0 0
    %3318 = vmatpush1.bf16.msra.mxu0 0
    %3319 = vmatprep.subr.bf16.mxu0 0
    %3320 = vmatpush1.bf16.msra.mxu0 0
    %3321 = vmatprep.subr.bf16.mxu0 0
    %3322 = vmatpush1.bf16.msra.mxu0 0
    %3323 = vmatprep.subr.bf16.mxu0 0
    %3324 = vmatpush1.bf16.msra.mxu0 0
    %3325 = vmatprep.subr.bf16.mxu0 0
    %3326 = vmatpush1.bf16.msra.mxu0 0
    %3327 = vmatprep.subr.bf16.mxu0 0
    %3328 = vmatpush1.bf16.msra.mxu0 0
    %3329 = vmatprep.mubr.bf16.mxu0 0
    %3330 = vmatmul.mubr.bf16.gmra.mrb[0].mxu0 %v3124
    %v3331 = vpop.f32.mrb[0].mxu0
    %v3332 = vadd.f32 %v3244, %v3331
    %v3333 = vpop.f32.mrb[0].mxu0
    %v3334 = vpop.f32.mrb[0].mxu0
    %v3335 = vpop.f32.mrb[0].mxu0
    %3336 = vdwg.mxu0
    %s3337 = scalar_lea.vmem [#allocation9], 2
    %v3338 = vld [vmem:[%s3337] ss:$4 sm:$0x3]
    %v3339 = vpack.c.bf16 %v3338, %v3338
    %s3340 = scalar_lea.vmem %s13, 128
    %v3341 = vld [vmem:[%s3340] sm:$0xf]
    %v3342 = vld [vmem:[%s3340 + $0x4] sm:$0xf]
    %v3343 = vld [vmem:[%s3340 + $0x8] sm:$0xf]
    %v3344 = vld [vmem:[%s3340 + $0xc] sm:$0xf]
    %v3345 = vld [vmem:[%s3340 + $0x10] sm:$0xf]
    %v3346 = vld [vmem:[%s3340 + $0x14] sm:$0xf]
    %v3347 = vld [vmem:[%s3340 + $0x18] sm:$0xf]
    %v3348 = vld [vmem:[%s3340 + $0x1c] sm:$0xf]
    %v3349 = vld [vmem:[%s3340 + $0x20] sm:$0xf]
    %v3350 = vld [vmem:[%s3340 + $0x24] sm:$0xf]
    %v3351 = vld [vmem:[%s3340 + $0x28] sm:$0xf]
    %v3352 = vld [vmem:[%s3340 + $0x2c] sm:$0xf]
    %v3353 = vld [vmem:[%s3340 + $0x30] sm:$0xf]
    %v3354 = vld [vmem:[%s3340 + $0x34] sm:$0xf]
    %v3355 = vld [vmem:[%s3340 + $0x38] sm:$0xf]
    %v3356 = vld [vmem:[%s3340 + $0x3c] sm:$0xf]
    %v3373 = vunpack.c.l.b16 %v3341
    %v3374 = vunpack.c.l.b16 %v3342
    %v3375 = vunpack.c.l.b16 %v3343
    %v3376 = vunpack.c.l.b16 %v3344
    %v3377 = vunpack.c.l.b16 %v3345
    %v3378 = vunpack.c.l.b16 %v3346
    %v3379 = vunpack.c.l.b16 %v3347
    %v3380 = vunpack.c.l.b16 %v3348
    %v3381 = vunpack.c.l.b16 %v3349
    %v3382 = vunpack.c.l.b16 %v3350
    %v3383 = vunpack.c.l.b16 %v3351
    %v3384 = vunpack.c.l.b16 %v3352
    %v3385 = vunpack.c.l.b16 %v3353
    %v3386 = vunpack.c.l.b16 %v3354
    %v3387 = vunpack.c.l.b16 %v3355
    %v3388 = vunpack.c.l.b16 %v3356
    %v3389 = vpack.c.b16 %v3374, %v3373
    %v3390 = vpack.c.b16 %v3376, %v3375
    %v3391 = vpack.c.b16 %v3378, %v3377
    %v3392 = vpack.c.b16 %v3380, %v3379
    %v3393 = vpack.c.b16 %v3382, %v3381
    %v3394 = vpack.c.b16 %v3384, %v3383
    %v3395 = vpack.c.b16 %v3386, %v3385
    %v3396 = vpack.c.b16 %v3388, %v3387
    %3405 = vmatprep.subr.bf16.mxu0 0
    %3406 = vmatpush1.bf16.msra.mxu0 %v3389
    %3407 = vmatprep.subr.bf16.mxu0 0
    %3408 = vmatpush1.bf16.msra.mxu0 %v3390
    %3409 = vmatprep.subr.bf16.mxu0 0
    %3410 = vmatpush1.bf16.msra.mxu0 %v3391
    %3411 = vmatprep.subr.bf16.mxu0 0
    %3412 = vmatpush1.bf16.msra.mxu0 %v3392
    %3413 = vmatprep.subr.bf16.mxu0 0
    %3414 = vmatpush1.bf16.msra.mxu0 %v3393
    %3415 = vmatprep.subr.bf16.mxu0 0
    %3416 = vmatpush1.bf16.msra.mxu0 %v3394
    %3417 = vmatprep.subr.bf16.mxu0 0
    %3418 = vmatpush1.bf16.msra.mxu0 %v3395
    %3419 = vmatprep.subr.bf16.mxu0 0
    %3420 = vmatpush1.bf16.msra.mxu0 %v3396
    %3421 = vmatprep.subr.bf16.mxu0 0
    %3422 = vmatpush1.bf16.msra.mxu0 0
    %3423 = vmatprep.subr.bf16.mxu0 0
    %3424 = vmatpush1.bf16.msra.mxu0 0
    %3425 = vmatprep.subr.bf16.mxu0 0
    %3426 = vmatpush1.bf16.msra.mxu0 0
    %3427 = vmatprep.subr.bf16.mxu0 0
    %3428 = vmatpush1.bf16.msra.mxu0 0
    %3429 = vmatprep.subr.bf16.mxu0 0
    %3430 = vmatpush1.bf16.msra.mxu0 0
    %3431 = vmatprep.subr.bf16.mxu0 0
    %3432 = vmatpush1.bf16.msra.mxu0 0
    %3433 = vmatprep.subr.bf16.mxu0 0
    %3434 = vmatpush1.bf16.msra.mxu0 0
    %3435 = vmatprep.subr.bf16.mxu0 0
    %3436 = vmatpush1.bf16.msra.mxu0 0
    %3437 = vmatprep.mubr.bf16.mxu0 0
    %3438 = vmatmul.mubr.bf16.gmra.mrb[0].mxu0 %v3339
    %v3439 = vpop.f32.mrb[0].mxu0
    %v3440 = vadd.f32 0.0, %v3439
    %v3441 = vpop.f32.mrb[0].mxu0
    %v3442 = vpop.f32.mrb[0].mxu0
    %v3443 = vpop.f32.mrb[0].mxu0
    %3444 = vdwg.mxu0
    %v3445 = vadd.f32 %v3332, %v3440
    %s3446 = scalar_lea.vmem [#allocation9], 3
    %v3447 = vld [vmem:[%s3446] ss:$4 sm:$0x3]
    %v3448 = vpack.c.bf16 %v3447, %v3447
    %s3449 = scalar_lea.vmem %s13, 192
    %v3450 = vld [vmem:[%s3449] sm:$0xf]
    %v3451 = vld [vmem:[%s3449 + $0x4] sm:$0xf]
    %v3452 = vld [vmem:[%s3449 + $0x8] sm:$0xf]
    %v3453 = vld [vmem:[%s3449 + $0xc] sm:$0xf]
    %v3454 = vld [vmem:[%s3449 + $0x10] sm:$0xf]
    %v3455 = vld [vmem:[%s3449 + $0x14] sm:$0xf]
    %v3456 = vld [vmem:[%s3449 + $0x18] sm:$0xf]
    %v3457 = vld [vmem:[%s3449 + $0x1c] sm:$0xf]
    %v3458 = vld [vmem:[%s3449 + $0x20] sm:$0xf]
    %v3459 = vld [vmem:[%s3449 + $0x24] sm:$0xf]
    %v3460 = vld [vmem:[%s3449 + $0x28] sm:$0xf]
    %v3461 = vld [vmem:[%s3449 + $0x2c] sm:$0xf]
    %v3462 = vld [vmem:[%s3449 + $0x30] sm:$0xf]
    %v3463 = vld [vmem:[%s3449 + $0x34] sm:$0xf]
    %v3464 = vld [vmem:[%s3449 + $0x38] sm:$0xf]
    %v3465 = vld [vmem:[%s3449 + $0x3c] sm:$0xf]
    %v3482 = vunpack.c.l.b16 %v3450
    %v3483 = vunpack.c.l.b16 %v3451
    %v3484 = vunpack.c.l.b16 %v3452
    %v3485 = vunpack.c.l.b16 %v3453
    %v3486 = vunpack.c.l.b16 %v3454
    %v3487 = vunpack.c.l.b16 %v3455
    %v3488 = vunpack.c.l.b16 %v3456
    %v3489 = vunpack.c.l.b16 %v3457
    %v3490 = vunpack.c.l.b16 %v3458
    %v3491 = vunpack.c.l.b16 %v3459
    %v3492 = vunpack.c.l.b16 %v3460
    %v3493 = vunpack.c.l.b16 %v3461
    %v3494 = vunpack.c.l.b16 %v3462
    %v3495 = vunpack.c.l.b16 %v3463
    %v3496 = vunpack.c.l.b16 %v3464
    %v3497 = vunpack.c.l.b16 %v3465
    %v3498 = vpack.c.b16 %v3483, %v3482
    %v3499 = vpack.c.b16 %v3485, %v3484
    %v3500 = vpack.c.b16 %v3487, %v3486
    %v3501 = vpack.c.b16 %v3489, %v3488
    %v3502 = vpack.c.b16 %v3491, %v3490
    %v3503 = vpack.c.b16 %v3493, %v3492
    %v3504 = vpack.c.b16 %v3495, %v3494
    %v3505 = vpack.c.b16 %v3497, %v3496
    %3514 = vmatprep.subr.bf16.mxu0 0
    %3515 = vmatpush1.bf16.msra.mxu0 %v3498
    %3516 = vmatprep.subr.bf16.mxu0 0
    %3517 = vmatpush1.bf16.msra.mxu0 %v3499
    %3518 = vmatprep.subr.bf16.mxu0 0
    %3519 = vmatpush1.bf16.msra.mxu0 %v3500
    %3520 = vmatprep.subr.bf16.mxu0 0
    %3521 = vmatpush1.bf16.msra.mxu0 %v3501
    %3522 = vmatprep.subr.bf16.mxu0 0
    %3523 = vmatpush1.bf16.msra.mxu0 %v3502
    %3524 = vmatprep.subr.bf16.mxu0 0
    %3525 = vmatpush1.bf16.msra.mxu0 %v3503
    %3526 = vmatprep.subr.bf16.mxu0 0
    %3527 = vmatpush1.bf16.msra.mxu0 %v3504
    %3528 = vmatprep.subr.bf16.mxu0 0
    %3529 = vmatpush1.bf16.msra.mxu0 %v3505
    %3530 = vmatprep.subr.bf16.mxu0 0
    %3531 = vmatpush1.bf16.msra.mxu0 0
    %3532 = vmatprep.subr.bf16.mxu0 0
    %3533 = vmatpush1.bf16.msra.mxu0 0
    %3534 = vmatprep.subr.bf16.mxu0 0
    %3535 = vmatpush1.bf16.msra.mxu0 0
    %3536 = vmatprep.subr.bf16.mxu0 0
    %3537 = vmatpush1.bf16.msra.mxu0 0
    %3538 = vmatprep.subr.bf16.mxu0 0
    %3539 = vmatpush1.bf16.msra.mxu0 0
    %3540 = vmatprep.subr.bf16.mxu0 0
    %3541 = vmatpush1.bf16.msra.mxu0 0
    %3542 = vmatprep.subr.bf16.mxu0 0
    %3543 = vmatpush1.bf16.msra.mxu0 0
    %3544 = vmatprep.subr.bf16.mxu0 0
    %3545 = vmatpush1.bf16.msra.mxu0 0
    %3546 = vmatprep.mubr.bf16.mxu0 0
    %3547 = vmatmul.mubr.bf16.gmra.mrb[0].mxu0 %v3448
    %v3548 = vpop.f32.mrb[0].mxu0
    %v3549 = vadd.f32 0.0, %v3548
    %v3550 = vpop.f32.mrb[0].mxu0
    %v3551 = vpop.f32.mrb[0].mxu0
    %v3552 = vpop.f32.mrb[0].mxu0
    %3553 = vdwg.mxu0
    %v3554 = vadd.f32 %v3445, %v3549
    %v3555 = vld [vmem:[%s14] sm:$0x1]
    %v3557 = vlaneseq
    %v3558 = vshrl.u32 %v3557, 7
    %v3559 = vsub.s32 0, %v3558
    %v3560 = vrot.slane %v3555, %v3559
    %v3562 = vadd.f32 %v3554, %v3560
    %v3563 = vmax.f32 %v3562, 0.0
    %3564 = vst [vmem:[#allocation13] sm:$0x3] %v3563
    // Predicated region
    $region66: #{tpu_custom_call.1} parent=1 // pred_check
      _
    $region67: #{tpu_custom_call.1} parent=1 // pred_check_branch
      %3566 = sbr.rel (0) target = $region69
    $region68: #{tpu_custom_call.1} parent=1 // pred_region
      %s3568 = ssub.s32 32, 32
      %3569 = vsyncadd [#allocation12], %s3568
      %s3571 = sshll.u32 [#allocation13], 4
      %s3572 = int_to_ptr.vmem [resolvable:$true] %s3571
      %3574 = dma.vmem_to_hbm [thread:$0]  %s3572, 32, %s15, [#allocation12]
    $region69: #{tpu_custom_call.1} parent=1 // pred_fallthru
      _
    // Predicated region
    $region70: #{tpu_custom_call.1} parent=1 // pred_check
      _
    $region71: #{tpu_custom_call.1} parent=1 // pred_check_branch
      %3576 = sbr.rel (0) target = $region73
    $region72: #{tpu_custom_call.1} parent=1 // pred_region
      %3577 = dma.done [#allocation12], 32
    $region73: #{tpu_custom_call.1} parent=1 // pred_fallthru
      _
    %3578 = vsyncpa [#allocation11], 1
    %3579 = vsyncpa [#allocation12], 1

</llo_original>
